<compile_context>
chip_gen: v7x
topology: tpu7x:2x2x1
jax: 0.10.0
libtpu: 0.0.40
codegen_flags: <defaults>
</compile_context>

<pallas_src>
import math
from functools import partial

import numpy as np
import jax
import jax.numpy as jnp
from jax import lax
from jax.experimental import pallas as pl
from jax.experimental.pallas import tpu as pltpu


# ----------------------------- Pallas kernel ---------------------------------

def encoder_stack_kernel(mask_ref, x_ref, wq_ref, wk_ref, wv_ref, wo_ref,
                         g1_ref, b1_ref, w1_ref, w2_ref, g2_ref, b2_ref,
                         out_ref, attn_ref, acc_ref, *,
                         n_heads, d_k, d_v, b_tile, seq_len, n_layers):
    # mask_ref : [B_TILE, L]      float, 1.0 where the key position is padding
    # x_ref    : [M, D]           M = B_TILE*L, flat rows of one batch tile
    # wq/wk/wv : [D, H*dk]        (layer axis squeezed by BlockSpec)
    # wo_ref   : [H, d_v, D]      per-head output projection
    # w1/w2    : [D, d_ff] / [d_ff, D]
    # g*/b*    : [1, D]
    # out_ref  : [M, D]           final activations (written on last layer)
    # attn_ref : [H, B_TILE, L, L] attention weights of the current layer
    # acc_ref  : [M, D] VMEM scratch carrying activations across the layer grid axis
    layer = pl.program_id(1)

    @pl.when(layer == 0)
    def _():
        acc_ref[...] = x_ref[...]

    x2 = acc_ref[...]                                   # [M, D] f32
    M, D = x2.shape

    # Big QKV projections: M = B_TILE*L rows fill the MXU.
    q = jnp.dot(x2, wq_ref[...], preferred_element_type=jnp.float32)   # scale folded in
    k = jnp.dot(x2, wk_ref[...], preferred_element_type=jnp.float32)
    v = jnp.dot(x2, wv_ref[...], preferred_element_type=jnp.float32)

    q3 = q.reshape(b_tile, seq_len, n_heads * d_k)      # free reshape (L == sublane tile)
    k3 = k.reshape(b_tile, seq_len, n_heads * d_k)
    v3 = v.reshape(b_tile, seq_len, n_heads * d_v)

    key_pad = mask_ref[...][:, None, :]                 # [B_TILE, 1, L]

    attn_out = x2                                       # residual accumulated with per-head Wo
    for h in range(n_heads):                            # static unroll over heads
        qh = q3[:, :, h * d_k:(h + 1) * d_k]            # [B_TILE, L, dk]
        kh = k3[:, :, h * d_k:(h + 1) * d_k]
        vh = v3[:, :, h * d_v:(h + 1) * d_v]

        s = jnp.einsum('bqd,bkd->bqk', qh, kh,
                       preferred_element_type=jnp.float32)              # [B_TILE, L, L]
        s = jnp.where(key_pad > 0.5, jnp.float32(-1e9), s)
        m = jnp.max(s, axis=-1, keepdims=True)
        e = jnp.exp(s - m)
        denom = jnp.sum(e, axis=-1, keepdims=True)
        attn = e * pl.reciprocal(denom, approx=True)                    # softmax (EUP recip)
        attn_ref[h] = attn

        ctx = jnp.einsum('bqk,bkd->bqd', attn, vh,
                         preferred_element_type=jnp.float32)            # [B_TILE, L, dv]
        attn_out = attn_out + jnp.dot(ctx.reshape(M, d_v), wo_ref[h],
                                      preferred_element_type=jnp.float32)

    # residual + LayerNorm (eps = 1e-5, PyTorch default)
    mu1 = jnp.mean(attn_out, axis=-1, keepdims=True)
    var1 = jnp.mean((attn_out - mu1) ** 2, axis=-1, keepdims=True)
    ln1 = (attn_out - mu1) * lax.rsqrt(var1 + 1e-5) * g1_ref[...] + b1_ref[...]

    # position-wise FFN + residual + LayerNorm
    ff = jnp.maximum(jnp.dot(ln1, w1_ref[...], preferred_element_type=jnp.float32), 0.0)
    ff = jnp.dot(ff, w2_ref[...], preferred_element_type=jnp.float32) + ln1
    mu2 = jnp.mean(ff, axis=-1, keepdims=True)
    var2 = jnp.mean((ff - mu2) ** 2, axis=-1, keepdims=True)
    new_x = (ff - mu2) * lax.rsqrt(var2 + 1e-5) * g2_ref[...] + b2_ref[...]

    acc_ref[...] = new_x

    @pl.when(layer == n_layers - 1)
    def _():
        out_ref[...] = new_x


# ----------------------------- wrapper ---------------------------------------

def _pick_batch_tile(B, L, target_rows=128):
    """Largest divisor of B with B_TILE*L <= target_rows (MXU M-fill)."""
    limit = max(1, target_rows // max(L, 1))
    for cand in range(min(B, limit), 0, -1):
        if B % cand == 0:
            return cand
    return 1


def encoder_forward(tokens, src_emb_table, pos_emb_table, layer_params,
                    *, n_heads, d_k, d_v):
    """tokens: [B, L] int32.  Returns (out [B, L, D], [attn [B, H, L, L] per layer])."""
    B, L = tokens.shape
    D = src_emb_table.shape[1]
    n_layers = len(layer_params)
    d_ff = layer_params[0]["w1"].shape[1]

    word_emb = jnp.take(src_emb_table, tokens, axis=0)
    # NOTE: positional table indexed by TOKEN ids (matches the original tutorial code);
    # table has vocab_size rows so all token ids are in range.
    pos_emb = jnp.take(pos_emb_table, tokens, axis=0)
    x = (word_emb + pos_emb).astype(jnp.float32)

    pad = (tokens == 0).astype(jnp.float32)                 # [B, L] key-pad flags

    # stack per-layer weights; fold 1/sqrt(d_k) into Wq; split Wo per head.
    scale = jnp.float32(1.0 / math.sqrt(d_k))
    wq = jnp.stack([p["wq"] * scale for p in layer_params])            # [Lyr, D, H*dk]
    wk = jnp.stack([p["wk"] for p in layer_params])                    # [Lyr, D, H*dk]
    wv = jnp.stack([p["wv"] for p in layer_params])                    # [Lyr, D, H*dv]
    wo = jnp.stack([p["wo"].reshape(n_heads, d_v, D) for p in layer_params])  # [Lyr, H, dv, D]
    w1 = jnp.stack([p["w1"] for p in layer_params])                    # [Lyr, D, dff]
    w2 = jnp.stack([p["w2"] for p in layer_params])                    # [Lyr, dff, D]
    g1 = jnp.stack([p["g1"] for p in layer_params])                    # [Lyr, 1, D]
    b1 = jnp.stack([p["b1"] for p in layer_params])
    g2 = jnp.stack([p["g2"] for p in layer_params])
    b2 = jnp.stack([p["b2"] for p in layer_params])

    b_tile = _pick_batch_tile(B, L)
    num_tiles = B // b_tile
    M = b_tile * L

    x_flat = x.reshape(B * L, D)

    kernel = partial(encoder_stack_kernel, n_heads=n_heads, d_k=d_k, d_v=d_v,
                     b_tile=b_tile, seq_len=L, n_layers=n_layers)

    lm = lambda i, l: (l, 0, 0)          # per-layer 3D weight blocks
    out_flat, attn_all = pl.pallas_call(
        kernel,
        out_shape=(jax.ShapeDtypeStruct((B * L, D), jnp.float32),
                   jax.ShapeDtypeStruct((n_layers, n_heads, B, L, L), jnp.float32)),
        grid=(num_tiles, n_layers),
        in_specs=[
            pl.BlockSpec((b_tile, L), lambda i, l: (i, 0)),                        # key-pad mask
            pl.BlockSpec((M, D), lambda i, l: (i, 0)),                             # x (flat rows)
            pl.BlockSpec((pl.Squeezed(), D, n_heads * d_k), lm),                   # wq
            pl.BlockSpec((pl.Squeezed(), D, n_heads * d_k), lm),                   # wk
            pl.BlockSpec((pl.Squeezed(), D, n_heads * d_v), lm),                   # wv
            pl.BlockSpec((pl.Squeezed(), n_heads, d_v, D), lambda i, l: (l, 0, 0, 0)),  # wo per head
            pl.BlockSpec((pl.Squeezed(), 1, D), lm),                               # g1
            pl.BlockSpec((pl.Squeezed(), 1, D), lm),                               # b1
            pl.BlockSpec((pl.Squeezed(), D, d_ff), lm),                            # w1
            pl.BlockSpec((pl.Squeezed(), d_ff, D), lm),                            # w2
            pl.BlockSpec((pl.Squeezed(), 1, D), lm),                               # g2
            pl.BlockSpec((pl.Squeezed(), 1, D), lm),                               # b2
        ],
        out_specs=(
            pl.BlockSpec((M, D), lambda i, l: (i, 0)),                             # final activations
            pl.BlockSpec((pl.Squeezed(), n_heads, b_tile, L, L),
                         lambda i, l: (l, 0, i, 0, 0)),                            # attn per layer
        ),
        scratch_shapes=[pltpu.VMEM((M, D), jnp.float32)],
        compiler_params=pltpu.CompilerParams(
            dimension_semantics=("parallel", "arbitrary")),
    )(pad, x_flat, wq, wk, wv, wo, g1, b1, w1, w2, g2, b2)

    out = out_flat.reshape(B, L, D)
    attns = [jnp.transpose(attn_all[l], (1, 0, 2, 3)) for l in range(n_layers)]
    return out, attns


# ----------------------------- glue / setup ----------------------------------

def get_sinusoid_encoding_table(n_position, d_model):
    pos = np.arange(n_position, dtype=np.float64)[:, None]
    hid = np.arange(d_model, dtype=np.float64)[None, :]
    angle = pos / np.power(10000.0, 2.0 * (np.floor(hid / 2.0)) / d_model)
    table = angle.copy()
    table[:, 0::2] = np.sin(angle[:, 0::2])
    table[:, 1::2] = np.cos(angle[:, 1::2])
    return jnp.asarray(table, dtype=jnp.float32)


def init_layer_params(key, d_model, d_k, d_v, n_heads, d_ff):
    ks = jax.random.split(key, 6)
    s = 0.02
    return {
        "wq": jax.random.normal(ks[0], (d_model, n_heads * d_k), jnp.float32) * s,
        "wk": jax.random.normal(ks[1], (d_model, n_heads * d_k), jnp.float32) * s,
        "wv": jax.random.normal(ks[2], (d_model, n_heads * d_v), jnp.float32) * s,
        "wo": jax.random.normal(ks[3], (n_heads * d_v, d_model), jnp.float32) * s,
        "g1": jnp.ones((1, d_model), jnp.float32),
        "b1": jnp.zeros((1, d_model), jnp.float32),
        "w1": jax.random.normal(ks[4], (d_model, d_ff), jnp.float32) * s,
        "w2": jax.random.normal(ks[5], (d_ff, d_model), jnp.float32) * s,
        "g2": jnp.ones((1, d_model), jnp.float32),
        "b2": jnp.zeros((1, d_model), jnp.float32),
    }


# pure-JAX reference (same math, no Pallas) for a sanity check
def encoder_layer_ref(x, mask_f, p, *, n_heads, d_k, d_v):
    B, L, D = x.shape
    q = (x @ p["wq"]).reshape(B, L, n_heads, d_k).transpose(0, 2, 1, 3)
    k = (x @ p["wk"]).reshape(B, L, n_heads, d_k).transpose(0, 2, 1, 3)
    v = (x @ p["wv"]).reshape(B, L, n_heads, d_v).transpose(0, 2, 1, 3)
    scores = jnp.einsum("bhqd,bhkd->bhqk", q, k) / math.sqrt(d_k)
    scores = jnp.where(mask_f[:, None, :, :] > 0.5, -1e9, scores)
    attn = jax.nn.softmax(scores, axis=-1)
    ctx = jnp.einsum("bhqk,bhkd->bhqd", attn, v).transpose(0, 2, 1, 3).reshape(B, L, n_heads * d_v)
    out = ctx @ p["wo"] + x
    mu = out.mean(-1, keepdims=True); var = ((out - mu) ** 2).mean(-1, keepdims=True)
    ln1 = (out - mu) * lax.rsqrt(var + 1e-5) * p["g1"] + p["b1"]
    ff = jnp.maximum(ln1 @ p["w1"], 0.0) @ p["w2"] + ln1
    mu2 = ff.mean(-1, keepdims=True); var2 = ((ff - mu2) ** 2).mean(-1, keepdims=True)
    return (ff - mu2) * lax.rsqrt(var2 + 1e-5) * p["g2"] + p["b2"], attn


if __name__ == "__main__":
    # small, module-consistent shapes
    src_vocab_size = 16
    d_model, d_k, d_v, n_heads, d_ff, n_layers = 32, 8, 8, 4, 64, 2
    B, L = 2, 8

    root = jax.random.PRNGKey(0)
    k_tok, k_emb, *k_layers = jax.random.split(root, 2 + n_layers)

    tokens = jax.random.randint(k_tok, (B, L), 0, src_vocab_size)
    tokens = tokens.at[:, -2:].set(0)   # force some padding so the mask matters

    src_emb_table = jax.random.normal(k_emb, (src_vocab_size, d_model), jnp.float32)
    pos_emb_table = get_sinusoid_encoding_table(src_vocab_size, d_model)
    layer_params = [init_layer_params(k, d_model, d_k, d_v, n_heads, d_ff)
                    for k in k_layers]

    out, attns = encoder_forward(tokens, src_emb_table, pos_emb_table, layer_params,
                                 n_heads=n_heads, d_k=d_k, d_v=d_v)
    out = jax.block_until_ready(out)
    attns = [jax.block_until_ready(a) for a in attns]

    # sanity check vs. pure-JAX reference
    x_ref = jnp.take(src_emb_table, tokens, 0) + jnp.take(pos_emb_table, tokens, 0)
    pad_keys = (tokens == 0).astype(jnp.float32)[:, None, :]
    mask_f = jnp.broadcast_to(pad_keys, (B, L, L))
    for p, a_pl in zip(layer_params, attns):
        x_ref, a_ref = encoder_layer_ref(x_ref, mask_f, p,
                                         n_heads=n_heads, d_k=d_k, d_v=d_v)
        assert a_pl.shape == (B, n_heads, L, L)
        assert jnp.max(jnp.abs(a_ref - a_pl)) < 5e-2
    assert out.shape == (B, L, d_model)
    assert jnp.max(jnp.abs(x_ref - out)) < 5e-2

    print("KERNEL_OK")
</pallas_src>

<mosaic_0001>
module attributes {stable_mosaic.version = 11 : i64} {
  func.func @encoder_stack_kernel(%arg0: i32, %arg1: i32, %arg2: memref<2x8xf32, #tpu.memory_space<vmem>>, %arg3: memref<16x32xf32, #tpu.memory_space<vmem>>, %arg4: memref<1x32x32xf32, #tpu.memory_space<vmem>>, %arg5: memref<1x32x32xf32, #tpu.memory_space<vmem>>, %arg6: memref<1x32x32xf32, #tpu.memory_space<vmem>>, %arg7: memref<1x4x8x32xf32, #tpu.memory_space<vmem>>, %arg8: memref<1x1x32xf32, #tpu.memory_space<vmem>>, %arg9: memref<1x1x32xf32, #tpu.memory_space<vmem>>, %arg10: memref<1x32x64xf32, #tpu.memory_space<vmem>>, %arg11: memref<1x64x32xf32, #tpu.memory_space<vmem>>, %arg12: memref<1x1x32xf32, #tpu.memory_space<vmem>>, %arg13: memref<1x1x32xf32, #tpu.memory_space<vmem>>, %arg14: memref<16x32xf32, #tpu.memory_space<vmem>>, %arg15: memref<1x4x2x8x8xf32, #tpu.memory_space<vmem>>, %arg16: memref<16x32xf32, #tpu.memory_space<vmem>>) attributes {dimension_semantics = [#tpu.dimension_semantics<parallel>, #tpu.dimension_semantics<arbitrary>], iteration_bounds = array<i64: 1, 2>, scalar_prefetch = 0 : i64, scratch_operands = 1 : i64, tpu.core_type = #tpu.core_type<tc>, window_params = [{transform_indices = @transform_0, window_bounds = array<i64: 2, 8>}, {transform_indices = @transform_1, window_bounds = array<i64: 16, 32>}, {transform_indices = @transform_2, window_bounds = array<i64: 1, 32, 32>}, {transform_indices = @transform_3, window_bounds = array<i64: 1, 32, 32>}, {transform_indices = @transform_4, window_bounds = array<i64: 1, 32, 32>}, {transform_indices = @transform_5, window_bounds = array<i64: 1, 4, 8, 32>}, {transform_indices = @transform_6, window_bounds = array<i64: 1, 1, 32>}, {transform_indices = @transform_7, window_bounds = array<i64: 1, 1, 32>}, {transform_indices = @transform_8, window_bounds = array<i64: 1, 32, 64>}, {transform_indices = @transform_9, window_bounds = array<i64: 1, 64, 32>}, {transform_indices = @transform_10, window_bounds = array<i64: 1, 1, 32>}, {transform_indices = @transform_11, window_bounds = array<i64: 1, 1, 32>}, {transform_indices = @transform_12, window_bounds = array<i64: 16, 32>}, {transform_indices = @transform_13, window_bounds = array<i64: 1, 4, 2, 8, 8>}]} {
    %c0_i32 = arith.constant 0 : i32
    %0 = arith.cmpi eq, %arg1, %c0_i32 : i32
    %1 = arith.extui %0 : i1 to i32
    %c0_i32_0 = arith.constant 0 : i32
    %2 = arith.cmpi ne, %1, %c0_i32_0 : i32
    scf.if %2 {
      %c0_110 = arith.constant 0 : index
      %c0_111 = arith.constant 0 : index
      %199 = vector.load %arg3[%c0_110, %c0_111] : memref<16x32xf32, #tpu.memory_space<vmem>>, vector<16x32xf32>
      %c0_112 = arith.constant 0 : index
      %c0_113 = arith.constant 0 : index
      %200 = vector.load %arg16[%c0_112, %c0_113] : memref<16x32xf32, #tpu.memory_space<vmem>>, vector<16x32xf32>
      tpu.vector_store %arg16[%c0_112, %c0_113], %199 {strides = array<i32>} : memref<16x32xf32, #tpu.memory_space<vmem>>, vector<16x32xf32>,
    } else {
    }
    %c0 = arith.constant 0 : index
    %c0_1 = arith.constant 0 : index
    %3 = vector.load %arg16[%c0, %c0_1] : memref<16x32xf32, #tpu.memory_space<vmem>>, vector<16x32xf32>
    %c0_2 = arith.constant 0 : index
    %c0_3 = arith.constant 0 : index
    %c0_4 = arith.constant 0 : index
    %4 = vector.load %arg4[%c0_2, %c0_3, %c0_4] : memref<1x32x32xf32, #tpu.memory_space<vmem>>, vector<1x32x32xf32>
    %5 = vector.shape_cast %4 : vector<1x32x32xf32> to vector<32x32xf32>
    %cst = arith.constant dense<0.000000e+00> : vector<16x32xf32>
    %6 = tpu.matmul %3, %5, %cst {dimension_numbers = #tpu.dot_dimension_numbers<[1], [0], [0], [1], [0, 0, 1, 1], [], []>} : vector<16x32xf32>, vector<32x32xf32>, vector<16x32xf32> -> vector<16x32xf32>
    %c0_5 = arith.constant 0 : index
    %c0_6 = arith.constant 0 : index
    %c0_7 = arith.constant 0 : index
    %7 = vector.load %arg5[%c0_5, %c0_6, %c0_7] : memref<1x32x32xf32, #tpu.memory_space<vmem>>, vector<1x32x32xf32>
    %8 = vector.shape_cast %7 : vector<1x32x32xf32> to vector<32x32xf32>
    %cst_8 = arith.constant dense<0.000000e+00> : vector<16x32xf32>
    %9 = tpu.matmul %3, %8, %cst_8 {dimension_numbers = #tpu.dot_dimension_numbers<[1], [0], [0], [1], [0, 0, 1, 1], [], []>} : vector<16x32xf32>, vector<32x32xf32>, vector<16x32xf32> -> vector<16x32xf32>
    %c0_9 = arith.constant 0 : index
    %c0_10 = arith.constant 0 : index
    %c0_11 = arith.constant 0 : index
    %10 = vector.load %arg6[%c0_9, %c0_10, %c0_11] : memref<1x32x32xf32, #tpu.memory_space<vmem>>, vector<1x32x32xf32>
    %11 = vector.shape_cast %10 : vector<1x32x32xf32> to vector<32x32xf32>
    %cst_12 = arith.constant dense<0.000000e+00> : vector<16x32xf32>
    %12 = tpu.matmul %3, %11, %cst_12 {dimension_numbers = #tpu.dot_dimension_numbers<[1], [0], [0], [1], [0, 0, 1, 1], [], []>} : vector<16x32xf32>, vector<32x32xf32>, vector<16x32xf32> -> vector<16x32xf32>
    %13 = vector.shape_cast %6 : vector<16x32xf32> to vector<2x8x32xf32>
    %14 = vector.shape_cast %9 : vector<16x32xf32> to vector<2x8x32xf32>
    %15 = vector.shape_cast %12 : vector<16x32xf32> to vector<2x8x32xf32>
    %c0_13 = arith.constant 0 : index
    %c0_14 = arith.constant 0 : index
    %16 = vector.load %arg2[%c0_13, %c0_14] : memref<2x8xf32, #tpu.memory_space<vmem>>, vector<2x8xf32>
    %17 = vector.shape_cast %16 : vector<2x8xf32> to vector<2x1x8xf32>
    %18 = vector.extract_strided_slice %13 {offsets = [0, 0, 0], sizes = [2, 8, 8], strides = [1, 1, 1]} : vector<2x8x32xf32> to vector<2x8x8xf32>
    %19 = vector.extract_strided_slice %14 {offsets = [0, 0, 0], sizes = [2, 8, 8], strides = [1, 1, 1]} : vector<2x8x32xf32> to vector<2x8x8xf32>
    %20 = vector.extract_strided_slice %15 {offsets = [0, 0, 0], sizes = [2, 8, 8], strides = [1, 1, 1]} : vector<2x8x32xf32> to vector<2x8x8xf32>
    "tpu.trace_start"() <{level = 10 : i32, message = "bqd,bkd->bqk"}> : () -> ()
    %cst_15 = arith.constant dense<0.000000e+00> : vector<2x8x8xf32>
    %21 = tpu.matmul %18, %19, %cst_15 {dimension_numbers = #tpu.dot_dimension_numbers<[2], [2], [1], [1], [0, 0, 0, 1, 1, 1], [0], [0]>} : vector<2x8x8xf32>, vector<2x8x8xf32>, vector<2x8x8xf32> -> vector<2x8x8xf32>
    %cst_16 = arith.constant 5.000000e-01 : f32
    "tpu.trace_stop"() : () -> ()
    %22 = vector.broadcast %cst_16 : f32 to vector<2x1x8xf32>
    %23 = arith.cmpf ogt, %17, %22 : vector<2x1x8xf32>
    %cst_17 = arith.constant -1.000000e+09 : f32
    %24 = vector.shape_cast %23 : vector<2x1x8xi1> to vector<2x1x8xi1>
    %25 = vector.broadcast %24 : vector<2x1x8xi1> to vector<2x8x8xi1>
    %26 = vector.broadcast %cst_17 : f32 to vector<2x8x8xf32>
    %27 = arith.select %25, %26, %21 : vector<2x8x8xi1>, vector<2x8x8xf32>
    %cst_18 = arith.constant dense<0xFF800000> : vector<2x8xf32>
    %28 = vector.multi_reduction <maximumf>, %27, %cst_18 [2] : vector<2x8x8xf32> to vector<2x8xf32>
    %29 = vector.shape_cast %28 : vector<2x8xf32> to vector<2x8x1xf32>
    %30 = vector.broadcast %29 : vector<2x8x1xf32> to vector<2x8x8xf32>
    %31 = arith.subf %27, %30 : vector<2x8x8xf32>
    %32 = math.exp %31 : vector<2x8x8xf32>
    %cst_19 = arith.constant dense<0.000000e+00> : vector<2x8xf32>
    %33 = vector.multi_reduction <add>, %32, %cst_19 [2] : vector<2x8x8xf32> to vector<2x8xf32>
    %34 = vector.shape_cast %33 : vector<2x8xf32> to vector<2x8x1xf32>
    %35 = tpu.reciprocal %34 {approx = true} : vector<2x8x1xf32> -> vector<2x8x1xf32>
    %36 = vector.broadcast %35 : vector<2x8x1xf32> to vector<2x8x8xf32>
    %37 = arith.mulf %32, %36 : vector<2x8x8xf32>
    %c0_20 = arith.constant 0 : index
    %c0_21 = arith.constant 0 : index
    %c0_22 = arith.constant 0 : index
    %c0_23 = arith.constant 0 : index
    %c0_24 = arith.constant 0 : index
    %38 = vector.load %arg15[%c0_20, %c0_21, %c0_22, %c0_23, %c0_24] : memref<1x4x2x8x8xf32, #tpu.memory_space<vmem>>, vector<1x1x2x8x8xf32>
    %39 = vector.shape_cast %38 : vector<1x1x2x8x8xf32> to vector<2x8x8xf32>
    %40 = vector.shape_cast %37 : vector<2x8x8xf32> to vector<1x1x2x8x8xf32>
    tpu.vector_store %arg15[%c0_20, %c0_21, %c0_22, %c0_23, %c0_24], %40 {strides = array<i32>} : memref<1x4x2x8x8xf32, #tpu.memory_space<vmem>>, vector<1x1x2x8x8xf32>,
    "tpu.trace_start"() <{level = 10 : i32, message = "bqk,bkd->bqd"}> : () -> ()
    %cst_25 = arith.constant dense<0.000000e+00> : vector<2x8x8xf32>
    %41 = tpu.matmul %37, %20, %cst_25 {dimension_numbers = #tpu.dot_dimension_numbers<[2], [1], [1], [2], [0, 0, 0, 1, 1, 2], [0], [0]>} : vector<2x8x8xf32>, vector<2x8x8xf32>, vector<2x8x8xf32> -> vector<2x8x8xf32>
    "tpu.trace_stop"() : () -> ()
    %42 = vector.shape_cast %41 : vector<2x8x8xf32> to vector<16x8xf32>
    %c0_26 = arith.constant 0 : index
    %c0_27 = arith.constant 0 : index
    %c0_28 = arith.constant 0 : index
    %c0_29 = arith.constant 0 : index
    %43 = vector.load %arg7[%c0_26, %c0_27, %c0_28, %c0_29] : memref<1x4x8x32xf32, #tpu.memory_space<vmem>>, vector<1x1x8x32xf32>
    %44 = vector.shape_cast %43 : vector<1x1x8x32xf32> to vector<8x32xf32>
    %cst_30 = arith.constant dense<0.000000e+00> : vector<16x32xf32>
    %45 = tpu.matmul %42, %44, %cst_30 {dimension_numbers = #tpu.dot_dimension_numbers<[1], [0], [0], [1], [0, 0, 1, 1], [], []>} : vector<16x8xf32>, vector<8x32xf32>, vector<16x32xf32> -> vector<16x32xf32>
    %46 = arith.addf %3, %45 : vector<16x32xf32>
    %47 = vector.extract_strided_slice %13 {offsets = [0, 0, 8], sizes = [2, 8, 8], strides = [1, 1, 1]} : vector<2x8x32xf32> to vector<2x8x8xf32>
    %48 = vector.extract_strided_slice %14 {offsets = [0, 0, 8], sizes = [2, 8, 8], strides = [1, 1, 1]} : vector<2x8x32xf32> to vector<2x8x8xf32>
    %49 = vector.extract_strided_slice %15 {offsets = [0, 0, 8], sizes = [2, 8, 8], strides = [1, 1, 1]} : vector<2x8x32xf32> to vector<2x8x8xf32>
    "tpu.trace_start"() <{level = 10 : i32, message = "bqd,bkd->bqk"}> : () -> ()
    %cst_31 = arith.constant dense<0.000000e+00> : vector<2x8x8xf32>
    %50 = tpu.matmul %47, %48, %cst_31 {dimension_numbers = #tpu.dot_dimension_numbers<[2], [2], [1], [1], [0, 0, 0, 1, 1, 1], [0], [0]>} : vector<2x8x8xf32>, vector<2x8x8xf32>, vector<2x8x8xf32> -> vector<2x8x8xf32>
    %cst_32 = arith.constant 5.000000e-01 : f32
    "tpu.trace_stop"() : () -> ()
    %51 = vector.broadcast %cst_32 : f32 to vector<2x1x8xf32>
    %52 = arith.cmpf ogt, %17, %51 : vector<2x1x8xf32>
    %cst_33 = arith.constant -1.000000e+09 : f32
    %53 = vector.shape_cast %52 : vector<2x1x8xi1> to vector<2x1x8xi1>
    %54 = vector.broadcast %53 : vector<2x1x8xi1> to vector<2x8x8xi1>
    %55 = vector.broadcast %cst_33 : f32 to vector<2x8x8xf32>
    %56 = arith.select %54, %55, %50 : vector<2x8x8xi1>, vector<2x8x8xf32>
    %cst_34 = arith.constant dense<0xFF800000> : vector<2x8xf32>
    %57 = vector.multi_reduction <maximumf>, %56, %cst_34 [2] : vector<2x8x8xf32> to vector<2x8xf32>
    %58 = vector.shape_cast %57 : vector<2x8xf32> to vector<2x8x1xf32>
    %59 = vector.broadcast %58 : vector<2x8x1xf32> to vector<2x8x8xf32>
    %60 = arith.subf %56, %59 : vector<2x8x8xf32>
    %61 = math.exp %60 : vector<2x8x8xf32>
    %cst_35 = arith.constant dense<0.000000e+00> : vector<2x8xf32>
    %62 = vector.multi_reduction <add>, %61, %cst_35 [2] : vector<2x8x8xf32> to vector<2x8xf32>
    %63 = vector.shape_cast %62 : vector<2x8xf32> to vector<2x8x1xf32>
    %64 = tpu.reciprocal %63 {approx = true} : vector<2x8x1xf32> -> vector<2x8x1xf32>
    %65 = vector.broadcast %64 : vector<2x8x1xf32> to vector<2x8x8xf32>
    %66 = arith.mulf %61, %65 : vector<2x8x8xf32>
    %c0_36 = arith.constant 0 : index
    %c1 = arith.constant 1 : index
    %c0_37 = arith.constant 0 : index
    %c0_38 = arith.constant 0 : index
    %c0_39 = arith.constant 0 : index
    %67 = vector.load %arg15[%c0_36, %c1, %c0_37, %c0_38, %c0_39] : memref<1x4x2x8x8xf32, #tpu.memory_space<vmem>>, vector<1x1x2x8x8xf32>
    %68 = vector.shape_cast %67 : vector<1x1x2x8x8xf32> to vector<2x8x8xf32>
    %69 = vector.shape_cast %66 : vector<2x8x8xf32> to vector<1x1x2x8x8xf32>
    tpu.vector_store %arg15[%c0_36, %c1, %c0_37, %c0_38, %c0_39], %69 {strides = array<i32>} : memref<1x4x2x8x8xf32, #tpu.memory_space<vmem>>, vector<1x1x2x8x8xf32>,
    "tpu.trace_start"() <{level = 10 : i32, message = "bqk,bkd->bqd"}> : () -> ()
    %cst_40 = arith.constant dense<0.000000e+00> : vector<2x8x8xf32>
    %70 = tpu.matmul %66, %49, %cst_40 {dimension_numbers = #tpu.dot_dimension_numbers<[2], [1], [1], [2], [0, 0, 0, 1, 1, 2], [0], [0]>} : vector<2x8x8xf32>, vector<2x8x8xf32>, vector<2x8x8xf32> -> vector<2x8x8xf32>
    "tpu.trace_stop"() : () -> ()
    %71 = vector.shape_cast %70 : vector<2x8x8xf32> to vector<16x8xf32>
    %c0_41 = arith.constant 0 : index
    %c1_42 = arith.constant 1 : index
    %c0_43 = arith.constant 0 : index
    %c0_44 = arith.constant 0 : index
    %72 = vector.load %arg7[%c0_41, %c1_42, %c0_43, %c0_44] : memref<1x4x8x32xf32, #tpu.memory_space<vmem>>, vector<1x1x8x32xf32>
    %73 = vector.shape_cast %72 : vector<1x1x8x32xf32> to vector<8x32xf32>
    %cst_45 = arith.constant dense<0.000000e+00> : vector<16x32xf32>
    %74 = tpu.matmul %71, %73, %cst_45 {dimension_numbers = #tpu.dot_dimension_numbers<[1], [0], [0], [1], [0, 0, 1, 1], [], []>} : vector<16x8xf32>, vector<8x32xf32>, vector<16x32xf32> -> vector<16x32xf32>
    %75 = arith.addf %46, %74 : vector<16x32xf32>
    %76 = vector.extract_strided_slice %13 {offsets = [0, 0, 16], sizes = [2, 8, 8], strides = [1, 1, 1]} : vector<2x8x32xf32> to vector<2x8x8xf32>
    %77 = vector.extract_strided_slice %14 {offsets = [0, 0, 16], sizes = [2, 8, 8], strides = [1, 1, 1]} : vector<2x8x32xf32> to vector<2x8x8xf32>
    %78 = vector.extract_strided_slice %15 {offsets = [0, 0, 16], sizes = [2, 8, 8], strides = [1, 1, 1]} : vector<2x8x32xf32> to vector<2x8x8xf32>
    "tpu.trace_start"() <{level = 10 : i32, message = "bqd,bkd->bqk"}> : () -> ()
    %cst_46 = arith.constant dense<0.000000e+00> : vector<2x8x8xf32>
    %79 = tpu.matmul %76, %77, %cst_46 {dimension_numbers = #tpu.dot_dimension_numbers<[2], [2], [1], [1], [0, 0, 0, 1, 1, 1], [0], [0]>} : vector<2x8x8xf32>, vector<2x8x8xf32>, vector<2x8x8xf32> -> vector<2x8x8xf32>
    %cst_47 = arith.constant 5.000000e-01 : f32
    "tpu.trace_stop"() : () -> ()
    %80 = vector.broadcast %cst_47 : f32 to vector<2x1x8xf32>
    %81 = arith.cmpf ogt, %17, %80 : vector<2x1x8xf32>
    %cst_48 = arith.constant -1.000000e+09 : f32
    %82 = vector.shape_cast %81 : vector<2x1x8xi1> to vector<2x1x8xi1>
    %83 = vector.broadcast %82 : vector<2x1x8xi1> to vector<2x8x8xi1>
    %84 = vector.broadcast %cst_48 : f32 to vector<2x8x8xf32>
    %85 = arith.select %83, %84, %79 : vector<2x8x8xi1>, vector<2x8x8xf32>
    %cst_49 = arith.constant dense<0xFF800000> : vector<2x8xf32>
    %86 = vector.multi_reduction <maximumf>, %85, %cst_49 [2] : vector<2x8x8xf32> to vector<2x8xf32>
    %87 = vector.shape_cast %86 : vector<2x8xf32> to vector<2x8x1xf32>
    %88 = vector.broadcast %87 : vector<2x8x1xf32> to vector<2x8x8xf32>
    %89 = arith.subf %85, %88 : vector<2x8x8xf32>
    %90 = math.exp %89 : vector<2x8x8xf32>
    %cst_50 = arith.constant dense<0.000000e+00> : vector<2x8xf32>
    %91 = vector.multi_reduction <add>, %90, %cst_50 [2] : vector<2x8x8xf32> to vector<2x8xf32>
    %92 = vector.shape_cast %91 : vector<2x8xf32> to vector<2x8x1xf32>
    %93 = tpu.reciprocal %92 {approx = true} : vector<2x8x1xf32> -> vector<2x8x1xf32>
    %94 = vector.broadcast %93 : vector<2x8x1xf32> to vector<2x8x8xf32>
    %95 = arith.mulf %90, %94 : vector<2x8x8xf32>
    %c0_51 = arith.constant 0 : index
    %c2 = arith.constant 2 : index
    %c0_52 = arith.constant 0 : index
    %c0_53 = arith.constant 0 : index
    %c0_54 = arith.constant 0 : index
    %96 = vector.load %arg15[%c0_51, %c2, %c0_52, %c0_53, %c0_54] : memref<1x4x2x8x8xf32, #tpu.memory_space<vmem>>, vector<1x1x2x8x8xf32>
    %97 = vector.shape_cast %96 : vector<1x1x2x8x8xf32> to vector<2x8x8xf32>
    %98 = vector.shape_cast %95 : vector<2x8x8xf32> to vector<1x1x2x8x8xf32>
    tpu.vector_store %arg15[%c0_51, %c2, %c0_52, %c0_53, %c0_54], %98 {strides = array<i32>} : memref<1x4x2x8x8xf32, #tpu.memory_space<vmem>>, vector<1x1x2x8x8xf32>,
    "tpu.trace_start"() <{level = 10 : i32, message = "bqk,bkd->bqd"}> : () -> ()
    %cst_55 = arith.constant dense<0.000000e+00> : vector<2x8x8xf32>
    %99 = tpu.matmul %95, %78, %cst_55 {dimension_numbers = #tpu.dot_dimension_numbers<[2], [1], [1], [2], [0, 0, 0, 1, 1, 2], [0], [0]>} : vector<2x8x8xf32>, vector<2x8x8xf32>, vector<2x8x8xf32> -> vector<2x8x8xf32>
    "tpu.trace_stop"() : () -> ()
    %100 = vector.shape_cast %99 : vector<2x8x8xf32> to vector<16x8xf32>
    %c0_56 = arith.constant 0 : index
    %c2_57 = arith.constant 2 : index
    %c0_58 = arith.constant 0 : index
    %c0_59 = arith.constant 0 : index
    %101 = vector.load %arg7[%c0_56, %c2_57, %c0_58, %c0_59] : memref<1x4x8x32xf32, #tpu.memory_space<vmem>>, vector<1x1x8x32xf32>
    %102 = vector.shape_cast %101 : vector<1x1x8x32xf32> to vector<8x32xf32>
    %cst_60 = arith.constant dense<0.000000e+00> : vector<16x32xf32>
    %103 = tpu.matmul %100, %102, %cst_60 {dimension_numbers = #tpu.dot_dimension_numbers<[1], [0], [0], [1], [0, 0, 1, 1], [], []>} : vector<16x8xf32>, vector<8x32xf32>, vector<16x32xf32> -> vector<16x32xf32>
    %104 = arith.addf %75, %103 : vector<16x32xf32>
    %105 = vector.extract_strided_slice %13 {offsets = [0, 0, 24], sizes = [2, 8, 8], strides = [1, 1, 1]} : vector<2x8x32xf32> to vector<2x8x8xf32>
    %106 = vector.extract_strided_slice %14 {offsets = [0, 0, 24], sizes = [2, 8, 8], strides = [1, 1, 1]} : vector<2x8x32xf32> to vector<2x8x8xf32>
    %107 = vector.extract_strided_slice %15 {offsets = [0, 0, 24], sizes = [2, 8, 8], strides = [1, 1, 1]} : vector<2x8x32xf32> to vector<2x8x8xf32>
    "tpu.trace_start"() <{level = 10 : i32, message = "bqd,bkd->bqk"}> : () -> ()
    %cst_61 = arith.constant dense<0.000000e+00> : vector<2x8x8xf32>
    %108 = tpu.matmul %105, %106, %cst_61 {dimension_numbers = #tpu.dot_dimension_numbers<[2], [2], [1], [1], [0, 0, 0, 1, 1, 1], [0], [0]>} : vector<2x8x8xf32>, vector<2x8x8xf32>, vector<2x8x8xf32> -> vector<2x8x8xf32>
    %cst_62 = arith.constant 5.000000e-01 : f32
    "tpu.trace_stop"() : () -> ()
    %109 = vector.broadcast %cst_62 : f32 to vector<2x1x8xf32>
    %110 = arith.cmpf ogt, %17, %109 : vector<2x1x8xf32>
    %cst_63 = arith.constant -1.000000e+09 : f32
    %111 = vector.shape_cast %110 : vector<2x1x8xi1> to vector<2x1x8xi1>
    %112 = vector.broadcast %111 : vector<2x1x8xi1> to vector<2x8x8xi1>
    %113 = vector.broadcast %cst_63 : f32 to vector<2x8x8xf32>
    %114 = arith.select %112, %113, %108 : vector<2x8x8xi1>, vector<2x8x8xf32>
    %cst_64 = arith.constant dense<0xFF800000> : vector<2x8xf32>
    %115 = vector.multi_reduction <maximumf>, %114, %cst_64 [2] : vector<2x8x8xf32> to vector<2x8xf32>
    %116 = vector.shape_cast %115 : vector<2x8xf32> to vector<2x8x1xf32>
    %117 = vector.broadcast %116 : vector<2x8x1xf32> to vector<2x8x8xf32>
    %118 = arith.subf %114, %117 : vector<2x8x8xf32>
    %119 = math.exp %118 : vector<2x8x8xf32>
    %cst_65 = arith.constant dense<0.000000e+00> : vector<2x8xf32>
    %120 = vector.multi_reduction <add>, %119, %cst_65 [2] : vector<2x8x8xf32> to vector<2x8xf32>
    %121 = vector.shape_cast %120 : vector<2x8xf32> to vector<2x8x1xf32>
    %122 = tpu.reciprocal %121 {approx = true} : vector<2x8x1xf32> -> vector<2x8x1xf32>
    %123 = vector.broadcast %122 : vector<2x8x1xf32> to vector<2x8x8xf32>
    %124 = arith.mulf %119, %123 : vector<2x8x8xf32>
    %c0_66 = arith.constant 0 : index
    %c3 = arith.constant 3 : index
    %c0_67 = arith.constant 0 : index
    %c0_68 = arith.constant 0 : index
    %c0_69 = arith.constant 0 : index
    %125 = vector.load %arg15[%c0_66, %c3, %c0_67, %c0_68, %c0_69] : memref<1x4x2x8x8xf32, #tpu.memory_space<vmem>>, vector<1x1x2x8x8xf32>
    %126 = vector.shape_cast %125 : vector<1x1x2x8x8xf32> to vector<2x8x8xf32>
    %127 = vector.shape_cast %124 : vector<2x8x8xf32> to vector<1x1x2x8x8xf32>
    tpu.vector_store %arg15[%c0_66, %c3, %c0_67, %c0_68, %c0_69], %127 {strides = array<i32>} : memref<1x4x2x8x8xf32, #tpu.memory_space<vmem>>, vector<1x1x2x8x8xf32>,
    "tpu.trace_start"() <{level = 10 : i32, message = "bqk,bkd->bqd"}> : () -> ()
    %cst_70 = arith.constant dense<0.000000e+00> : vector<2x8x8xf32>
    %128 = tpu.matmul %124, %107, %cst_70 {dimension_numbers = #tpu.dot_dimension_numbers<[2], [1], [1], [2], [0, 0, 0, 1, 1, 2], [0], [0]>} : vector<2x8x8xf32>, vector<2x8x8xf32>, vector<2x8x8xf32> -> vector<2x8x8xf32>
    "tpu.trace_stop"() : () -> ()
    %129 = vector.shape_cast %128 : vector<2x8x8xf32> to vector<16x8xf32>
    %c0_71 = arith.constant 0 : index
    %c3_72 = arith.constant 3 : index
    %c0_73 = arith.constant 0 : index
    %c0_74 = arith.constant 0 : index
    %130 = vector.load %arg7[%c0_71, %c3_72, %c0_73, %c0_74] : memref<1x4x8x32xf32, #tpu.memory_space<vmem>>, vector<1x1x8x32xf32>
    %131 = vector.shape_cast %130 : vector<1x1x8x32xf32> to vector<8x32xf32>
    %cst_75 = arith.constant dense<0.000000e+00> : vector<16x32xf32>
    %132 = tpu.matmul %129, %131, %cst_75 {dimension_numbers = #tpu.dot_dimension_numbers<[1], [0], [0], [1], [0, 0, 1, 1], [], []>} : vector<16x8xf32>, vector<8x32xf32>, vector<16x32xf32> -> vector<16x32xf32>
    %133 = arith.addf %104, %132 : vector<16x32xf32>
    %cst_76 = arith.constant dense<0.000000e+00> : vector<16xf32>
    %134 = vector.multi_reduction <add>, %133, %cst_76 [1] : vector<16x32xf32> to vector<16xf32>
    %135 = vector.shape_cast %134 : vector<16xf32> to vector<16x1xf32>
    %cst_77 = arith.constant 3.200000e+01 : f32
    %136 = vector.broadcast %cst_77 : f32 to vector<16x1xf32>
    %137 = arith.divf %135, %136 : vector<16x1xf32>
    %138 = vector.broadcast %137 : vector<16x1xf32> to vector<16x32xf32>
    %139 = arith.subf %133, %138 : vector<16x32xf32>
    %140 = arith.mulf %139, %139 : vector<16x32xf32>
    %cst_78 = arith.constant dense<0.000000e+00> : vector<16xf32>
    %141 = vector.multi_reduction <add>, %140, %cst_78 [1] : vector<16x32xf32> to vector<16xf32>
    %142 = vector.shape_cast %141 : vector<16xf32> to vector<16x1xf32>
    %cst_79 = arith.constant 3.200000e+01 : f32
    %143 = vector.broadcast %cst_79 : f32 to vector<16x1xf32>
    %144 = arith.divf %142, %143 : vector<16x1xf32>
    %145 = vector.broadcast %137 : vector<16x1xf32> to vector<16x32xf32>
    %146 = arith.subf %133, %145 : vector<16x32xf32>
    %cst_80 = arith.constant 9.99999974E-6 : f32
    %147 = vector.broadcast %cst_80 : f32 to vector<16x1xf32>
    %148 = arith.addf %144, %147 : vector<16x1xf32>
    %149 = math.rsqrt %148 : vector<16x1xf32>
    %150 = vector.broadcast %149 : vector<16x1xf32> to vector<16x32xf32>
    %151 = arith.mulf %146, %150 : vector<16x32xf32>
    %c0_81 = arith.constant 0 : index
    %c0_82 = arith.constant 0 : index
    %c0_83 = arith.constant 0 : index
    %152 = vector.load %arg8[%c0_81, %c0_82, %c0_83] : memref<1x1x32xf32, #tpu.memory_space<vmem>>, vector<1x1x32xf32>
    %153 = vector.shape_cast %152 : vector<1x1x32xf32> to vector<1x32xf32>
    %154 = vector.broadcast %153 : vector<1x32xf32> to vector<16x32xf32>
    %155 = arith.mulf %151, %154 : vector<16x32xf32>
    %c0_84 = arith.constant 0 : index
    %c0_85 = arith.constant 0 : index
    %c0_86 = arith.constant 0 : index
    %156 = vector.load %arg9[%c0_84, %c0_85, %c0_86] : memref<1x1x32xf32, #tpu.memory_space<vmem>>, vector<1x1x32xf32>
    %157 = vector.shape_cast %156 : vector<1x1x32xf32> to vector<1x32xf32>
    %158 = vector.broadcast %157 : vector<1x32xf32> to vector<16x32xf32>
    %159 = arith.addf %155, %158 : vector<16x32xf32>
    %c0_87 = arith.constant 0 : index
    %c0_88 = arith.constant 0 : index
    %c0_89 = arith.constant 0 : index
    %160 = vector.load %arg10[%c0_87, %c0_88, %c0_89] : memref<1x32x64xf32, #tpu.memory_space<vmem>>, vector<1x32x64xf32>
    %161 = vector.shape_cast %160 : vector<1x32x64xf32> to vector<32x64xf32>
    %cst_90 = arith.constant dense<0.000000e+00> : vector<16x64xf32>
    %162 = tpu.matmul %159, %161, %cst_90 {dimension_numbers = #tpu.dot_dimension_numbers<[1], [0], [0], [1], [0, 0, 1, 1], [], []>} : vector<16x32xf32>, vector<32x64xf32>, vector<16x64xf32> -> vector<16x64xf32>
    %cst_91 = arith.constant 0.000000e+00 : f32
    %163 = vector.broadcast %cst_91 : f32 to vector<16x64xf32>
    %164 = arith.maximumf %162, %163 : vector<16x64xf32>
    %c0_92 = arith.constant 0 : index
    %c0_93 = arith.constant 0 : index
    %c0_94 = arith.constant 0 : index
    %165 = vector.load %arg11[%c0_92, %c0_93, %c0_94] : memref<1x64x32xf32, #tpu.memory_space<vmem>>, vector<1x64x32xf32>
    %166 = vector.shape_cast %165 : vector<1x64x32xf32> to vector<64x32xf32>
    %cst_95 = arith.constant dense<0.000000e+00> : vector<16x32xf32>
    %167 = tpu.matmul %164, %166, %cst_95 {dimension_numbers = #tpu.dot_dimension_numbers<[1], [0], [0], [1], [0, 0, 1, 1], [], []>} : vector<16x64xf32>, vector<64x32xf32>, vector<16x32xf32> -> vector<16x32xf32>
    %168 = arith.addf %167, %159 : vector<16x32xf32>
    %cst_96 = arith.constant dense<0.000000e+00> : vector<16xf32>
    %169 = vector.multi_reduction <add>, %168, %cst_96 [1] : vector<16x32xf32> to vector<16xf32>
    %170 = vector.shape_cast %169 : vector<16xf32> to vector<16x1xf32>
    %cst_97 = arith.constant 3.200000e+01 : f32
    %171 = vector.broadcast %cst_97 : f32 to vector<16x1xf32>
    %172 = arith.divf %170, %171 : vector<16x1xf32>
    %173 = vector.broadcast %172 : vector<16x1xf32> to vector<16x32xf32>
    %174 = arith.subf %168, %173 : vector<16x32xf32>
    %175 = arith.mulf %174, %174 : vector<16x32xf32>
    %cst_98 = arith.constant dense<0.000000e+00> : vector<16xf32>
    %176 = vector.multi_reduction <add>, %175, %cst_98 [1] : vector<16x32xf32> to vector<16xf32>
    %177 = vector.shape_cast %176 : vector<16xf32> to vector<16x1xf32>
    %cst_99 = arith.constant 3.200000e+01 : f32
    %178 = vector.broadcast %cst_99 : f32 to vector<16x1xf32>
    %179 = arith.divf %177, %178 : vector<16x1xf32>
    %180 = vector.broadcast %172 : vector<16x1xf32> to vector<16x32xf32>
    %181 = arith.subf %168, %180 : vector<16x32xf32>
    %cst_100 = arith.constant 9.99999974E-6 : f32
    %182 = vector.broadcast %cst_100 : f32 to vector<16x1xf32>
    %183 = arith.addf %179, %182 : vector<16x1xf32>
    %184 = math.rsqrt %183 : vector<16x1xf32>
    %185 = vector.broadcast %184 : vector<16x1xf32> to vector<16x32xf32>
    %186 = arith.mulf %181, %185 : vector<16x32xf32>
    %c0_101 = arith.constant 0 : index
    %c0_102 = arith.constant 0 : index
    %c0_103 = arith.constant 0 : index
    %187 = vector.load %arg12[%c0_101, %c0_102, %c0_103] : memref<1x1x32xf32, #tpu.memory_space<vmem>>, vector<1x1x32xf32>
    %188 = vector.shape_cast %187 : vector<1x1x32xf32> to vector<1x32xf32>
    %189 = vector.broadcast %188 : vector<1x32xf32> to vector<16x32xf32>
    %190 = arith.mulf %186, %189 : vector<16x32xf32>
    %c0_104 = arith.constant 0 : index
    %c0_105 = arith.constant 0 : index
    %c0_106 = arith.constant 0 : index
    %191 = vector.load %arg13[%c0_104, %c0_105, %c0_106] : memref<1x1x32xf32, #tpu.memory_space<vmem>>, vector<1x1x32xf32>
    %192 = vector.shape_cast %191 : vector<1x1x32xf32> to vector<1x32xf32>
    %193 = vector.broadcast %192 : vector<1x32xf32> to vector<16x32xf32>
    %194 = arith.addf %190, %193 : vector<16x32xf32>
    %c0_107 = arith.constant 0 : index
    %c0_108 = arith.constant 0 : index
    %195 = vector.load %arg16[%c0_107, %c0_108] : memref<16x32xf32, #tpu.memory_space<vmem>>, vector<16x32xf32>
    tpu.vector_store %arg16[%c0_107, %c0_108], %194 {strides = array<i32>} : memref<16x32xf32, #tpu.memory_space<vmem>>, vector<16x32xf32>,
    %c1_i32 = arith.constant 1 : i32
    %196 = arith.cmpi eq, %arg1, %c1_i32 : i32
    %197 = arith.extui %196 : i1 to i32
    %c0_i32_109 = arith.constant 0 : i32
    %198 = arith.cmpi ne, %197, %c0_i32_109 : i32
    scf.if %198 {
      %c0_110 = arith.constant 0 : index
      %c0_111 = arith.constant 0 : index
      %199 = vector.load %arg14[%c0_110, %c0_111] : memref<16x32xf32, #tpu.memory_space<vmem>>, vector<16x32xf32>
      tpu.vector_store %arg14[%c0_110, %c0_111], %194 {strides = array<i32>} : memref<16x32xf32, #tpu.memory_space<vmem>>, vector<16x32xf32>,
    } else {
    }
    return
  }
  func.func @transform_0(%arg0: i32, %arg1: i32) -> (i32, i32) {
    %c0_i32 = arith.constant 0 : i32
    %c0_i32_0 = arith.constant 0 : i32
    return %arg0, %c0_i32 : i32, i32
  }
  func.func @transform_1(%arg0: i32, %arg1: i32) -> (i32, i32) {
    %c0_i32 = arith.constant 0 : i32
    %c0_i32_0 = arith.constant 0 : i32
    return %arg0, %c0_i32 : i32, i32
  }
  func.func @transform_2(%arg0: i32, %arg1: i32) -> (i32, i32, i32) {
    %c0_i32 = arith.constant 0 : i32
    %c0_i32_0 = arith.constant 0 : i32
    %c0_i32_1 = arith.constant 0 : i32
    return %arg1, %c0_i32, %c0_i32_0 : i32, i32, i32
  }
  func.func @transform_3(%arg0: i32, %arg1: i32) -> (i32, i32, i32) {
    %c0_i32 = arith.constant 0 : i32
    %c0_i32_0 = arith.constant 0 : i32
    %c0_i32_1 = arith.constant 0 : i32
    return %arg1, %c0_i32, %c0_i32_0 : i32, i32, i32
  }
  func.func @transform_4(%arg0: i32, %arg1: i32) -> (i32, i32, i32) {
    %c0_i32 = arith.constant 0 : i32
    %c0_i32_0 = arith.constant 0 : i32
    %c0_i32_1 = arith.constant 0 : i32
    return %arg1, %c0_i32, %c0_i32_0 : i32, i32, i32
  }
  func.func @transform_5(%arg0: i32, %arg1: i32) -> (i32, i32, i32, i32) {
    %c0_i32 = arith.constant 0 : i32
    %c0_i32_0 = arith.constant 0 : i32
    %c0_i32_1 = arith.constant 0 : i32
    %c0_i32_2 = arith.constant 0 : i32
    return %arg1, %c0_i32, %c0_i32_0, %c0_i32_1 : i32, i32, i32, i32
  }
  func.func @transform_6(%arg0: i32, %arg1: i32) -> (i32, i32, i32) {
    %c0_i32 = arith.constant 0 : i32
    %c0_i32_0 = arith.constant 0 : i32
    %c0_i32_1 = arith.constant 0 : i32
    return %arg1, %c0_i32, %c0_i32_0 : i32, i32, i32
  }
  func.func @transform_7(%arg0: i32, %arg1: i32) -> (i32, i32, i32) {
    %c0_i32 = arith.constant 0 : i32
    %c0_i32_0 = arith.constant 0 : i32
    %c0_i32_1 = arith.constant 0 : i32
    return %arg1, %c0_i32, %c0_i32_0 : i32, i32, i32
  }
  func.func @transform_8(%arg0: i32, %arg1: i32) -> (i32, i32, i32) {
    %c0_i32 = arith.constant 0 : i32
    %c0_i32_0 = arith.constant 0 : i32
    %c0_i32_1 = arith.constant 0 : i32
    return %arg1, %c0_i32, %c0_i32_0 : i32, i32, i32
  }
  func.func @transform_9(%arg0: i32, %arg1: i32) -> (i32, i32, i32) {
    %c0_i32 = arith.constant 0 : i32
    %c0_i32_0 = arith.constant 0 : i32
    %c0_i32_1 = arith.constant 0 : i32
    return %arg1, %c0_i32, %c0_i32_0 : i32, i32, i32
  }
  func.func @transform_10(%arg0: i32, %arg1: i32) -> (i32, i32, i32) {
    %c0_i32 = arith.constant 0 : i32
    %c0_i32_0 = arith.constant 0 : i32
    %c0_i32_1 = arith.constant 0 : i32
    return %arg1, %c0_i32, %c0_i32_0 : i32, i32, i32
  }
  func.func @transform_11(%arg0: i32, %arg1: i32) -> (i32, i32, i32) {
    %c0_i32 = arith.constant 0 : i32
    %c0_i32_0 = arith.constant 0 : i32
    %c0_i32_1 = arith.constant 0 : i32
    return %arg1, %c0_i32, %c0_i32_0 : i32, i32, i32
  }
  func.func @transform_12(%arg0: i32, %arg1: i32) -> (i32, i32) {
    %c0_i32 = arith.constant 0 : i32
    %c0_i32_0 = arith.constant 0 : i32
    return %arg0, %c0_i32 : i32, i32
  }
  func.func @transform_13(%arg0: i32, %arg1: i32) -> (i32, i32, i32, i32, i32) {
    %c0_i32 = arith.constant 0 : i32
    %c0_i32_0 = arith.constant 0 : i32
    %c0_i32_1 = arith.constant 0 : i32
    %c0_i32_2 = arith.constant 0 : i32
    return %arg1, %c0_i32, %arg0, %c0_i32_0, %c0_i32_1 : i32, i32, i32, i32, i32
  }
}

</mosaic_0001>

<llo_original>
// kernel: tpu_custom_call.1
$region0: #{tpu_custom_call.1}
  #allocation0 [shape = 'u32[]', space=smem, size = 0x4, offset = 0x4, fixed_abs, tag = 'smem constant byte address 0x4 - core index']
  #allocation1 [shape = 'u32[144,128]{1,0:T(1,128)}', space=vmem, size = 0x12000, scoped, tag = 'internal scratch']
  #allocation2 [shape = 'f32[16,32]{1,0:T(8,128)}', space=vmem, size = 0x2000, scoped, tag = 'scratch operand']
  %s0 = inlined_call_operand.hbm [shape: f32[2,8], index: 0, kind: input, shape index: {}]
  %s1 = inlined_call_operand.hbm [shape: f32[16,32], index: 1, kind: input, shape index: {}]
  %s2 = inlined_call_operand.vmem [shape: f32[2,32,32], index: 2, kind: input, shape index: {}]
  %s3 = inlined_call_operand.vmem [shape: f32[2,32,32], index: 3, kind: input, shape index: {}]
  %s4 = inlined_call_operand.vmem [shape: f32[2,32,32], index: 4, kind: input, shape index: {}]
  %s5 = inlined_call_operand.hbm [shape: f32[2,4,8,32], index: 5, kind: input, shape index: {}]
  %s6 = inlined_call_operand.vmem [shape: f32[2,1,32], index: 6, kind: input, shape index: {}]
  %s7 = inlined_call_operand.vmem [shape: f32[2,1,32], index: 7, kind: input, shape index: {}]
  %s8 = inlined_call_operand.hbm [shape: f32[2,32,64], index: 8, kind: input, shape index: {}]
  %s9 = inlined_call_operand.vmem [shape: f32[2,64,32], index: 9, kind: input, shape index: {}]
  %s10 = inlined_call_operand.vmem [shape: f32[2,1,32], index: 10, kind: input, shape index: {}]
  %s11 = inlined_call_operand.vmem [shape: f32[2,1,32], index: 11, kind: input, shape index: {}]
  %s12 = inlined_call_operand.hbm [shape: f32[16,32], index: 12, kind: output, shape index: {0}]
  %s13 = inlined_call_operand.hbm [shape: f32[2,4,2,8,8], index: 13, kind: output, shape index: {1}]
  %14 = xla_tuple %s12, %s13
  %s15 = sld [smem:[#allocation0]]
  $region113: #{tpu_custom_call.1} parent=0
    _
  %s17 = ssub.s32 1, %s15
  %s18 = scalar_select 0, %s17, %s15
  $region1: #{tpu_custom_call.1} parent=0
    #allocation3 [shape = 'u8[1024]{0}', space=vmem, size = 0x400, scoped, tag = 'input window, operand 0, single buffered']
    #allocation4 [shape = 's32[2]{0}', space=sflag, size = 0x8, scoped, tag = 'scoped memory for tpu_custom_call.1']
    #allocation5 [shape = 's32[2]{0}', space=sflag, size = 0x8, scoped, tag = 'scoped memory for tpu_custom_call.1']
    #allocation6 [shape = 'u8[8192]{0}', space=vmem, size = 0x2000, scoped, tag = 'input window, operand 1, single buffered']
    #allocation7 [shape = 's32[1]{0}', space=sflag, size = 0x4, scoped, tag = 'scoped memory for tpu_custom_call.1']
    #allocation8 [shape = 'u8[32768]{0}', space=vmem, size = 0x8000, scoped, tag = 'input window, operand 5']
    #allocation9 [shape = 'u8[32768]{0}', space=vmem, size = 0x8000, scoped, tag = 'input window, operand 8']
    #allocation10 [shape = 'u8[8192]{0}', space=vmem, size = 0x2000, scoped, tag = 'output window, operand 0, single buffered']
    #allocation11 [shape = 'u8[65536]{0}', space=vmem, size = 0x10000, scoped, tag = 'output window, operand 1']
    #allocation12 [shape = 's32[2]{0}', space=sflag, size = 0x8, scoped, tag = 'scoped memory for tpu_custom_call.1']
    %19 = vsyncpa [#allocation4], 0
    %20 = vsyncpa [#allocation7], 0
    %21 = vsyncpa [#allocation5], 0
    %22 = vsyncpa [#allocation12], 0
    %s23 = scalar_lea.sflag [#allocation12], 1
    %24 = vsyncpa %s23, 0
    loop: start=0, step=1, limit=4
    $region2: #{tpu_custom_call.1} parent=1 // loop_pre_header
      _
    $region3: #{tpu_custom_call.1} parent=1 // loop_header
      %s26 = sphi 0, %s30
      %p27 = scmp.ge.s32.totalorder %s26, 4
      %s33 = sphi 0, %s45
      %s34 = sphi 0, %s41
      %s35 = sphi 0, %s33
      %s36 = sphi 0, %s34
      %s37 = sphi 0, %s35
      %s38 = sphi 0, %s36
      %s48 = sphi 0, %s50
      %s51 = sphi 0, %s48
      %s52 = sphi 0, %s51
      %s68 = sphi 0, %s52
      %s74 = sphi 0, %s76
      %s77 = sphi 0, %s74
      %s78 = sphi 0, %s77
      %s94 = sphi 0, %s78
      %s100 = sphi 0, %s102
      %s103 = sphi 0, %s100
      %s104 = sphi 0, %s103
      %s120 = sphi 0, %s104
      %s126 = sphi 0, %s128
      %s129 = sphi 0, %s126
      %s130 = sphi 0, %s129
      %s146 = sphi 0, %s130
      %s152 = sphi 0, %s154
      %s155 = sphi 0, %s152
      %s156 = sphi 0, %s155
      %s172 = sphi 0, %s156
      %s178 = sphi 0, %s180
      %s181 = sphi 0, %s178
      %s182 = sphi 0, %s181
      %s198 = sphi 0, %s182
      %s204 = sphi 0, %s206
      %s207 = sphi 0, %s204
      %s208 = sphi 0, %s207
      %s224 = sphi 0, %s208
      %s230 = sphi 0, %s232
      %s233 = sphi 0, %s230
      %s234 = sphi 0, %s233
      %s250 = sphi 0, %s234
      %s256 = sphi 0, %s258
      %s259 = sphi 0, %s256
      %s260 = sphi 0, %s259
      %s276 = sphi 0, %s260
      %s282 = sphi 0, %s284
      %s285 = sphi 0, %s282
      %s286 = sphi 0, %s285
      %s302 = sphi 0, %s286
      %s308 = sphi 0, %s310
      %s311 = sphi 0, %s308
      %s312 = sphi 0, %s311
      %s328 = sphi 0, %s312
      %s334 = sphi 0, %s336
      %s337 = sphi 0, %s334
      %s338 = sphi 0, %s337
      %s354 = sphi 0, %s338
      %s360 = sphi 0, %s362
      %s363 = sphi 0, %s360
      %s364 = sphi 0, %s363
      %s380 = sphi 0, %s364
      %s388 = sphi 0, %s390
      %s391 = sphi 0, %s388
      %s392 = sphi 0, %s391
      %s408 = sphi 0, %s392
    $region4: #{tpu_custom_call.1} parent=1 // loop_header_branch
      %29 = sbr.rel (%p27) target = $region8
    $region5: #{tpu_custom_call.1} parent=1 // loop_body
      %s31 = ssub.s32 %s26, 1
      %s32 = ssub.s32 %s26, 2
      %s39 = sadd.s32 1, %s34
      %p40 = scmp.ge.s32.totalorder %s39, 2
      %s41 = scalar_select %p40, 0, %s39
      %s42 = sadd.s32 1, %s33
      %s43 = scalar_select %p40, %s42, %s33
      %p44 = scmp.ge.s32.totalorder %s43, 1
      %s45 = scalar_select %p44, 0, %s43
      %s46 = ssub.s32 %s33, %s45
      %p47 = scmp.eq.s32.totalorder %s46, 0
      %s49 = sadd.s32 %s48, 1
      %s50 = scalar_select %p47, %s48, %s49
      %p53 = pneg %p47
      %p54 = scmp.eq.s32.totalorder %s26, 1
      %p55 = por %p53, %p54
      %p56 = scmp.ne.s32.totalorder %s48, %s51
      %p57 = scmp.eq.s32.totalorder %s26, 0
      %p58 = por %p56, %p57
      %p59 = scmp.ne.s32.totalorder %s48, %s51
      %p60 = scmp.eq.s32.totalorder %s31, 1
      %p61 = por %p59, %p60
      %p62 = scmp.ne.s32.totalorder %s51, %s52
      %p63 = scmp.eq.s32.totalorder %s31, 0
      %p64 = por %p62, %p63
      %p65 = scmp.ne.s32.totalorder %s51, %s52
      %p66 = scmp.eq.s32.totalorder %s32, 1
      %p67 = por %p65, %p66
      %p69 = scmp.ne.s32.totalorder %s52, %s68
      %p70 = scmp.eq.s32.totalorder %s32, 0
      %p71 = por %p69, %p70
      %s72 = ssub.s32 %s33, %s45
      %p73 = scmp.eq.s32.totalorder %s72, 0
      %s75 = sadd.s32 %s74, 1
      %s76 = scalar_select %p73, %s74, %s75
      %p79 = pneg %p73
      %p80 = scmp.eq.s32.totalorder %s26, 1
      %p81 = por %p79, %p80
      %p82 = scmp.ne.s32.totalorder %s74, %s77
      %p83 = scmp.eq.s32.totalorder %s26, 0
      %p84 = por %p82, %p83
      %p85 = scmp.ne.s32.totalorder %s74, %s77
      %p86 = scmp.eq.s32.totalorder %s31, 1
      %p87 = por %p85, %p86
      %p88 = scmp.ne.s32.totalorder %s77, %s78
      %p89 = scmp.eq.s32.totalorder %s31, 0
      %p90 = por %p88, %p89
      %p91 = scmp.ne.s32.totalorder %s77, %s78
      %p92 = scmp.eq.s32.totalorder %s32, 1
      %p93 = por %p91, %p92
      %p95 = scmp.ne.s32.totalorder %s78, %s94
      %p96 = scmp.eq.s32.totalorder %s32, 0
      %p97 = por %p95, %p96
      %s98 = ssub.s32 %s34, %s41
      %p99 = scmp.eq.s32.totalorder %s98, 0
      %s101 = sadd.s32 %s100, 1
      %s102 = scalar_select %p99, %s100, %s101
      %p105 = pneg %p99
      %p106 = scmp.eq.s32.totalorder %s26, 1
      %p107 = por %p105, %p106
      %p108 = scmp.ne.s32.totalorder %s100, %s103
      %p109 = scmp.eq.s32.totalorder %s26, 0
      %p110 = por %p108, %p109
      %p111 = scmp.ne.s32.totalorder %s100, %s103
      %p112 = scmp.eq.s32.totalorder %s31, 1
      %p113 = por %p111, %p112
      %p114 = scmp.ne.s32.totalorder %s103, %s104
      %p115 = scmp.eq.s32.totalorder %s31, 0
      %p116 = por %p114, %p115
      %p117 = scmp.ne.s32.totalorder %s103, %s104
      %p118 = scmp.eq.s32.totalorder %s32, 1
      %p119 = por %p117, %p118
      %p121 = scmp.ne.s32.totalorder %s104, %s120
      %p122 = scmp.eq.s32.totalorder %s32, 0
      %p123 = por %p121, %p122
      %s124 = ssub.s32 %s34, %s41
      %p125 = scmp.eq.s32.totalorder %s124, 0
      %s127 = sadd.s32 %s126, 1
      %s128 = scalar_select %p125, %s126, %s127
      %p131 = pneg %p125
      %p132 = scmp.eq.s32.totalorder %s26, 1
      %p133 = por %p131, %p132
      %p134 = scmp.ne.s32.totalorder %s126, %s129
      %p135 = scmp.eq.s32.totalorder %s26, 0
      %p136 = por %p134, %p135
      %p137 = scmp.ne.s32.totalorder %s126, %s129
      %p138 = scmp.eq.s32.totalorder %s31, 1
      %p139 = por %p137, %p138
      %p140 = scmp.ne.s32.totalorder %s129, %s130
      %p141 = scmp.eq.s32.totalorder %s31, 0
      %p142 = por %p140, %p141
      %p143 = scmp.ne.s32.totalorder %s129, %s130
      %p144 = scmp.eq.s32.totalorder %s32, 1
      %p145 = por %p143, %p144
      %p147 = scmp.ne.s32.totalorder %s130, %s146
      %p148 = scmp.eq.s32.totalorder %s32, 0
      %p149 = por %p147, %p148
      %s150 = ssub.s32 %s34, %s41
      %p151 = scmp.eq.s32.totalorder %s150, 0
      %s153 = sadd.s32 %s152, 1
      %s154 = scalar_select %p151, %s152, %s153
      %p157 = pneg %p151
      %p158 = scmp.eq.s32.totalorder %s26, 1
      %p159 = por %p157, %p158
      %p160 = scmp.ne.s32.totalorder %s152, %s155
      %p161 = scmp.eq.s32.totalorder %s26, 0
      %p162 = por %p160, %p161
      %p163 = scmp.ne.s32.totalorder %s152, %s155
      %p164 = scmp.eq.s32.totalorder %s31, 1
      %p165 = por %p163, %p164
      %p166 = scmp.ne.s32.totalorder %s155, %s156
      %p167 = scmp.eq.s32.totalorder %s31, 0
      %p168 = por %p166, %p167
      %p169 = scmp.ne.s32.totalorder %s155, %s156
      %p170 = scmp.eq.s32.totalorder %s32, 1
      %p171 = por %p169, %p170
      %p173 = scmp.ne.s32.totalorder %s156, %s172
      %p174 = scmp.eq.s32.totalorder %s32, 0
      %p175 = por %p173, %p174
      %s176 = ssub.s32 %s34, %s41
      %p177 = scmp.eq.s32.totalorder %s176, 0
      %s179 = sadd.s32 %s178, 1
      %s180 = scalar_select %p177, %s178, %s179
      %p183 = pneg %p177
      %p184 = scmp.eq.s32.totalorder %s26, 1
      %p185 = por %p183, %p184
      %p186 = scmp.ne.s32.totalorder %s178, %s181
      %p187 = scmp.eq.s32.totalorder %s26, 0
      %p188 = por %p186, %p187
      %p189 = scmp.ne.s32.totalorder %s178, %s181
      %p190 = scmp.eq.s32.totalorder %s31, 1
      %p191 = por %p189, %p190
      %p192 = scmp.ne.s32.totalorder %s181, %s182
      %p193 = scmp.eq.s32.totalorder %s31, 0
      %p194 = por %p192, %p193
      %p195 = scmp.ne.s32.totalorder %s181, %s182
      %p196 = scmp.eq.s32.totalorder %s32, 1
      %p197 = por %p195, %p196
      %p199 = scmp.ne.s32.totalorder %s182, %s198
      %p200 = scmp.eq.s32.totalorder %s32, 0
      %p201 = por %p199, %p200
      %s202 = ssub.s32 %s34, %s41
      %p203 = scmp.eq.s32.totalorder %s202, 0
      %s205 = sadd.s32 %s204, 1
      %s206 = scalar_select %p203, %s204, %s205
      %p209 = pneg %p203
      %p210 = scmp.eq.s32.totalorder %s26, 1
      %p211 = por %p209, %p210
      %p212 = scmp.ne.s32.totalorder %s204, %s207
      %p213 = scmp.eq.s32.totalorder %s26, 0
      %p214 = por %p212, %p213
      %p215 = scmp.ne.s32.totalorder %s204, %s207
      %p216 = scmp.eq.s32.totalorder %s31, 1
      %p217 = por %p215, %p216
      %p218 = scmp.ne.s32.totalorder %s207, %s208
      %p219 = scmp.eq.s32.totalorder %s31, 0
      %p220 = por %p218, %p219
      %p221 = scmp.ne.s32.totalorder %s207, %s208
      %p222 = scmp.eq.s32.totalorder %s32, 1
      %p223 = por %p221, %p222
      %p225 = scmp.ne.s32.totalorder %s208, %s224
      %p226 = scmp.eq.s32.totalorder %s32, 0
      %p227 = por %p225, %p226
      %s228 = ssub.s32 %s34, %s41
      %p229 = scmp.eq.s32.totalorder %s228, 0
      %s231 = sadd.s32 %s230, 1
      %s232 = scalar_select %p229, %s230, %s231
      %p235 = pneg %p229
      %p236 = scmp.eq.s32.totalorder %s26, 1
      %p237 = por %p235, %p236
      %p238 = scmp.ne.s32.totalorder %s230, %s233
      %p239 = scmp.eq.s32.totalorder %s26, 0
      %p240 = por %p238, %p239
      %p241 = scmp.ne.s32.totalorder %s230, %s233
      %p242 = scmp.eq.s32.totalorder %s31, 1
      %p243 = por %p241, %p242
      %p244 = scmp.ne.s32.totalorder %s233, %s234
      %p245 = scmp.eq.s32.totalorder %s31, 0
      %p246 = por %p244, %p245
      %p247 = scmp.ne.s32.totalorder %s233, %s234
      %p248 = scmp.eq.s32.totalorder %s32, 1
      %p249 = por %p247, %p248
      %p251 = scmp.ne.s32.totalorder %s234, %s250
      %p252 = scmp.eq.s32.totalorder %s32, 0
      %p253 = por %p251, %p252
      %s254 = ssub.s32 %s34, %s41
      %p255 = scmp.eq.s32.totalorder %s254, 0
      %s257 = sadd.s32 %s256, 1
      %s258 = scalar_select %p255, %s256, %s257
      %p261 = pneg %p255
      %p262 = scmp.eq.s32.totalorder %s26, 1
      %p263 = por %p261, %p262
      %p264 = scmp.ne.s32.totalorder %s256, %s259
      %p265 = scmp.eq.s32.totalorder %s26, 0
      %p266 = por %p264, %p265
      %p267 = scmp.ne.s32.totalorder %s256, %s259
      %p268 = scmp.eq.s32.totalorder %s31, 1
      %p269 = por %p267, %p268
      %p270 = scmp.ne.s32.totalorder %s259, %s260
      %p271 = scmp.eq.s32.totalorder %s31, 0
      %p272 = por %p270, %p271
      %p273 = scmp.ne.s32.totalorder %s259, %s260
      %p274 = scmp.eq.s32.totalorder %s32, 1
      %p275 = por %p273, %p274
      %p277 = scmp.ne.s32.totalorder %s260, %s276
      %p278 = scmp.eq.s32.totalorder %s32, 0
      %p279 = por %p277, %p278
      %s280 = ssub.s32 %s34, %s41
      %p281 = scmp.eq.s32.totalorder %s280, 0
      %s283 = sadd.s32 %s282, 1
      %s284 = scalar_select %p281, %s282, %s283
      %p287 = pneg %p281
      %p288 = scmp.eq.s32.totalorder %s26, 1
      %p289 = por %p287, %p288
      %p290 = scmp.ne.s32.totalorder %s282, %s285
      %p291 = scmp.eq.s32.totalorder %s26, 0
      %p292 = por %p290, %p291
      %p293 = scmp.ne.s32.totalorder %s282, %s285
      %p294 = scmp.eq.s32.totalorder %s31, 1
      %p295 = por %p293, %p294
      %p296 = scmp.ne.s32.totalorder %s285, %s286
      %p297 = scmp.eq.s32.totalorder %s31, 0
      %p298 = por %p296, %p297
      %p299 = scmp.ne.s32.totalorder %s285, %s286
      %p300 = scmp.eq.s32.totalorder %s32, 1
      %p301 = por %p299, %p300
      %p303 = scmp.ne.s32.totalorder %s286, %s302
      %p304 = scmp.eq.s32.totalorder %s32, 0
      %p305 = por %p303, %p304
      %s306 = ssub.s32 %s34, %s41
      %p307 = scmp.eq.s32.totalorder %s306, 0
      %s309 = sadd.s32 %s308, 1
      %s310 = scalar_select %p307, %s308, %s309
      %p313 = pneg %p307
      %p314 = scmp.eq.s32.totalorder %s26, 1
      %p315 = por %p313, %p314
      %p316 = scmp.ne.s32.totalorder %s308, %s311
      %p317 = scmp.eq.s32.totalorder %s26, 0
      %p318 = por %p316, %p317
      %p319 = scmp.ne.s32.totalorder %s308, %s311
      %p320 = scmp.eq.s32.totalorder %s31, 1
      %p321 = por %p319, %p320
      %p322 = scmp.ne.s32.totalorder %s311, %s312
      %p323 = scmp.eq.s32.totalorder %s31, 0
      %p324 = por %p322, %p323
      %p325 = scmp.ne.s32.totalorder %s311, %s312
      %p326 = scmp.eq.s32.totalorder %s32, 1
      %p327 = por %p325, %p326
      %p329 = scmp.ne.s32.totalorder %s312, %s328
      %p330 = scmp.eq.s32.totalorder %s32, 0
      %p331 = por %p329, %p330
      %s332 = ssub.s32 %s34, %s41
      %p333 = scmp.eq.s32.totalorder %s332, 0
      %s335 = sadd.s32 %s334, 1
      %s336 = scalar_select %p333, %s334, %s335
      %p339 = pneg %p333
      %p340 = scmp.eq.s32.totalorder %s26, 1
      %p341 = por %p339, %p340
      %p342 = scmp.ne.s32.totalorder %s334, %s337
      %p343 = scmp.eq.s32.totalorder %s26, 0
      %p344 = por %p342, %p343
      %p345 = scmp.ne.s32.totalorder %s334, %s337
      %p346 = scmp.eq.s32.totalorder %s31, 1
      %p347 = por %p345, %p346
      %p348 = scmp.ne.s32.totalorder %s337, %s338
      %p349 = scmp.eq.s32.totalorder %s31, 0
      %p350 = por %p348, %p349
      %p351 = scmp.ne.s32.totalorder %s337, %s338
      %p352 = scmp.eq.s32.totalorder %s32, 1
      %p353 = por %p351, %p352
      %p355 = scmp.ne.s32.totalorder %s338, %s354
      %p356 = scmp.eq.s32.totalorder %s32, 0
      %p357 = por %p355, %p356
      %s358 = ssub.s32 %s33, %s45
      %p359 = scmp.eq.s32.totalorder %s358, 0
      %s361 = sadd.s32 %s360, 1
      %s362 = scalar_select %p359, %s360, %s361
      %p365 = pneg %p359
      %p366 = scmp.eq.s32.totalorder %s26, 1
      %p367 = por %p365, %p366
      %p368 = scmp.ne.s32.totalorder %s360, %s363
      %p369 = scmp.eq.s32.totalorder %s26, 0
      %p370 = por %p368, %p369
      %p371 = scmp.ne.s32.totalorder %s360, %s363
      %p372 = scmp.eq.s32.totalorder %s31, 1
      %p373 = por %p371, %p372
      %p374 = scmp.ne.s32.totalorder %s363, %s364
      %p375 = scmp.eq.s32.totalorder %s31, 0
      %p376 = por %p374, %p375
      %p377 = scmp.ne.s32.totalorder %s363, %s364
      %p378 = scmp.eq.s32.totalorder %s32, 1
      %p379 = por %p377, %p378
      %p381 = scmp.ne.s32.totalorder %s364, %s380
      %p382 = scmp.eq.s32.totalorder %s32, 0
      %p383 = por %p381, %p382
      %s384 = ssub.s32 %s34, %s41
      %s385 = ssub.s32 %s33, %s45
      %s386 = sor.u32 %s384, %s385
      %p387 = scmp.eq.s32.totalorder %s386, 0
      %s389 = sadd.s32 %s388, 1
      %s390 = scalar_select %p387, %s388, %s389
      %p393 = pneg %p387
      %p394 = scmp.eq.s32.totalorder %s26, 1
      %p395 = por %p393, %p394
      %p396 = scmp.ne.s32.totalorder %s388, %s391
      %p397 = scmp.eq.s32.totalorder %s26, 0
      %p398 = por %p396, %p397
      %p399 = scmp.ne.s32.totalorder %s388, %s391
      %p400 = scmp.eq.s32.totalorder %s31, 1
      %p401 = por %p399, %p400
      %p402 = scmp.ne.s32.totalorder %s391, %s392
      %p403 = scmp.eq.s32.totalorder %s31, 0
      %p404 = por %p402, %p403
      %p405 = scmp.ne.s32.totalorder %s391, %s392
      %p406 = scmp.eq.s32.totalorder %s32, 1
      %p407 = por %p405, %p406
      %p409 = scmp.ne.s32.totalorder %s392, %s408
      %p410 = scmp.eq.s32.totalorder %s32, 0
      %p411 = por %p409, %p410
      %p412 = scmp.le.s32.totalorder 1, %s26
      %p413 = scmp.lt.s32.totalorder %s26, 3
      %p414 = pnand %p412, %p413
      %p415 = pneg %p414
      // Predicated region
      $region9: #{tpu_custom_call.1} parent=5 // pred_check
        _
      $region10: #{tpu_custom_call.1} parent=5 // pred_check_branch
        %417 = sbr.rel (%p414) target = $region12
      $region11: #{tpu_custom_call.1} parent=5 // pred_region
        %s418 = ssub.s32 %s26, 1
        // Predicated region
        $region13: #{tpu_custom_call.1} parent=11 // pred_check
          %p419 = pneg %p64
        $region14: #{tpu_custom_call.1} parent=11 // pred_check_branch
          %421 = sbr.rel (%p419) target = $region16
        $region15: #{tpu_custom_call.1} parent=11 // pred_region
          %s423 = ssub.s32 32, 32
          %424 = vsyncadd [#allocation4], %s423
          %s425 = smul.addr %s35, 32
          %s426 = scalar_lea.hbm %s0, %s425
          %s428 = sshll.u32 [#allocation3], 4
          %s429 = int_to_ptr.vmem [resolvable:$true] %s428
          %431 = dma.hbm_to_vmem [thread:$0]  %s426, 32, %s429, [#allocation4]
        $region16: #{tpu_custom_call.1} parent=11 // pred_fallthru
          _
        // Predicated region
        $region17: #{tpu_custom_call.1} parent=11 // pred_check
          %p432 = pneg %p90
        $region18: #{tpu_custom_call.1} parent=11 // pred_check_branch
          %434 = sbr.rel (%p432) target = $region20
        $region19: #{tpu_custom_call.1} parent=11 // pred_region
          %s435 = smul.u32 2, %s35
          %s437 = ssub.s32 256, 256
          %438 = vsyncadd [#allocation7], %s437
          %s439 = smul.addr %s435, 128
          %s440 = scalar_lea.hbm %s1, %s439
          %s441 = sshll.u32 [#allocation6], 4
          %s442 = int_to_ptr.vmem [resolvable:$true] %s441
          %447 = dma.hbm_to_vmem [thread:$0]  %s440, 256, %s442, [#allocation7], 128, 128, 8
        $region20: #{tpu_custom_call.1} parent=11 // pred_fallthru
          _
      $region12: #{tpu_custom_call.1} parent=5 // pred_fallthru
        _
      %p448 = scmp.lt.s32.totalorder %s26, 2
      // Predicated region
      $region21: #{tpu_custom_call.1} parent=5 // pred_check
        %p449 = pneg %p448
      $region22: #{tpu_custom_call.1} parent=5 // pred_check_branch
        %451 = sbr.rel (%p449) target = $region24
      $region23: #{tpu_custom_call.1} parent=5 // pred_region
        // Predicated region
        $region25: #{tpu_custom_call.1} parent=23 // pred_check
          %p452 = pneg %p110
        $region26: #{tpu_custom_call.1} parent=23 // pred_check_branch
          %454 = sbr.rel (%p452) target = $region28
        $region27: #{tpu_custom_call.1} parent=23 // pred_region
          %p455 = scmp.lt.s32.totalorder %s34, 1
          %s456 = scalar_select %p455, %s34, 1
          %s457 = smul.addr %s456, 4
          %s458 = smul.addr %s457, 8
          %s459 = scalar_lea.vmem %s2, %s458
        $region28: #{tpu_custom_call.1} parent=23 // pred_fallthru
          _
        // Predicated region
        $region29: #{tpu_custom_call.1} parent=23 // pred_check
          %p460 = pneg %p136
        $region30: #{tpu_custom_call.1} parent=23 // pred_check_branch
          %462 = sbr.rel (%p460) target = $region32
        $region31: #{tpu_custom_call.1} parent=23 // pred_region
          %p463 = scmp.lt.s32.totalorder %s34, 1
          %s464 = scalar_select %p463, %s34, 1
          %s465 = smul.addr %s464, 4
          %s466 = smul.addr %s465, 8
          %s467 = scalar_lea.vmem %s3, %s466
        $region32: #{tpu_custom_call.1} parent=23 // pred_fallthru
          _
        // Predicated region
        $region33: #{tpu_custom_call.1} parent=23 // pred_check
          %p468 = pneg %p162
        $region34: #{tpu_custom_call.1} parent=23 // pred_check_branch
          %470 = sbr.rel (%p468) target = $region36
        $region35: #{tpu_custom_call.1} parent=23 // pred_region
          %p471 = scmp.lt.s32.totalorder %s34, 1
          %s472 = scalar_select %p471, %s34, 1
          %s473 = smul.addr %s472, 4
          %s474 = smul.addr %s473, 8
          %s475 = scalar_lea.vmem %s4, %s474
        $region36: #{tpu_custom_call.1} parent=23 // pred_fallthru
          _
        // Predicated region
        $region37: #{tpu_custom_call.1} parent=23 // pred_check
          %p476 = pneg %p188
        $region38: #{tpu_custom_call.1} parent=23 // pred_check_branch
          %478 = sbr.rel (%p476) target = $region40
        $region39: #{tpu_custom_call.1} parent=23 // pred_region
          %s479 = sand.u32 %s26, 1
          %s480 = scalar_lea.sflag [#allocation4], %s479
          %s481 = sand.u32 %s178, 1
          %s482 = smul.addr %s481, 32
          %s483 = scalar_lea.vmem [#allocation8], %s482
          %s485 = ssub.s32 512, 512
          %486 = vsyncadd %s480, %s485
          %s487 = smul.addr %s34, 4
          %s488 = smul.addr %s487, 128
          %s489 = scalar_lea.hbm %s5, %s488
          %s490 = sshll.u32 %s483, 4
          %s491 = int_to_ptr.vmem [resolvable:$true] %s490
          %496 = dma.hbm_to_vmem [thread:$0]  %s489, 512, %s491, %s480, 128, 128, 8
        $region40: #{tpu_custom_call.1} parent=23 // pred_fallthru
          _
        // Predicated region
        $region41: #{tpu_custom_call.1} parent=23 // pred_check
          %p497 = pneg %p214
        $region42: #{tpu_custom_call.1} parent=23 // pred_check_branch
          %499 = sbr.rel (%p497) target = $region44
        $region43: #{tpu_custom_call.1} parent=23 // pred_region
          %p500 = scmp.lt.s32.totalorder %s34, 1
          %s501 = scalar_select %p500, %s34, 1
          %s502 = scalar_lea.vmem %s6, %s501
        $region44: #{tpu_custom_call.1} parent=23 // pred_fallthru
          _
        // Predicated region
        $region45: #{tpu_custom_call.1} parent=23 // pred_check
          %p503 = pneg %p240
        $region46: #{tpu_custom_call.1} parent=23 // pred_check_branch
          %505 = sbr.rel (%p503) target = $region48
        $region47: #{tpu_custom_call.1} parent=23 // pred_region
          %p506 = scmp.lt.s32.totalorder %s34, 1
          %s507 = scalar_select %p506, %s34, 1
          %s508 = scalar_lea.vmem %s7, %s507
        $region48: #{tpu_custom_call.1} parent=23 // pred_fallthru
          _
        // Predicated region
        $region49: #{tpu_custom_call.1} parent=23 // pred_check
          %p509 = pneg %p266
        $region50: #{tpu_custom_call.1} parent=23 // pred_check_branch
          %511 = sbr.rel (%p509) target = $region52
        $region51: #{tpu_custom_call.1} parent=23 // pred_region
          %s512 = sand.u32 %s26, 1
          %s513 = scalar_lea.sflag [#allocation4], %s512
          %s514 = sand.u32 %s256, 1
          %s515 = smul.addr %s514, 32
          %s516 = scalar_lea.vmem [#allocation9], %s515
          %s518 = ssub.s32 512, 512
          %519 = vsyncadd %s513, %s518
          %s520 = smul.addr %s34, 4
          %s521 = smul.addr %s520, 128
          %s522 = scalar_lea.hbm %s8, %s521
          %s523 = sshll.u32 %s516, 4
          %s524 = int_to_ptr.vmem [resolvable:$true] %s523
          %529 = dma.hbm_to_vmem [thread:$0]  %s522, 512, %s524, %s513, 128, 128, 8
        $region52: #{tpu_custom_call.1} parent=23 // pred_fallthru
          _
        // Predicated region
        $region53: #{tpu_custom_call.1} parent=23 // pred_check
          %p530 = pneg %p292
        $region54: #{tpu_custom_call.1} parent=23 // pred_check_branch
          %532 = sbr.rel (%p530) target = $region56
        $region55: #{tpu_custom_call.1} parent=23 // pred_region
          %p533 = scmp.lt.s32.totalorder %s34, 1
          %s534 = scalar_select %p533, %s34, 1
          %s535 = smul.addr %s534, 8
          %s536 = smul.addr %s535, 8
          %s537 = scalar_lea.vmem %s9, %s536
        $region56: #{tpu_custom_call.1} parent=23 // pred_fallthru
          _
        // Predicated region
        $region57: #{tpu_custom_call.1} parent=23 // pred_check
          %p538 = pneg %p318
        $region58: #{tpu_custom_call.1} parent=23 // pred_check_branch
          %540 = sbr.rel (%p538) target = $region60
        $region59: #{tpu_custom_call.1} parent=23 // pred_region
          %p541 = scmp.lt.s32.totalorder %s34, 1
          %s542 = scalar_select %p541, %s34, 1
          %s543 = scalar_lea.vmem %s10, %s542
        $region60: #{tpu_custom_call.1} parent=23 // pred_fallthru
          _
        // Predicated region
        $region61: #{tpu_custom_call.1} parent=23 // pred_check
          %p544 = pneg %p344
        $region62: #{tpu_custom_call.1} parent=23 // pred_check_branch
          %546 = sbr.rel (%p544) target = $region64
        $region63: #{tpu_custom_call.1} parent=23 // pred_region
          %p547 = scmp.lt.s32.totalorder %s34, 1
          %s548 = scalar_select %p547, %s34, 1
          %s549 = scalar_lea.vmem %s11, %s548
        $region64: #{tpu_custom_call.1} parent=23 // pred_fallthru
          _
      $region24: #{tpu_custom_call.1} parent=5 // pred_fallthru
        _
      %p550 = scmp.le.s32.totalorder 1, %s26
      %p551 = scmp.lt.s32.totalorder %s26, 3
      %p552 = pnand %p550, %p551
      %p553 = pneg %p552
      // Predicated region
      $region65: #{tpu_custom_call.1} parent=5 // pred_check
        _
      $region66: #{tpu_custom_call.1} parent=5 // pred_check_branch
        %555 = sbr.rel (%p552) target = $region68
      $region67: #{tpu_custom_call.1} parent=5 // pred_region
        %s556 = ssub.s32 %s26, 1
        // Predicated region
        $region69: #{tpu_custom_call.1} parent=67 // pred_check
          %p557 = pneg %p64
        $region70: #{tpu_custom_call.1} parent=67 // pred_check_branch
          %559 = sbr.rel (%p557) target = $region72
        $region71: #{tpu_custom_call.1} parent=67 // pred_region
          %560 = dma.done [#allocation4], 32
        $region72: #{tpu_custom_call.1} parent=67 // pred_fallthru
          _
        // Predicated region
        $region73: #{tpu_custom_call.1} parent=67 // pred_check
          %p561 = pneg %p90
        $region74: #{tpu_custom_call.1} parent=67 // pred_check_branch
          %563 = sbr.rel (%p561) target = $region76
        $region75: #{tpu_custom_call.1} parent=67 // pred_region
          %564 = dma.done [#allocation7], 256
        $region76: #{tpu_custom_call.1} parent=67 // pred_fallthru
          _
        %s565 = sand.u32 %s31, 1
        %s566 = scalar_lea.sflag [#allocation4], %s565
        %s567 = sand.u32 %s181, 1
        %s568 = smul.addr %s567, 32
        %s569 = scalar_lea.vmem [#allocation8], %s568
        // Predicated region
        $region77: #{tpu_custom_call.1} parent=67 // pred_check
          %p570 = pneg %p194
        $region78: #{tpu_custom_call.1} parent=67 // pred_check_branch
          %572 = sbr.rel (%p570) target = $region80
        $region79: #{tpu_custom_call.1} parent=67 // pred_region
          %573 = dma.done %s566, 512
        $region80: #{tpu_custom_call.1} parent=67 // pred_fallthru
          _
        %s574 = sand.u32 %s31, 1
        %s575 = scalar_lea.sflag [#allocation4], %s574
        %s576 = sand.u32 %s259, 1
        %s577 = smul.addr %s576, 32
        %s578 = scalar_lea.vmem [#allocation9], %s577
        // Predicated region
        $region81: #{tpu_custom_call.1} parent=67 // pred_check
          %p579 = pneg %p272
        $region82: #{tpu_custom_call.1} parent=67 // pred_check_branch
          %581 = sbr.rel (%p579) target = $region84
        $region83: #{tpu_custom_call.1} parent=67 // pred_region
          %582 = dma.done %s575, 512
        $region84: #{tpu_custom_call.1} parent=67 // pred_fallthru
          _
        %p583 = pneg %p64
        %p584 = pneg %p61
        %p585 = pneg %p90
        %p586 = pneg %p87
        %p587 = scmp.lt.s32.totalorder %s36, 1
        %s588 = scalar_select %p587, %s36, 1
        %s589 = smul.addr %s588, 4
        %s590 = smul.addr %s589, 8
        %s591 = scalar_lea.vmem %s2, %s590
        %p592 = pneg %p116
        %p593 = pneg %p113
        %p594 = scmp.lt.s32.totalorder %s36, 1
        %s595 = scalar_select %p594, %s36, 1
        %s596 = smul.addr %s595, 4
        %s597 = smul.addr %s596, 8
        %s598 = scalar_lea.vmem %s3, %s597
        %p599 = pneg %p142
        %p600 = pneg %p139
        %p601 = scmp.lt.s32.totalorder %s36, 1
        %s602 = scalar_select %p601, %s36, 1
        %s603 = smul.addr %s602, 4
        %s604 = smul.addr %s603, 8
        %s605 = scalar_lea.vmem %s4, %s604
        %p606 = pneg %p168
        %p607 = pneg %p165
        %s608 = sand.u32 %s31, 1
        %s609 = scalar_lea.sflag [#allocation4], %s608
        %s610 = sand.u32 %s181, 1
        %s611 = smul.addr %s610, 32
        %s612 = scalar_lea.vmem [#allocation8], %s611
        %p613 = pneg %p194
        %p614 = pneg %p191
        %p615 = scmp.lt.s32.totalorder %s36, 1
        %s616 = scalar_select %p615, %s36, 1
        %s617 = scalar_lea.vmem %s6, %s616
        %p618 = pneg %p220
        %p619 = pneg %p217
        %p620 = scmp.lt.s32.totalorder %s36, 1
        %s621 = scalar_select %p620, %s36, 1
        %s622 = scalar_lea.vmem %s7, %s621
        %p623 = pneg %p246
        %p624 = pneg %p243
        %s625 = sand.u32 %s31, 1
        %s626 = scalar_lea.sflag [#allocation4], %s625
        %s627 = sand.u32 %s259, 1
        %s628 = smul.addr %s627, 32
        %s629 = scalar_lea.vmem [#allocation9], %s628
        %p630 = pneg %p272
        %p631 = pneg %p269
        %p632 = scmp.lt.s32.totalorder %s36, 1
        %s633 = scalar_select %p632, %s36, 1
        %s634 = smul.addr %s633, 8
        %s635 = smul.addr %s634, 8
        %s636 = scalar_lea.vmem %s9, %s635
        %p637 = pneg %p298
        %p638 = pneg %p295
        %p639 = scmp.lt.s32.totalorder %s36, 1
        %s640 = scalar_select %p639, %s36, 1
        %s641 = scalar_lea.vmem %s10, %s640
        %p642 = pneg %p324
        %p643 = pneg %p321
        %p644 = scmp.lt.s32.totalorder %s36, 1
        %s645 = scalar_select %p644, %s36, 1
        %s646 = scalar_lea.vmem %s11, %s645
        %p647 = pneg %p350
        %p648 = pneg %p347
        %p649 = pneg %p376
        %p650 = pneg %p373
        %p651 = pneg %p404
        %p652 = pneg %p401
        %s653 = sand.u32 %s391, 1
        %s654 = scalar_lea.sflag [#allocation12], %s653
        %s655 = sand.u32 %s391, 1
        %s656 = smul.addr %s655, 64
        %s657 = scalar_lea.vmem [#allocation11], %s656
        %s658 = smul.u32 2, %s35
        %p659 = scmp.lt.s32.totalorder %s36, 1
        %s660 = scalar_select %p659, %s36, 1
        %s661 = smul.addr %s660, 4
        %s662 = smul.addr %s661, 8
        %s663 = scalar_lea.vmem %s2, %s662
        %p664 = scmp.lt.s32.totalorder %s36, 1
        %s665 = scalar_select %p664, %s36, 1
        %s666 = smul.addr %s665, 4
        %s667 = smul.addr %s666, 8
        %s668 = scalar_lea.vmem %s3, %s667
        %p669 = scmp.lt.s32.totalorder %s36, 1
        %s670 = scalar_select %p669, %s36, 1
        %s671 = smul.addr %s670, 4
        %s672 = smul.addr %s671, 8
        %s673 = scalar_lea.vmem %s4, %s672
        %p674 = scmp.lt.s32.totalorder %s36, 1
        %s675 = scalar_select %p674, %s36, 1
        %s676 = scalar_lea.vmem %s6, %s675
        %p677 = scmp.lt.s32.totalorder %s36, 1
        %s678 = scalar_select %p677, %s36, 1
        %s679 = scalar_lea.vmem %s7, %s678
        %p680 = scmp.lt.s32.totalorder %s36, 1
        %s681 = scalar_select %p680, %s36, 1
        %s682 = smul.addr %s681, 8
        %s683 = smul.addr %s682, 8
        %s684 = scalar_lea.vmem %s9, %s683
        %p685 = scmp.lt.s32.totalorder %s36, 1
        %s686 = scalar_select %p685, %s36, 1
        %s687 = scalar_lea.vmem %s10, %s686
        %p688 = scmp.lt.s32.totalorder %s36, 1
        %s689 = scalar_select %p688, %s36, 1
        %s690 = scalar_lea.vmem %s11, %s689
        %s691 = smul.u32 2, %s35
        %s692 = smul.u32 2, %s35
        %p693 = scmp.eq.s32.totalorder %s36, 0
        // Predicated region
        $region85: #{tpu_custom_call.1} parent=67 // pred_check
          %p694 = pneg %p693
        $region86: #{tpu_custom_call.1} parent=67 // pred_check_branch
          %696 = sbr.rel (%p694) target = $region88
        $region87: #{tpu_custom_call.1} parent=67 // pred_region
          %v697 = vld [vmem:[#allocation6] sm:$0xff]
          %v698 = vld [vmem:[#allocation6 + $0x8] sm:$0xff]
          %vm699 = vcmask 261120
          %700 = vst.msk [vmem:[#allocation2] sm:$0xff] %vm699, %v697
          %701 = vst.msk [vmem:[#allocation2 + $0x8] sm:$0xff] %vm699, %v698
        $region88: #{tpu_custom_call.1} parent=67 // pred_fallthru
          _
        %v702 = vld [vmem:[#allocation2] sm:$0xff]
        %v703 = vld [vmem:[#allocation2 + $0x8] sm:$0xff]
        %v704 = vld [vmem:[%s663] sm:$0xff]
        %v705 = vld [vmem:[%s663 + $0x8] sm:$0xff]
        %v706 = vld [vmem:[%s663 + $0x10] sm:$0xff]
        %v707 = vld [vmem:[%s663 + $0x18] sm:$0xff]
        %vm708 = vcmask 261120
        %v710 = vsel %vm708, %v702, 0
        %v713 = vsel %vm708, %v703, 0
        %715 = vmatprep.subr.mxu0 0.0
        %716 = vmatpush1.msra.mxu0 %v704
        %717 = vmatprep.subr.mxu0 0.0
        %718 = vmatpush1.msra.mxu0 %v705
        %719 = vmatprep.subr.mxu0 0.0
        %720 = vmatpush1.msra.mxu0 %v706
        %721 = vmatprep.subr.mxu0 0.0
        %722 = vmatpush1.msra.mxu0 %v707
        %723 = vmatprep.subr.mxu0 0.0
        %724 = vmatpush1.msra.mxu0 0.0
        %725 = vmatprep.subr.mxu0 0.0
        %726 = vmatpush1.msra.mxu0 0.0
        %727 = vmatprep.subr.mxu0 0.0
        %728 = vmatpush1.msra.mxu0 0.0
        %729 = vmatprep.subr.mxu0 0.0
        %730 = vmatpush1.msra.mxu0 0.0
        %731 = vmatprep.subr.mxu0 0.0
        %732 = vmatpush1.msra.mxu0 0.0
        %733 = vmatprep.subr.mxu0 0.0
        %734 = vmatpush1.msra.mxu0 0.0
        %735 = vmatprep.subr.mxu0 0.0
        %736 = vmatpush1.msra.mxu0 0.0
        %737 = vmatprep.subr.mxu0 0.0
        %738 = vmatpush1.msra.mxu0 0.0
        %739 = vmatprep.subr.mxu0 0.0
        %740 = vmatpush1.msra.mxu0 0.0
        %741 = vmatprep.subr.mxu0 0.0
        %742 = vmatpush1.msra.mxu0 0.0
        %743 = vmatprep.subr.mxu0 0.0
        %744 = vmatpush1.msra.mxu0 0.0
        %745 = vmatprep.subr.mxu0 0.0
        %746 = vmatpush1.msra.mxu0 0.0
        %747 = vmatprep.subr.mxu0 0.0
        %748 = vmatpush1.msra.mxu0 0.0
        %749 = vmatprep.subr.mxu0 0.0
        %750 = vmatpush1.msra.mxu0 0.0
        %751 = vmatprep.subr.mxu0 0.0
        %752 = vmatpush1.msra.mxu0 0.0
        %753 = vmatprep.subr.mxu0 0.0
        %754 = vmatpush1.msra.mxu0 0.0
        %755 = vmatprep.subr.mxu0 0.0
        %756 = vmatpush1.msra.mxu0 0.0
        %757 = vmatprep.subr.mxu0 0.0
        %758 = vmatpush1.msra.mxu0 0.0
        %759 = vmatprep.subr.mxu0 0.0
        %760 = vmatpush1.msra.mxu0 0.0
        %761 = vmatprep.subr.mxu0 0.0
        %762 = vmatpush1.msra.mxu0 0.0
        %763 = vmatprep.subr.mxu0 0.0
        %764 = vmatpush1.msra.mxu0 0.0
        %765 = vmatprep.subr.mxu0 0.0
        %766 = vmatpush1.msra.mxu0 0.0
        %767 = vmatprep.subr.mxu0 0.0
        %768 = vmatpush1.msra.mxu0 0.0
        %769 = vmatprep.subr.mxu0 0.0
        %770 = vmatpush1.msra.mxu0 0.0
        %771 = vmatprep.subr.mxu0 0.0
        %772 = vmatpush1.msra.mxu0 0.0
        %773 = vmatprep.subr.mxu0 0.0
        %774 = vmatpush1.msra.mxu0 0.0
        %775 = vmatprep.subr.mxu0 0.0
        %776 = vmatpush1.msra.mxu0 0.0
        %777 = vmatprep.subr.mxu0 0.0
        %778 = vmatpush1.msra.mxu0 0.0
        %779 = vmatprep.mubr.f32.mxu0 0.0
        %780 = vmatmul.mubr.f32.gmra.mrb[0].mxu0 %v710
        %v781 = vpop.f32.mrb[0].mxu0
        %v782 = vadd.f32 0.0, %v781
        %v783 = vpop.f32.mrb[0].mxu0
        %784 = vmatprep.mubr.f32.mxu0 0.0
        %785 = vmatmul.mubr.f32.gmra.mrb[0].mxu0 %v713
        %v786 = vpop.f32.mrb[0].mxu0
        %v787 = vadd.f32 0.0, %v786
        %v788 = vpop.f32.mrb[0].mxu0
        %789 = vdwg.mxu0
        %v790 = vld [vmem:[%s668] sm:$0xff]
        %v791 = vld [vmem:[%s668 + $0x8] sm:$0xff]
        %v792 = vld [vmem:[%s668 + $0x10] sm:$0xff]
        %v793 = vld [vmem:[%s668 + $0x18] sm:$0xff]
        %794 = vmatprep.subr.mxu0 0.0
        %795 = vmatpush1.msra.mxu0 %v790
        %796 = vmatprep.subr.mxu0 0.0
        %797 = vmatpush1.msra.mxu0 %v791
        %798 = vmatprep.subr.mxu0 0.0
        %799 = vmatpush1.msra.mxu0 %v792
        %800 = vmatprep.subr.mxu0 0.0
        %801 = vmatpush1.msra.mxu0 %v793
        %802 = vmatprep.subr.mxu0 0.0
        %803 = vmatpush1.msra.mxu0 0.0
        %804 = vmatprep.subr.mxu0 0.0
        %805 = vmatpush1.msra.mxu0 0.0
        %806 = vmatprep.subr.mxu0 0.0
        %807 = vmatpush1.msra.mxu0 0.0
        %808 = vmatprep.subr.mxu0 0.0
        %809 = vmatpush1.msra.mxu0 0.0
        %810 = vmatprep.subr.mxu0 0.0
        %811 = vmatpush1.msra.mxu0 0.0
        %812 = vmatprep.subr.mxu0 0.0
        %813 = vmatpush1.msra.mxu0 0.0
        %814 = vmatprep.subr.mxu0 0.0
        %815 = vmatpush1.msra.mxu0 0.0
        %816 = vmatprep.subr.mxu0 0.0
        %817 = vmatpush1.msra.mxu0 0.0
        %818 = vmatprep.subr.mxu0 0.0
        %819 = vmatpush1.msra.mxu0 0.0
        %820 = vmatprep.subr.mxu0 0.0
        %821 = vmatpush1.msra.mxu0 0.0
        %822 = vmatprep.subr.mxu0 0.0
        %823 = vmatpush1.msra.mxu0 0.0
        %824 = vmatprep.subr.mxu0 0.0
        %825 = vmatpush1.msra.mxu0 0.0
        %826 = vmatprep.subr.mxu0 0.0
        %827 = vmatpush1.msra.mxu0 0.0
        %828 = vmatprep.subr.mxu0 0.0
        %829 = vmatpush1.msra.mxu0 0.0
        %830 = vmatprep.subr.mxu0 0.0
        %831 = vmatpush1.msra.mxu0 0.0
        %832 = vmatprep.subr.mxu0 0.0
        %833 = vmatpush1.msra.mxu0 0.0
        %834 = vmatprep.subr.mxu0 0.0
        %835 = vmatpush1.msra.mxu0 0.0
        %836 = vmatprep.subr.mxu0 0.0
        %837 = vmatpush1.msra.mxu0 0.0
        %838 = vmatprep.subr.mxu0 0.0
        %839 = vmatpush1.msra.mxu0 0.0
        %840 = vmatprep.subr.mxu0 0.0
        %841 = vmatpush1.msra.mxu0 0.0
        %842 = vmatprep.subr.mxu0 0.0
        %843 = vmatpush1.msra.mxu0 0.0
        %844 = vmatprep.subr.mxu0 0.0
        %845 = vmatpush1.msra.mxu0 0.0
        %846 = vmatprep.subr.mxu0 0.0
        %847 = vmatpush1.msra.mxu0 0.0
        %848 = vmatprep.subr.mxu0 0.0
        %849 = vmatpush1.msra.mxu0 0.0
        %850 = vmatprep.subr.mxu0 0.0
        %851 = vmatpush1.msra.mxu0 0.0
        %852 = vmatprep.subr.mxu0 0.0
        %853 = vmatpush1.msra.mxu0 0.0
        %854 = vmatprep.subr.mxu0 0.0
        %855 = vmatpush1.msra.mxu0 0.0
        %856 = vmatprep.subr.mxu0 0.0
        %857 = vmatpush1.msra.mxu0 0.0
        %858 = vmatprep.mubr.f32.mxu0 0.0
        %859 = vmatmul.mubr.f32.gmra.mrb[0].mxu0 %v710
        %v860 = vpop.f32.mrb[0].mxu0
        %v861 = vadd.f32 0.0, %v860
        %v862 = vpop.f32.mrb[0].mxu0
        %863 = vmatprep.mubr.f32.mxu0 0.0
        %864 = vmatmul.mubr.f32.gmra.mrb[0].mxu0 %v713
        %v865 = vpop.f32.mrb[0].mxu0
        %v866 = vadd.f32 0.0, %v865
        %v867 = vpop.f32.mrb[0].mxu0
        %868 = vdwg.mxu0
        %v869 = vld [vmem:[%s673] sm:$0xff]
        %v870 = vld [vmem:[%s673 + $0x8] sm:$0xff]
        %v871 = vld [vmem:[%s673 + $0x10] sm:$0xff]
        %v872 = vld [vmem:[%s673 + $0x18] sm:$0xff]
        %873 = vmatprep.subr.mxu0 0.0
        %874 = vmatpush1.msra.mxu0 %v869
        %875 = vmatprep.subr.mxu0 0.0
        %876 = vmatpush1.msra.mxu0 %v870
        %877 = vmatprep.subr.mxu0 0.0
        %878 = vmatpush1.msra.mxu0 %v871
        %879 = vmatprep.subr.mxu0 0.0
        %880 = vmatpush1.msra.mxu0 %v872
        %881 = vmatprep.subr.mxu0 0.0
        %882 = vmatpush1.msra.mxu0 0.0
        %883 = vmatprep.subr.mxu0 0.0
        %884 = vmatpush1.msra.mxu0 0.0
        %885 = vmatprep.subr.mxu0 0.0
        %886 = vmatpush1.msra.mxu0 0.0
        %887 = vmatprep.subr.mxu0 0.0
        %888 = vmatpush1.msra.mxu0 0.0
        %889 = vmatprep.subr.mxu0 0.0
        %890 = vmatpush1.msra.mxu0 0.0
        %891 = vmatprep.subr.mxu0 0.0
        %892 = vmatpush1.msra.mxu0 0.0
        %893 = vmatprep.subr.mxu0 0.0
        %894 = vmatpush1.msra.mxu0 0.0
        %895 = vmatprep.subr.mxu0 0.0
        %896 = vmatpush1.msra.mxu0 0.0
        %897 = vmatprep.subr.mxu0 0.0
        %898 = vmatpush1.msra.mxu0 0.0
        %899 = vmatprep.subr.mxu0 0.0
        %900 = vmatpush1.msra.mxu0 0.0
        %901 = vmatprep.subr.mxu0 0.0
        %902 = vmatpush1.msra.mxu0 0.0
        %903 = vmatprep.subr.mxu0 0.0
        %904 = vmatpush1.msra.mxu0 0.0
        %905 = vmatprep.subr.mxu0 0.0
        %906 = vmatpush1.msra.mxu0 0.0
        %907 = vmatprep.subr.mxu0 0.0
        %908 = vmatpush1.msra.mxu0 0.0
        %909 = vmatprep.subr.mxu0 0.0
        %910 = vmatpush1.msra.mxu0 0.0
        %911 = vmatprep.subr.mxu0 0.0
        %912 = vmatpush1.msra.mxu0 0.0
        %913 = vmatprep.subr.mxu0 0.0
        %914 = vmatpush1.msra.mxu0 0.0
        %915 = vmatprep.subr.mxu0 0.0
        %916 = vmatpush1.msra.mxu0 0.0
        %917 = vmatprep.subr.mxu0 0.0
        %918 = vmatpush1.msra.mxu0 0.0
        %919 = vmatprep.subr.mxu0 0.0
        %920 = vmatpush1.msra.mxu0 0.0
        %921 = vmatprep.subr.mxu0 0.0
        %922 = vmatpush1.msra.mxu0 0.0
        %923 = vmatprep.subr.mxu0 0.0
        %924 = vmatpush1.msra.mxu0 0.0
        %925 = vmatprep.subr.mxu0 0.0
        %926 = vmatpush1.msra.mxu0 0.0
        %927 = vmatprep.subr.mxu0 0.0
        %928 = vmatpush1.msra.mxu0 0.0
        %929 = vmatprep.subr.mxu0 0.0
        %930 = vmatpush1.msra.mxu0 0.0
        %931 = vmatprep.subr.mxu0 0.0
        %932 = vmatpush1.msra.mxu0 0.0
        %933 = vmatprep.subr.mxu0 0.0
        %934 = vmatpush1.msra.mxu0 0.0
        %935 = vmatprep.subr.mxu0 0.0
        %936 = vmatpush1.msra.mxu0 0.0
        %937 = vmatprep.mubr.f32.mxu0 0.0
        %938 = vmatmul.mubr.f32.gmra.mrb[0].mxu0 %v710
        %v939 = vpop.f32.mrb[0].mxu0
        %v940 = vadd.f32 0.0, %v939
        %v941 = vpop.f32.mrb[0].mxu0
        %942 = vmatprep.mubr.f32.mxu0 0.0
        %943 = vmatmul.mubr.f32.gmra.mrb[0].mxu0 %v713
        %v944 = vpop.f32.mrb[0].mxu0
        %v945 = vadd.f32 0.0, %v944
        %v946 = vpop.f32.mrb[0].mxu0
        %947 = vdwg.mxu0
        %v948 = vld [vmem:[#allocation3] sm:$0x3]
        %v951 = vunpack.c.l.s4 1966171168
        %v952 = vunpack.c.0.s8 %v951
        %v953 = vlaneseq
        %v954 = vshrl.u32 %v953, 7
        %v955 = vsub.s32 %v952, %v954
        %v956 = vrot.slane %v948, %v955
        %v957 = vcombine.high %v956, %v956
        %v959 = vunpack.c.l.s4 1966171168
        %v960 = vunpack.c.0.s8 %v959
        %v961 = vlaneseq
        %v962 = vshrl.u32 %v961, 7
        %v963 = vsub.s32 %v960, %v962
        %v964 = vrot.slane %v956, %v963
        %v966 = vunpack.c.l.s4 1966171168
        %v967 = vunpack.c.0.s8 %v966
        %v968 = vlaneseq
        %v969 = vshrl.u32 %v968, 7
        %v970 = vsub.s32 %v967, %v969
        %v971 = vrot.slane %v957, %v970
        %vm974 = vcmask 64512
        %v976 = vsel %vm974, %v782, 0
        %v979 = vsel %vm974, %v861, 0
        %981 = vmatprep.subr.mxu0 0.0
        %982 = vmatpush1.xpose.msra.mxu0 %v979
        %983 = vmatprep.subr.mxu0 0.0
        %984 = vmatpush1.xpose.msra.mxu0 0.0
        %985 = vmatprep.subr.mxu0 0.0
        %986 = vmatpush1.xpose.msra.mxu0 0.0
        %987 = vmatprep.subr.mxu0 0.0
        %988 = vmatpush1.xpose.msra.mxu0 0.0
        %989 = vmatprep.subr.mxu0 0.0
        %990 = vmatpush1.xpose.msra.mxu0 0.0
        %991 = vmatprep.subr.mxu0 0.0
        %992 = vmatpush1.xpose.msra.mxu0 0.0
        %993 = vmatprep.subr.mxu0 0.0
        %994 = vmatpush1.xpose.msra.mxu0 0.0
        %995 = vmatprep.subr.mxu0 0.0
        %996 = vmatpush1.xpose.msra.mxu0 0.0
        %997 = vmatprep.subr.mxu0 0.0
        %998 = vmatpush1.xpose.msra.mxu0 0.0
        %999 = vmatprep.subr.mxu0 0.0
        %1000 = vmatpush1.xpose.msra.mxu0 0.0
        %1001 = vmatprep.subr.mxu0 0.0
        %1002 = vmatpush1.xpose.msra.mxu0 0.0
        %1003 = vmatprep.subr.mxu0 0.0
        %1004 = vmatpush1.xpose.msra.mxu0 0.0
        %1005 = vmatprep.subr.mxu0 0.0
        %1006 = vmatpush1.xpose.msra.mxu0 0.0
        %1007 = vmatprep.subr.mxu0 0.0
        %1008 = vmatpush1.xpose.msra.mxu0 0.0
        %1009 = vmatprep.subr.mxu0 0.0
        %1010 = vmatpush1.xpose.msra.mxu0 0.0
        %1011 = vmatprep.subr.mxu0 0.0
        %1012 = vmatpush1.xpose.msra.mxu0 0.0
        %1013 = vmatprep.subr.mxu0 0.0
        %1014 = vmatpush1.xpose.msra.mxu0 0.0
        %1015 = vmatprep.subr.mxu0 0.0
        %1016 = vmatpush1.xpose.msra.mxu0 0.0
        %1017 = vmatprep.subr.mxu0 0.0
        %1018 = vmatpush1.xpose.msra.mxu0 0.0
        %1019 = vmatprep.subr.mxu0 0.0
        %1020 = vmatpush1.xpose.msra.mxu0 0.0
        %1021 = vmatprep.subr.mxu0 0.0
        %1022 = vmatpush1.xpose.msra.mxu0 0.0
        %1023 = vmatprep.subr.mxu0 0.0
        %1024 = vmatpush1.xpose.msra.mxu0 0.0
        %1025 = vmatprep.subr.mxu0 0.0
        %1026 = vmatpush1.xpose.msra.mxu0 0.0
        %1027 = vmatprep.subr.mxu0 0.0
        %1028 = vmatpush1.xpose.msra.mxu0 0.0
        %1029 = vmatprep.subr.mxu0 0.0
        %1030 = vmatpush1.xpose.msra.mxu0 0.0
        %1031 = vmatprep.subr.mxu0 0.0
        %1032 = vmatpush1.xpose.msra.mxu0 0.0
        %1033 = vmatprep.subr.mxu0 0.0
        %1034 = vmatpush1.xpose.msra.mxu0 0.0
        %1035 = vmatprep.subr.mxu0 0.0
        %1036 = vmatpush1.xpose.msra.mxu0 0.0
        %1037 = vmatprep.subr.mxu0 0.0
        %1038 = vmatpush1.xpose.msra.mxu0 0.0
        %1039 = vmatprep.subr.mxu0 0.0
        %1040 = vmatpush1.xpose.msra.mxu0 0.0
        %1041 = vmatprep.subr.mxu0 0.0
        %1042 = vmatpush1.xpose.msra.mxu0 0.0
        %1043 = vmatprep.subr.mxu0 0.0
        %1044 = vmatpush1.xpose.msra.mxu0 0.0
        %1045 = vmatprep.mubr.f32.mxu0 0.0
        %1046 = vmatmul.mubr.f32.gmra.mrb[0].mxu0 %v976
        %v1047 = vpop.f32.mrb[0].mxu0
        %v1048 = vadd.f32 0.0, %v1047
        %v1049 = vpop.f32.mrb[0].mxu0
        %1050 = vdwg.mxu0
        %v1052 = vsel %vm974, %v787, 0
        %v1055 = vsel %vm974, %v866, 0
        %1057 = vmatprep.subr.mxu0 0.0
        %1058 = vmatpush1.xpose.msra.mxu0 %v1055
        %1059 = vmatprep.subr.mxu0 0.0
        %1060 = vmatpush1.xpose.msra.mxu0 0.0
        %1061 = vmatprep.subr.mxu0 0.0
        %1062 = vmatpush1.xpose.msra.mxu0 0.0
        %1063 = vmatprep.subr.mxu0 0.0
        %1064 = vmatpush1.xpose.msra.mxu0 0.0
        %1065 = vmatprep.subr.mxu0 0.0
        %1066 = vmatpush1.xpose.msra.mxu0 0.0
        %1067 = vmatprep.subr.mxu0 0.0
        %1068 = vmatpush1.xpose.msra.mxu0 0.0
        %1069 = vmatprep.subr.mxu0 0.0
        %1070 = vmatpush1.xpose.msra.mxu0 0.0
        %1071 = vmatprep.subr.mxu0 0.0
        %1072 = vmatpush1.xpose.msra.mxu0 0.0
        %1073 = vmatprep.subr.mxu0 0.0
        %1074 = vmatpush1.xpose.msra.mxu0 0.0
        %1075 = vmatprep.subr.mxu0 0.0
        %1076 = vmatpush1.xpose.msra.mxu0 0.0
        %1077 = vmatprep.subr.mxu0 0.0
        %1078 = vmatpush1.xpose.msra.mxu0 0.0
        %1079 = vmatprep.subr.mxu0 0.0
        %1080 = vmatpush1.xpose.msra.mxu0 0.0
        %1081 = vmatprep.subr.mxu0 0.0
        %1082 = vmatpush1.xpose.msra.mxu0 0.0
        %1083 = vmatprep.subr.mxu0 0.0
        %1084 = vmatpush1.xpose.msra.mxu0 0.0
        %1085 = vmatprep.subr.mxu0 0.0
        %1086 = vmatpush1.xpose.msra.mxu0 0.0
        %1087 = vmatprep.subr.mxu0 0.0
        %1088 = vmatpush1.xpose.msra.mxu0 0.0
        %1089 = vmatprep.subr.mxu0 0.0
        %1090 = vmatpush1.xpose.msra.mxu0 0.0
        %1091 = vmatprep.subr.mxu0 0.0
        %1092 = vmatpush1.xpose.msra.mxu0 0.0
        %1093 = vmatprep.subr.mxu0 0.0
        %1094 = vmatpush1.xpose.msra.mxu0 0.0
        %1095 = vmatprep.subr.mxu0 0.0
        %1096 = vmatpush1.xpose.msra.mxu0 0.0
        %1097 = vmatprep.subr.mxu0 0.0
        %1098 = vmatpush1.xpose.msra.mxu0 0.0
        %1099 = vmatprep.subr.mxu0 0.0
        %1100 = vmatpush1.xpose.msra.mxu0 0.0
        %1101 = vmatprep.subr.mxu0 0.0
        %1102 = vmatpush1.xpose.msra.mxu0 0.0
        %1103 = vmatprep.subr.mxu0 0.0
        %1104 = vmatpush1.xpose.msra.mxu0 0.0
        %1105 = vmatprep.subr.mxu0 0.0
        %1106 = vmatpush1.xpose.msra.mxu0 0.0
        %1107 = vmatprep.subr.mxu0 0.0
        %1108 = vmatpush1.xpose.msra.mxu0 0.0
        %1109 = vmatprep.subr.mxu0 0.0
        %1110 = vmatpush1.xpose.msra.mxu0 0.0
        %1111 = vmatprep.subr.mxu0 0.0
        %1112 = vmatpush1.xpose.msra.mxu0 0.0
        %1113 = vmatprep.subr.mxu0 0.0
        %1114 = vmatpush1.xpose.msra.mxu0 0.0
        %1115 = vmatprep.subr.mxu0 0.0
        %1116 = vmatpush1.xpose.msra.mxu0 0.0
        %1117 = vmatprep.subr.mxu0 0.0
        %1118 = vmatpush1.xpose.msra.mxu0 0.0
        %1119 = vmatprep.subr.mxu0 0.0
        %1120 = vmatpush1.xpose.msra.mxu0 0.0
        %1121 = vmatprep.mubr.f32.mxu0 0.0
        %1122 = vmatmul.mubr.f32.gmra.mrb[0].mxu0 %v1052
        %v1123 = vpop.f32.mrb[0].mxu0
        %v1124 = vadd.f32 0.0, %v1123
        %v1125 = vpop.f32.mrb[0].mxu0
        %1126 = vdwg.mxu0
        %vm1127 = vcmp.gt.f32.partialorder %v964, 0.5
        %vm1128 = vcmp.gt.f32.partialorder %v971, 0.5
        %v1129 = vsel %vm1127, 1, 0
        %v1130 = vsel %vm1128, 1, 0
        %v1131 = vlaneseq
        %v1132 = vshrl.u32 %v1131, 7
        %v1133 = vsub.s32 0, %v1132
        %v1134 = vrot.slane %v1129, %v1133
        %v1135 = vlaneseq
        %v1136 = vshrl.u32 %v1135, 7
        %v1137 = vsub.s32 0, %v1136
        %v1138 = vrot.slane %v1130, %v1137
        %vm1139 = vcmp.eq.s32.totalorder %v1134, 1
        %vm1140 = vcmp.eq.s32.totalorder %v1138, 1
        %v1141 = vsel %vm1139, -1e+09, %v1048
        %v1142 = vsel %vm1140, -1e+09, %v1124
        %v1143 = vsel %vm974, %v1141, -inf
        %1144 = vmax.xlane.f32.xlu0 %v1143
        %v1145 = vpop.xlane.xlu0 %1144
        %v1146 = vsel %vm974, %v1142, -inf
        %1147 = vmax.xlane.f32.xlu0 %v1146
        %v1148 = vpop.xlane.xlu0 %1147
        %v1149 = vsub.f32 %v1141, %v1145
        %v1150 = vsub.f32 %v1142, %v1148
        %v1151 = vmul.f32 %v1149, 1.442695
        %v1152 = vpow.pop %v1151
        %v1153 = vmul.f32 %v1150, 1.442695
        %v1154 = vpow.pop %v1153
        %v1155 = vsel %vm974, %v1152, 0.0
        %1156 = vadd.xlane.f32.xlu0 %v1155
        %v1157 = vpop.xlane.xlu0 %1156
        %v1158 = vsel %vm974, %v1154, 0.0
        %1159 = vadd.xlane.f32.xlu0 %v1158
        %v1160 = vpop.xlane.xlu0 %1159
        %v1161 = vrcp.pop %v1157
        %v1162 = vrcp.pop %v1160
        %v1163 = vmul.f32 %v1152, %v1161
        %v1164 = vmul.f32 %v1154, %v1162
        %1165 = vst.msk [vmem:[%s657] sm:$0xff] %vm974, %v1163
        %1166 = vst.msk [vmem:[%s657 + $0x8] sm:$0xff] %vm974, %v1164
        %v1168 = vsel %vm974, %v1163, 0
        %1170 = vmatprep.subr.mxu0 0.0
        %1171 = vmatpush1.msra.mxu0 %v940
        %1172 = vmatprep.subr.mxu0 0.0
        %1173 = vmatpush1.msra.mxu0 0.0
        %1174 = vmatprep.subr.mxu0 0.0
        %1175 = vmatpush1.msra.mxu0 0.0
        %1176 = vmatprep.subr.mxu0 0.0
        %1177 = vmatpush1.msra.mxu0 0.0
        %1178 = vmatprep.subr.mxu0 0.0
        %1179 = vmatpush1.msra.mxu0 0.0
        %1180 = vmatprep.subr.mxu0 0.0
        %1181 = vmatpush1.msra.mxu0 0.0
        %1182 = vmatprep.subr.mxu0 0.0
        %1183 = vmatpush1.msra.mxu0 0.0
        %1184 = vmatprep.subr.mxu0 0.0
        %1185 = vmatpush1.msra.mxu0 0.0
        %1186 = vmatprep.subr.mxu0 0.0
        %1187 = vmatpush1.msra.mxu0 0.0
        %1188 = vmatprep.subr.mxu0 0.0
        %1189 = vmatpush1.msra.mxu0 0.0
        %1190 = vmatprep.subr.mxu0 0.0
        %1191 = vmatpush1.msra.mxu0 0.0
        %1192 = vmatprep.subr.mxu0 0.0
        %1193 = vmatpush1.msra.mxu0 0.0
        %1194 = vmatprep.subr.mxu0 0.0
        %1195 = vmatpush1.msra.mxu0 0.0
        %1196 = vmatprep.subr.mxu0 0.0
        %1197 = vmatpush1.msra.mxu0 0.0
        %1198 = vmatprep.subr.mxu0 0.0
        %1199 = vmatpush1.msra.mxu0 0.0
        %1200 = vmatprep.subr.mxu0 0.0
        %1201 = vmatpush1.msra.mxu0 0.0
        %1202 = vmatprep.subr.mxu0 0.0
        %1203 = vmatpush1.msra.mxu0 0.0
        %1204 = vmatprep.subr.mxu0 0.0
        %1205 = vmatpush1.msra.mxu0 0.0
        %1206 = vmatprep.subr.mxu0 0.0
        %1207 = vmatpush1.msra.mxu0 0.0
        %1208 = vmatprep.subr.mxu0 0.0
        %1209 = vmatpush1.msra.mxu0 0.0
        %1210 = vmatprep.subr.mxu0 0.0
        %1211 = vmatpush1.msra.mxu0 0.0
        %1212 = vmatprep.subr.mxu0 0.0
        %1213 = vmatpush1.msra.mxu0 0.0
        %1214 = vmatprep.subr.mxu0 0.0
        %1215 = vmatpush1.msra.mxu0 0.0
        %1216 = vmatprep.subr.mxu0 0.0
        %1217 = vmatpush1.msra.mxu0 0.0
        %1218 = vmatprep.subr.mxu0 0.0
        %1219 = vmatpush1.msra.mxu0 0.0
        %1220 = vmatprep.subr.mxu0 0.0
        %1221 = vmatpush1.msra.mxu0 0.0
        %1222 = vmatprep.subr.mxu0 0.0
        %1223 = vmatpush1.msra.mxu0 0.0
        %1224 = vmatprep.subr.mxu0 0.0
        %1225 = vmatpush1.msra.mxu0 0.0
        %1226 = vmatprep.subr.mxu0 0.0
        %1227 = vmatpush1.msra.mxu0 0.0
        %1228 = vmatprep.subr.mxu0 0.0
        %1229 = vmatpush1.msra.mxu0 0.0
        %1230 = vmatprep.subr.mxu0 0.0
        %1231 = vmatpush1.msra.mxu0 0.0
        %1232 = vmatprep.subr.mxu0 0.0
        %1233 = vmatpush1.msra.mxu0 0.0
        %1234 = vmatprep.mubr.f32.mxu0 0.0
        %1235 = vmatmul.mubr.f32.gmra.mrb[0].mxu0 %v1168
        %v1236 = vpop.f32.mrb[0].mxu0
        %v1237 = vadd.f32 0.0, %v1236
        %v1238 = vpop.f32.mrb[0].mxu0
        %1239 = vdwg.mxu0
        %v1241 = vsel %vm974, %v1164, 0
        %1243 = vmatprep.subr.mxu0 0.0
        %1244 = vmatpush1.msra.mxu0 %v945
        %1245 = vmatprep.subr.mxu0 0.0
        %1246 = vmatpush1.msra.mxu0 0.0
        %1247 = vmatprep.subr.mxu0 0.0
        %1248 = vmatpush1.msra.mxu0 0.0
        %1249 = vmatprep.subr.mxu0 0.0
        %1250 = vmatpush1.msra.mxu0 0.0
        %1251 = vmatprep.subr.mxu0 0.0
        %1252 = vmatpush1.msra.mxu0 0.0
        %1253 = vmatprep.subr.mxu0 0.0
        %1254 = vmatpush1.msra.mxu0 0.0
        %1255 = vmatprep.subr.mxu0 0.0
        %1256 = vmatpush1.msra.mxu0 0.0
        %1257 = vmatprep.subr.mxu0 0.0
        %1258 = vmatpush1.msra.mxu0 0.0
        %1259 = vmatprep.subr.mxu0 0.0
        %1260 = vmatpush1.msra.mxu0 0.0
        %1261 = vmatprep.subr.mxu0 0.0
        %1262 = vmatpush1.msra.mxu0 0.0
        %1263 = vmatprep.subr.mxu0 0.0
        %1264 = vmatpush1.msra.mxu0 0.0
        %1265 = vmatprep.subr.mxu0 0.0
        %1266 = vmatpush1.msra.mxu0 0.0
        %1267 = vmatprep.subr.mxu0 0.0
        %1268 = vmatpush1.msra.mxu0 0.0
        %1269 = vmatprep.subr.mxu0 0.0
        %1270 = vmatpush1.msra.mxu0 0.0
        %1271 = vmatprep.subr.mxu0 0.0
        %1272 = vmatpush1.msra.mxu0 0.0
        %1273 = vmatprep.subr.mxu0 0.0
        %1274 = vmatpush1.msra.mxu0 0.0
        %1275 = vmatprep.subr.mxu0 0.0
        %1276 = vmatpush1.msra.mxu0 0.0
        %1277 = vmatprep.subr.mxu0 0.0
        %1278 = vmatpush1.msra.mxu0 0.0
        %1279 = vmatprep.subr.mxu0 0.0
        %1280 = vmatpush1.msra.mxu0 0.0
        %1281 = vmatprep.subr.mxu0 0.0
        %1282 = vmatpush1.msra.mxu0 0.0
        %1283 = vmatprep.subr.mxu0 0.0
        %1284 = vmatpush1.msra.mxu0 0.0
        %1285 = vmatprep.subr.mxu0 0.0
        %1286 = vmatpush1.msra.mxu0 0.0
        %1287 = vmatprep.subr.mxu0 0.0
        %1288 = vmatpush1.msra.mxu0 0.0
        %1289 = vmatprep.subr.mxu0 0.0
        %1290 = vmatpush1.msra.mxu0 0.0
        %1291 = vmatprep.subr.mxu0 0.0
        %1292 = vmatpush1.msra.mxu0 0.0
        %1293 = vmatprep.subr.mxu0 0.0
        %1294 = vmatpush1.msra.mxu0 0.0
        %1295 = vmatprep.subr.mxu0 0.0
        %1296 = vmatpush1.msra.mxu0 0.0
        %1297 = vmatprep.subr.mxu0 0.0
        %1298 = vmatpush1.msra.mxu0 0.0
        %1299 = vmatprep.subr.mxu0 0.0
        %1300 = vmatpush1.msra.mxu0 0.0
        %1301 = vmatprep.subr.mxu0 0.0
        %1302 = vmatpush1.msra.mxu0 0.0
        %1303 = vmatprep.subr.mxu0 0.0
        %1304 = vmatpush1.msra.mxu0 0.0
        %1305 = vmatprep.subr.mxu0 0.0
        %1306 = vmatpush1.msra.mxu0 0.0
        %1307 = vmatprep.mubr.f32.mxu0 0.0
        %1308 = vmatmul.mubr.f32.gmra.mrb[0].mxu0 %v1241
        %v1309 = vpop.f32.mrb[0].mxu0
        %v1310 = vadd.f32 0.0, %v1309
        %v1311 = vpop.f32.mrb[0].mxu0
        %1312 = vdwg.mxu0
        %v1313 = vld [vmem:[%s569] sm:$0xff]
        %v1315 = vsel %vm974, %v1237, 0
        %v1318 = vsel %vm974, %v1310, 0
        %1320 = vmatprep.subr.mxu0 0.0
        %1321 = vmatpush1.msra.mxu0 %v1313
        %1322 = vmatprep.subr.mxu0 0.0
        %1323 = vmatpush1.msra.mxu0 0.0
        %1324 = vmatprep.subr.mxu0 0.0
        %1325 = vmatpush1.msra.mxu0 0.0
        %1326 = vmatprep.subr.mxu0 0.0
        %1327 = vmatpush1.msra.mxu0 0.0
        %1328 = vmatprep.subr.mxu0 0.0
        %1329 = vmatpush1.msra.mxu0 0.0
        %1330 = vmatprep.subr.mxu0 0.0
        %1331 = vmatpush1.msra.mxu0 0.0
        %1332 = vmatprep.subr.mxu0 0.0
        %1333 = vmatpush1.msra.mxu0 0.0
        %1334 = vmatprep.subr.mxu0 0.0
        %1335 = vmatpush1.msra.mxu0 0.0
        %1336 = vmatprep.subr.mxu0 0.0
        %1337 = vmatpush1.msra.mxu0 0.0
        %1338 = vmatprep.subr.mxu0 0.0
        %1339 = vmatpush1.msra.mxu0 0.0
        %1340 = vmatprep.subr.mxu0 0.0
        %1341 = vmatpush1.msra.mxu0 0.0
        %1342 = vmatprep.subr.mxu0 0.0
        %1343 = vmatpush1.msra.mxu0 0.0
        %1344 = vmatprep.subr.mxu0 0.0
        %1345 = vmatpush1.msra.mxu0 0.0
        %1346 = vmatprep.subr.mxu0 0.0
        %1347 = vmatpush1.msra.mxu0 0.0
        %1348 = vmatprep.subr.mxu0 0.0
        %1349 = vmatpush1.msra.mxu0 0.0
        %1350 = vmatprep.subr.mxu0 0.0
        %1351 = vmatpush1.msra.mxu0 0.0
        %1352 = vmatprep.subr.mxu0 0.0
        %1353 = vmatpush1.msra.mxu0 0.0
        %1354 = vmatprep.subr.mxu0 0.0
        %1355 = vmatpush1.msra.mxu0 0.0
        %1356 = vmatprep.subr.mxu0 0.0
        %1357 = vmatpush1.msra.mxu0 0.0
        %1358 = vmatprep.subr.mxu0 0.0
        %1359 = vmatpush1.msra.mxu0 0.0
        %1360 = vmatprep.subr.mxu0 0.0
        %1361 = vmatpush1.msra.mxu0 0.0
        %1362 = vmatprep.subr.mxu0 0.0
        %1363 = vmatpush1.msra.mxu0 0.0
        %1364 = vmatprep.subr.mxu0 0.0
        %1365 = vmatpush1.msra.mxu0 0.0
        %1366 = vmatprep.subr.mxu0 0.0
        %1367 = vmatpush1.msra.mxu0 0.0
        %1368 = vmatprep.subr.mxu0 0.0
        %1369 = vmatpush1.msra.mxu0 0.0
        %1370 = vmatprep.subr.mxu0 0.0
        %1371 = vmatpush1.msra.mxu0 0.0
        %1372 = vmatprep.subr.mxu0 0.0
        %1373 = vmatpush1.msra.mxu0 0.0
        %1374 = vmatprep.subr.mxu0 0.0
        %1375 = vmatpush1.msra.mxu0 0.0
        %1376 = vmatprep.subr.mxu0 0.0
        %1377 = vmatpush1.msra.mxu0 0.0
        %1378 = vmatprep.subr.mxu0 0.0
        %1379 = vmatpush1.msra.mxu0 0.0
        %1380 = vmatprep.subr.mxu0 0.0
        %1381 = vmatpush1.msra.mxu0 0.0
        %1382 = vmatprep.subr.mxu0 0.0
        %1383 = vmatpush1.msra.mxu0 0.0
        %1384 = vmatprep.mubr.f32.mxu0 0.0
        %1385 = vmatmul.mubr.f32.gmra.mrb[0].mxu0 %v1315
        %v1386 = vpop.f32.mrb[0].mxu0
        %v1387 = vadd.f32 0.0, %v1386
        %v1388 = vpop.f32.mrb[0].mxu0
        %1389 = vmatprep.mubr.f32.mxu0 0.0
        %1390 = vmatmul.mubr.f32.gmra.mrb[0].mxu0 %v1318
        %v1391 = vpop.f32.mrb[0].mxu0
        %v1392 = vadd.f32 0.0, %v1391
        %v1393 = vpop.f32.mrb[0].mxu0
        %1394 = vdwg.mxu0
        %v1395 = vadd.f32 %v702, %v1387
        %v1396 = vadd.f32 %v703, %v1392
        %1397 = vrot.lane.b32.xlu0 %v782, 120
        %v1398 = vpop.permute.xlu0 %1397
        %1399 = vrot.lane.b32.xlu0 %v861, 120
        %v1400 = vpop.permute.xlu0 %1399
        %v1401 = vsel %vm974, %v1398, 0
        %v1403 = vsel %vm974, %v1400, 0
        %1405 = vmatprep.subr.mxu0 0.0
        %1406 = vmatpush1.xpose.msra.mxu0 %v1403
        %1407 = vmatprep.subr.mxu0 0.0
        %1408 = vmatpush1.xpose.msra.mxu0 0.0
        %1409 = vmatprep.subr.mxu0 0.0
        %1410 = vmatpush1.xpose.msra.mxu0 0.0
        %1411 = vmatprep.subr.mxu0 0.0
        %1412 = vmatpush1.xpose.msra.mxu0 0.0
        %1413 = vmatprep.subr.mxu0 0.0
        %1414 = vmatpush1.xpose.msra.mxu0 0.0
        %1415 = vmatprep.subr.mxu0 0.0
        %1416 = vmatpush1.xpose.msra.mxu0 0.0
        %1417 = vmatprep.subr.mxu0 0.0
        %1418 = vmatpush1.xpose.msra.mxu0 0.0
        %1419 = vmatprep.subr.mxu0 0.0
        %1420 = vmatpush1.xpose.msra.mxu0 0.0
        %1421 = vmatprep.subr.mxu0 0.0
        %1422 = vmatpush1.xpose.msra.mxu0 0.0
        %1423 = vmatprep.subr.mxu0 0.0
        %1424 = vmatpush1.xpose.msra.mxu0 0.0
        %1425 = vmatprep.subr.mxu0 0.0
        %1426 = vmatpush1.xpose.msra.mxu0 0.0
        %1427 = vmatprep.subr.mxu0 0.0
        %1428 = vmatpush1.xpose.msra.mxu0 0.0
        %1429 = vmatprep.subr.mxu0 0.0
        %1430 = vmatpush1.xpose.msra.mxu0 0.0
        %1431 = vmatprep.subr.mxu0 0.0
        %1432 = vmatpush1.xpose.msra.mxu0 0.0
        %1433 = vmatprep.subr.mxu0 0.0
        %1434 = vmatpush1.xpose.msra.mxu0 0.0
        %1435 = vmatprep.subr.mxu0 0.0
        %1436 = vmatpush1.xpose.msra.mxu0 0.0
        %1437 = vmatprep.subr.mxu0 0.0
        %1438 = vmatpush1.xpose.msra.mxu0 0.0
        %1439 = vmatprep.subr.mxu0 0.0
        %1440 = vmatpush1.xpose.msra.mxu0 0.0
        %1441 = vmatprep.subr.mxu0 0.0
        %1442 = vmatpush1.xpose.msra.mxu0 0.0
        %1443 = vmatprep.subr.mxu0 0.0
        %1444 = vmatpush1.xpose.msra.mxu0 0.0
        %1445 = vmatprep.subr.mxu0 0.0
        %1446 = vmatpush1.xpose.msra.mxu0 0.0
        %1447 = vmatprep.subr.mxu0 0.0
        %1448 = vmatpush1.xpose.msra.mxu0 0.0
        %1449 = vmatprep.subr.mxu0 0.0
        %1450 = vmatpush1.xpose.msra.mxu0 0.0
        %1451 = vmatprep.subr.mxu0 0.0
        %1452 = vmatpush1.xpose.msra.mxu0 0.0
        %1453 = vmatprep.subr.mxu0 0.0
        %1454 = vmatpush1.xpose.msra.mxu0 0.0
        %1455 = vmatprep.subr.mxu0 0.0
        %1456 = vmatpush1.xpose.msra.mxu0 0.0
        %1457 = vmatprep.subr.mxu0 0.0
        %1458 = vmatpush1.xpose.msra.mxu0 0.0
        %1459 = vmatprep.subr.mxu0 0.0
        %1460 = vmatpush1.xpose.msra.mxu0 0.0
        %1461 = vmatprep.subr.mxu0 0.0
        %1462 = vmatpush1.xpose.msra.mxu0 0.0
        %1463 = vmatprep.subr.mxu0 0.0
        %1464 = vmatpush1.xpose.msra.mxu0 0.0
        %1465 = vmatprep.subr.mxu0 0.0
        %1466 = vmatpush1.xpose.msra.mxu0 0.0
        %1467 = vmatprep.subr.mxu0 0.0
        %1468 = vmatpush1.xpose.msra.mxu0 0.0
        %1469 = vmatprep.mubr.f32.mxu0 0.0
        %1470 = vmatmul.mubr.f32.gmra.mrb[0].mxu0 %v1401
        %v1471 = vpop.f32.mrb[0].mxu0
        %v1472 = vadd.f32 0.0, %v1471
        %v1473 = vpop.f32.mrb[0].mxu0
        %1474 = vdwg.mxu0
        %1475 = vrot.lane.b32.xlu0 %v787, 120
        %v1476 = vpop.permute.xlu0 %1475
        %1477 = vrot.lane.b32.xlu0 %v866, 120
        %v1478 = vpop.permute.xlu0 %1477
        %v1479 = vsel %vm974, %v1476, 0
        %v1481 = vsel %vm974, %v1478, 0
        %1483 = vmatprep.subr.mxu0 0.0
        %1484 = vmatpush1.xpose.msra.mxu0 %v1481
        %1485 = vmatprep.subr.mxu0 0.0
        %1486 = vmatpush1.xpose.msra.mxu0 0.0
        %1487 = vmatprep.subr.mxu0 0.0
        %1488 = vmatpush1.xpose.msra.mxu0 0.0
        %1489 = vmatprep.subr.mxu0 0.0
        %1490 = vmatpush1.xpose.msra.mxu0 0.0
        %1491 = vmatprep.subr.mxu0 0.0
        %1492 = vmatpush1.xpose.msra.mxu0 0.0
        %1493 = vmatprep.subr.mxu0 0.0
        %1494 = vmatpush1.xpose.msra.mxu0 0.0
        %1495 = vmatprep.subr.mxu0 0.0
        %1496 = vmatpush1.xpose.msra.mxu0 0.0
        %1497 = vmatprep.subr.mxu0 0.0
        %1498 = vmatpush1.xpose.msra.mxu0 0.0
        %1499 = vmatprep.subr.mxu0 0.0
        %1500 = vmatpush1.xpose.msra.mxu0 0.0
        %1501 = vmatprep.subr.mxu0 0.0
        %1502 = vmatpush1.xpose.msra.mxu0 0.0
        %1503 = vmatprep.subr.mxu0 0.0
        %1504 = vmatpush1.xpose.msra.mxu0 0.0
        %1505 = vmatprep.subr.mxu0 0.0
        %1506 = vmatpush1.xpose.msra.mxu0 0.0
        %1507 = vmatprep.subr.mxu0 0.0
        %1508 = vmatpush1.xpose.msra.mxu0 0.0
        %1509 = vmatprep.subr.mxu0 0.0
        %1510 = vmatpush1.xpose.msra.mxu0 0.0
        %1511 = vmatprep.subr.mxu0 0.0
        %1512 = vmatpush1.xpose.msra.mxu0 0.0
        %1513 = vmatprep.subr.mxu0 0.0
        %1514 = vmatpush1.xpose.msra.mxu0 0.0
        %1515 = vmatprep.subr.mxu0 0.0
        %1516 = vmatpush1.xpose.msra.mxu0 0.0
        %1517 = vmatprep.subr.mxu0 0.0
        %1518 = vmatpush1.xpose.msra.mxu0 0.0
        %1519 = vmatprep.subr.mxu0 0.0
        %1520 = vmatpush1.xpose.msra.mxu0 0.0
        %1521 = vmatprep.subr.mxu0 0.0
        %1522 = vmatpush1.xpose.msra.mxu0 0.0
        %1523 = vmatprep.subr.mxu0 0.0
        %1524 = vmatpush1.xpose.msra.mxu0 0.0
        %1525 = vmatprep.subr.mxu0 0.0
        %1526 = vmatpush1.xpose.msra.mxu0 0.0
        %1527 = vmatprep.subr.mxu0 0.0
        %1528 = vmatpush1.xpose.msra.mxu0 0.0
        %1529 = vmatprep.subr.mxu0 0.0
        %1530 = vmatpush1.xpose.msra.mxu0 0.0
        %1531 = vmatprep.subr.mxu0 0.0
        %1532 = vmatpush1.xpose.msra.mxu0 0.0
        %1533 = vmatprep.subr.mxu0 0.0
        %1534 = vmatpush1.xpose.msra.mxu0 0.0
        %1535 = vmatprep.subr.mxu0 0.0
        %1536 = vmatpush1.xpose.msra.mxu0 0.0
        %1537 = vmatprep.subr.mxu0 0.0
        %1538 = vmatpush1.xpose.msra.mxu0 0.0
        %1539 = vmatprep.subr.mxu0 0.0
        %1540 = vmatpush1.xpose.msra.mxu0 0.0
        %1541 = vmatprep.subr.mxu0 0.0
        %1542 = vmatpush1.xpose.msra.mxu0 0.0
        %1543 = vmatprep.subr.mxu0 0.0
        %1544 = vmatpush1.xpose.msra.mxu0 0.0
        %1545 = vmatprep.subr.mxu0 0.0
        %1546 = vmatpush1.xpose.msra.mxu0 0.0
        %1547 = vmatprep.mubr.f32.mxu0 0.0
        %1548 = vmatmul.mubr.f32.gmra.mrb[0].mxu0 %v1479
        %v1549 = vpop.f32.mrb[0].mxu0
        %v1550 = vadd.f32 0.0, %v1549
        %v1551 = vpop.f32.mrb[0].mxu0
        %1552 = vdwg.mxu0
        %v1553 = vsel %vm1139, -1e+09, %v1472
        %v1554 = vsel %vm1140, -1e+09, %v1550
        %v1555 = vsel %vm974, %v1553, -inf
        %1556 = vmax.xlane.f32.xlu0 %v1555
        %v1557 = vpop.xlane.xlu0 %1556
        %v1558 = vsel %vm974, %v1554, -inf
        %1559 = vmax.xlane.f32.xlu0 %v1558
        %v1560 = vpop.xlane.xlu0 %1559
        %v1561 = vsub.f32 %v1553, %v1557
        %v1562 = vsub.f32 %v1554, %v1560
        %v1563 = vmul.f32 %v1561, 1.442695
        %v1564 = vpow.pop %v1563
        %v1565 = vmul.f32 %v1562, 1.442695
        %v1566 = vpow.pop %v1565
        %v1567 = vsel %vm974, %v1564, 0.0
        %1568 = vadd.xlane.f32.xlu0 %v1567
        %v1569 = vpop.xlane.xlu0 %1568
        %v1570 = vsel %vm974, %v1566, 0.0
        %1571 = vadd.xlane.f32.xlu0 %v1570
        %v1572 = vpop.xlane.xlu0 %1571
        %v1573 = vrcp.pop %v1569
        %v1574 = vrcp.pop %v1572
        %v1575 = vmul.f32 %v1564, %v1573
        %v1576 = vmul.f32 %v1566, %v1574
        %s1577 = scalar_lea.vmem %s657, 16 [#allocation11]
        %1578 = vst.msk [vmem:[%s1577] sm:$0xff] %vm974, %v1575
        %1579 = vst.msk [vmem:[%s1577 + $0x8] sm:$0xff] %vm974, %v1576
        %1581 = vrot.lane.b32.xlu0 %v940, 120
        %v1582 = vpop.permute.xlu0 %1581
        %v1585 = vsel %vm974, %v1575, 0
        %1587 = vmatprep.subr.mxu0 0.0
        %1588 = vmatpush1.msra.mxu0 %v1582
        %1589 = vmatprep.subr.mxu0 0.0
        %1590 = vmatpush1.msra.mxu0 0.0
        %1591 = vmatprep.subr.mxu0 0.0
        %1592 = vmatpush1.msra.mxu0 0.0
        %1593 = vmatprep.subr.mxu0 0.0
        %1594 = vmatpush1.msra.mxu0 0.0
        %1595 = vmatprep.subr.mxu0 0.0
        %1596 = vmatpush1.msra.mxu0 0.0
        %1597 = vmatprep.subr.mxu0 0.0
        %1598 = vmatpush1.msra.mxu0 0.0
        %1599 = vmatprep.subr.mxu0 0.0
        %1600 = vmatpush1.msra.mxu0 0.0
        %1601 = vmatprep.subr.mxu0 0.0
        %1602 = vmatpush1.msra.mxu0 0.0
        %1603 = vmatprep.subr.mxu0 0.0
        %1604 = vmatpush1.msra.mxu0 0.0
        %1605 = vmatprep.subr.mxu0 0.0
        %1606 = vmatpush1.msra.mxu0 0.0
        %1607 = vmatprep.subr.mxu0 0.0
        %1608 = vmatpush1.msra.mxu0 0.0
        %1609 = vmatprep.subr.mxu0 0.0
        %1610 = vmatpush1.msra.mxu0 0.0
        %1611 = vmatprep.subr.mxu0 0.0
        %1612 = vmatpush1.msra.mxu0 0.0
        %1613 = vmatprep.subr.mxu0 0.0
        %1614 = vmatpush1.msra.mxu0 0.0
        %1615 = vmatprep.subr.mxu0 0.0
        %1616 = vmatpush1.msra.mxu0 0.0
        %1617 = vmatprep.subr.mxu0 0.0
        %1618 = vmatpush1.msra.mxu0 0.0
        %1619 = vmatprep.subr.mxu0 0.0
        %1620 = vmatpush1.msra.mxu0 0.0
        %1621 = vmatprep.subr.mxu0 0.0
        %1622 = vmatpush1.msra.mxu0 0.0
        %1623 = vmatprep.subr.mxu0 0.0
        %1624 = vmatpush1.msra.mxu0 0.0
        %1625 = vmatprep.subr.mxu0 0.0
        %1626 = vmatpush1.msra.mxu0 0.0
        %1627 = vmatprep.subr.mxu0 0.0
        %1628 = vmatpush1.msra.mxu0 0.0
        %1629 = vmatprep.subr.mxu0 0.0
        %1630 = vmatpush1.msra.mxu0 0.0
        %1631 = vmatprep.subr.mxu0 0.0
        %1632 = vmatpush1.msra.mxu0 0.0
        %1633 = vmatprep.subr.mxu0 0.0
        %1634 = vmatpush1.msra.mxu0 0.0
        %1635 = vmatprep.subr.mxu0 0.0
        %1636 = vmatpush1.msra.mxu0 0.0
        %1637 = vmatprep.subr.mxu0 0.0
        %1638 = vmatpush1.msra.mxu0 0.0
        %1639 = vmatprep.subr.mxu0 0.0
        %1640 = vmatpush1.msra.mxu0 0.0
        %1641 = vmatprep.subr.mxu0 0.0
        %1642 = vmatpush1.msra.mxu0 0.0
        %1643 = vmatprep.subr.mxu0 0.0
        %1644 = vmatpush1.msra.mxu0 0.0
        %1645 = vmatprep.subr.mxu0 0.0
        %1646 = vmatpush1.msra.mxu0 0.0
        %1647 = vmatprep.subr.mxu0 0.0
        %1648 = vmatpush1.msra.mxu0 0.0
        %1649 = vmatprep.subr.mxu0 0.0
        %1650 = vmatpush1.msra.mxu0 0.0
        %1651 = vmatprep.mubr.f32.mxu0 0.0
        %1652 = vmatmul.mubr.f32.gmra.mrb[0].mxu0 %v1585
        %v1653 = vpop.f32.mrb[0].mxu0
        %v1654 = vadd.f32 0.0, %v1653
        %v1655 = vpop.f32.mrb[0].mxu0
        %1656 = vdwg.mxu0
        %1658 = vrot.lane.b32.xlu0 %v945, 120
        %v1659 = vpop.permute.xlu0 %1658
        %v1662 = vsel %vm974, %v1576, 0
        %1664 = vmatprep.subr.mxu0 0.0
        %1665 = vmatpush1.msra.mxu0 %v1659
        %1666 = vmatprep.subr.mxu0 0.0
        %1667 = vmatpush1.msra.mxu0 0.0
        %1668 = vmatprep.subr.mxu0 0.0
        %1669 = vmatpush1.msra.mxu0 0.0
        %1670 = vmatprep.subr.mxu0 0.0
        %1671 = vmatpush1.msra.mxu0 0.0
        %1672 = vmatprep.subr.mxu0 0.0
        %1673 = vmatpush1.msra.mxu0 0.0
        %1674 = vmatprep.subr.mxu0 0.0
        %1675 = vmatpush1.msra.mxu0 0.0
        %1676 = vmatprep.subr.mxu0 0.0
        %1677 = vmatpush1.msra.mxu0 0.0
        %1678 = vmatprep.subr.mxu0 0.0
        %1679 = vmatpush1.msra.mxu0 0.0
        %1680 = vmatprep.subr.mxu0 0.0
        %1681 = vmatpush1.msra.mxu0 0.0
        %1682 = vmatprep.subr.mxu0 0.0
        %1683 = vmatpush1.msra.mxu0 0.0
        %1684 = vmatprep.subr.mxu0 0.0
        %1685 = vmatpush1.msra.mxu0 0.0
        %1686 = vmatprep.subr.mxu0 0.0
        %1687 = vmatpush1.msra.mxu0 0.0
        %1688 = vmatprep.subr.mxu0 0.0
        %1689 = vmatpush1.msra.mxu0 0.0
        %1690 = vmatprep.subr.mxu0 0.0
        %1691 = vmatpush1.msra.mxu0 0.0
        %1692 = vmatprep.subr.mxu0 0.0
        %1693 = vmatpush1.msra.mxu0 0.0
        %1694 = vmatprep.subr.mxu0 0.0
        %1695 = vmatpush1.msra.mxu0 0.0
        %1696 = vmatprep.subr.mxu0 0.0
        %1697 = vmatpush1.msra.mxu0 0.0
        %1698 = vmatprep.subr.mxu0 0.0
        %1699 = vmatpush1.msra.mxu0 0.0
        %1700 = vmatprep.subr.mxu0 0.0
        %1701 = vmatpush1.msra.mxu0 0.0
        %1702 = vmatprep.subr.mxu0 0.0
        %1703 = vmatpush1.msra.mxu0 0.0
        %1704 = vmatprep.subr.mxu0 0.0
        %1705 = vmatpush1.msra.mxu0 0.0
        %1706 = vmatprep.subr.mxu0 0.0
        %1707 = vmatpush1.msra.mxu0 0.0
        %1708 = vmatprep.subr.mxu0 0.0
        %1709 = vmatpush1.msra.mxu0 0.0
        %1710 = vmatprep.subr.mxu0 0.0
        %1711 = vmatpush1.msra.mxu0 0.0
        %1712 = vmatprep.subr.mxu0 0.0
        %1713 = vmatpush1.msra.mxu0 0.0
        %1714 = vmatprep.subr.mxu0 0.0
        %1715 = vmatpush1.msra.mxu0 0.0
        %1716 = vmatprep.subr.mxu0 0.0
        %1717 = vmatpush1.msra.mxu0 0.0
        %1718 = vmatprep.subr.mxu0 0.0
        %1719 = vmatpush1.msra.mxu0 0.0
        %1720 = vmatprep.subr.mxu0 0.0
        %1721 = vmatpush1.msra.mxu0 0.0
        %1722 = vmatprep.subr.mxu0 0.0
        %1723 = vmatpush1.msra.mxu0 0.0
        %1724 = vmatprep.subr.mxu0 0.0
        %1725 = vmatpush1.msra.mxu0 0.0
        %1726 = vmatprep.subr.mxu0 0.0
        %1727 = vmatpush1.msra.mxu0 0.0
        %1728 = vmatprep.mubr.f32.mxu0 0.0
        %1729 = vmatmul.mubr.f32.gmra.mrb[0].mxu0 %v1662
        %v1730 = vpop.f32.mrb[0].mxu0
        %v1731 = vadd.f32 0.0, %v1730
        %v1732 = vpop.f32.mrb[0].mxu0
        %1733 = vdwg.mxu0
        %s1734 = scalar_lea.vmem %s569, 8 [#allocation8]
        %v1735 = vld [vmem:[%s1734] sm:$0xff]
        %v1737 = vsel %vm974, %v1654, 0
        %v1740 = vsel %vm974, %v1731, 0
        %1742 = vmatprep.subr.mxu0 0.0
        %1743 = vmatpush1.msra.mxu0 %v1735
        %1744 = vmatprep.subr.mxu0 0.0
        %1745 = vmatpush1.msra.mxu0 0.0
        %1746 = vmatprep.subr.mxu0 0.0
        %1747 = vmatpush1.msra.mxu0 0.0
        %1748 = vmatprep.subr.mxu0 0.0
        %1749 = vmatpush1.msra.mxu0 0.0
        %1750 = vmatprep.subr.mxu0 0.0
        %1751 = vmatpush1.msra.mxu0 0.0
        %1752 = vmatprep.subr.mxu0 0.0
        %1753 = vmatpush1.msra.mxu0 0.0
        %1754 = vmatprep.subr.mxu0 0.0
        %1755 = vmatpush1.msra.mxu0 0.0
        %1756 = vmatprep.subr.mxu0 0.0
        %1757 = vmatpush1.msra.mxu0 0.0
        %1758 = vmatprep.subr.mxu0 0.0
        %1759 = vmatpush1.msra.mxu0 0.0
        %1760 = vmatprep.subr.mxu0 0.0
        %1761 = vmatpush1.msra.mxu0 0.0
        %1762 = vmatprep.subr.mxu0 0.0
        %1763 = vmatpush1.msra.mxu0 0.0
        %1764 = vmatprep.subr.mxu0 0.0
        %1765 = vmatpush1.msra.mxu0 0.0
        %1766 = vmatprep.subr.mxu0 0.0
        %1767 = vmatpush1.msra.mxu0 0.0
        %1768 = vmatprep.subr.mxu0 0.0
        %1769 = vmatpush1.msra.mxu0 0.0
        %1770 = vmatprep.subr.mxu0 0.0
        %1771 = vmatpush1.msra.mxu0 0.0
        %1772 = vmatprep.subr.mxu0 0.0
        %1773 = vmatpush1.msra.mxu0 0.0
        %1774 = vmatprep.subr.mxu0 0.0
        %1775 = vmatpush1.msra.mxu0 0.0
        %1776 = vmatprep.subr.mxu0 0.0
        %1777 = vmatpush1.msra.mxu0 0.0
        %1778 = vmatprep.subr.mxu0 0.0
        %1779 = vmatpush1.msra.mxu0 0.0
        %1780 = vmatprep.subr.mxu0 0.0
        %1781 = vmatpush1.msra.mxu0 0.0
        %1782 = vmatprep.subr.mxu0 0.0
        %1783 = vmatpush1.msra.mxu0 0.0
        %1784 = vmatprep.subr.mxu0 0.0
        %1785 = vmatpush1.msra.mxu0 0.0
        %1786 = vmatprep.subr.mxu0 0.0
        %1787 = vmatpush1.msra.mxu0 0.0
        %1788 = vmatprep.subr.mxu0 0.0
        %1789 = vmatpush1.msra.mxu0 0.0
        %1790 = vmatprep.subr.mxu0 0.0
        %1791 = vmatpush1.msra.mxu0 0.0
        %1792 = vmatprep.subr.mxu0 0.0
        %1793 = vmatpush1.msra.mxu0 0.0
        %1794 = vmatprep.subr.mxu0 0.0
        %1795 = vmatpush1.msra.mxu0 0.0
        %1796 = vmatprep.subr.mxu0 0.0
        %1797 = vmatpush1.msra.mxu0 0.0
        %1798 = vmatprep.subr.mxu0 0.0
        %1799 = vmatpush1.msra.mxu0 0.0
        %1800 = vmatprep.subr.mxu0 0.0
        %1801 = vmatpush1.msra.mxu0 0.0
        %1802 = vmatprep.subr.mxu0 0.0
        %1803 = vmatpush1.msra.mxu0 0.0
        %1804 = vmatprep.subr.mxu0 0.0
        %1805 = vmatpush1.msra.mxu0 0.0
        %1806 = vmatprep.mubr.f32.mxu0 0.0
        %1807 = vmatmul.mubr.f32.gmra.mrb[0].mxu0 %v1737
        %v1808 = vpop.f32.mrb[0].mxu0
        %v1809 = vadd.f32 0.0, %v1808
        %v1810 = vpop.f32.mrb[0].mxu0
        %1811 = vmatprep.mubr.f32.mxu0 0.0
        %1812 = vmatmul.mubr.f32.gmra.mrb[0].mxu0 %v1740
        %v1813 = vpop.f32.mrb[0].mxu0
        %v1814 = vadd.f32 0.0, %v1813
        %v1815 = vpop.f32.mrb[0].mxu0
        %1816 = vdwg.mxu0
        %v1817 = vadd.f32 %v1395, %v1809
        %v1818 = vadd.f32 %v1396, %v1814
        %1819 = vrot.lane.b32.xlu0 %v782, 112
        %v1820 = vpop.permute.xlu0 %1819
        %1821 = vrot.lane.b32.xlu0 %v861, 112
        %v1822 = vpop.permute.xlu0 %1821
        %v1823 = vsel %vm974, %v1820, 0
        %v1825 = vsel %vm974, %v1822, 0
        %1827 = vmatprep.subr.mxu0 0.0
        %1828 = vmatpush1.xpose.msra.mxu0 %v1825
        %1829 = vmatprep.subr.mxu0 0.0
        %1830 = vmatpush1.xpose.msra.mxu0 0.0
        %1831 = vmatprep.subr.mxu0 0.0
        %1832 = vmatpush1.xpose.msra.mxu0 0.0
        %1833 = vmatprep.subr.mxu0 0.0
        %1834 = vmatpush1.xpose.msra.mxu0 0.0
        %1835 = vmatprep.subr.mxu0 0.0
        %1836 = vmatpush1.xpose.msra.mxu0 0.0
        %1837 = vmatprep.subr.mxu0 0.0
        %1838 = vmatpush1.xpose.msra.mxu0 0.0
        %1839 = vmatprep.subr.mxu0 0.0
        %1840 = vmatpush1.xpose.msra.mxu0 0.0
        %1841 = vmatprep.subr.mxu0 0.0
        %1842 = vmatpush1.xpose.msra.mxu0 0.0
        %1843 = vmatprep.subr.mxu0 0.0
        %1844 = vmatpush1.xpose.msra.mxu0 0.0
        %1845 = vmatprep.subr.mxu0 0.0
        %1846 = vmatpush1.xpose.msra.mxu0 0.0
        %1847 = vmatprep.subr.mxu0 0.0
        %1848 = vmatpush1.xpose.msra.mxu0 0.0
        %1849 = vmatprep.subr.mxu0 0.0
        %1850 = vmatpush1.xpose.msra.mxu0 0.0
        %1851 = vmatprep.subr.mxu0 0.0
        %1852 = vmatpush1.xpose.msra.mxu0 0.0
        %1853 = vmatprep.subr.mxu0 0.0
        %1854 = vmatpush1.xpose.msra.mxu0 0.0
        %1855 = vmatprep.subr.mxu0 0.0
        %1856 = vmatpush1.xpose.msra.mxu0 0.0
        %1857 = vmatprep.subr.mxu0 0.0
        %1858 = vmatpush1.xpose.msra.mxu0 0.0
        %1859 = vmatprep.subr.mxu0 0.0
        %1860 = vmatpush1.xpose.msra.mxu0 0.0
        %1861 = vmatprep.subr.mxu0 0.0
        %1862 = vmatpush1.xpose.msra.mxu0 0.0
        %1863 = vmatprep.subr.mxu0 0.0
        %1864 = vmatpush1.xpose.msra.mxu0 0.0
        %1865 = vmatprep.subr.mxu0 0.0
        %1866 = vmatpush1.xpose.msra.mxu0 0.0
        %1867 = vmatprep.subr.mxu0 0.0
        %1868 = vmatpush1.xpose.msra.mxu0 0.0
        %1869 = vmatprep.subr.mxu0 0.0
        %1870 = vmatpush1.xpose.msra.mxu0 0.0
        %1871 = vmatprep.subr.mxu0 0.0
        %1872 = vmatpush1.xpose.msra.mxu0 0.0
        %1873 = vmatprep.subr.mxu0 0.0
        %1874 = vmatpush1.xpose.msra.mxu0 0.0
        %1875 = vmatprep.subr.mxu0 0.0
        %1876 = vmatpush1.xpose.msra.mxu0 0.0
        %1877 = vmatprep.subr.mxu0 0.0
        %1878 = vmatpush1.xpose.msra.mxu0 0.0
        %1879 = vmatprep.subr.mxu0 0.0
        %1880 = vmatpush1.xpose.msra.mxu0 0.0
        %1881 = vmatprep.subr.mxu0 0.0
        %1882 = vmatpush1.xpose.msra.mxu0 0.0
        %1883 = vmatprep.subr.mxu0 0.0
        %1884 = vmatpush1.xpose.msra.mxu0 0.0
        %1885 = vmatprep.subr.mxu0 0.0
        %1886 = vmatpush1.xpose.msra.mxu0 0.0
        %1887 = vmatprep.subr.mxu0 0.0
        %1888 = vmatpush1.xpose.msra.mxu0 0.0
        %1889 = vmatprep.subr.mxu0 0.0
        %1890 = vmatpush1.xpose.msra.mxu0 0.0
        %1891 = vmatprep.mubr.f32.mxu0 0.0
        %1892 = vmatmul.mubr.f32.gmra.mrb[0].mxu0 %v1823
        %v1893 = vpop.f32.mrb[0].mxu0
        %v1894 = vadd.f32 0.0, %v1893
        %v1895 = vpop.f32.mrb[0].mxu0
        %1896 = vdwg.mxu0
        %1897 = vrot.lane.b32.xlu0 %v787, 112
        %v1898 = vpop.permute.xlu0 %1897
        %1899 = vrot.lane.b32.xlu0 %v866, 112
        %v1900 = vpop.permute.xlu0 %1899
        %v1901 = vsel %vm974, %v1898, 0
        %v1903 = vsel %vm974, %v1900, 0
        %1905 = vmatprep.subr.mxu0 0.0
        %1906 = vmatpush1.xpose.msra.mxu0 %v1903
        %1907 = vmatprep.subr.mxu0 0.0
        %1908 = vmatpush1.xpose.msra.mxu0 0.0
        %1909 = vmatprep.subr.mxu0 0.0
        %1910 = vmatpush1.xpose.msra.mxu0 0.0
        %1911 = vmatprep.subr.mxu0 0.0
        %1912 = vmatpush1.xpose.msra.mxu0 0.0
        %1913 = vmatprep.subr.mxu0 0.0
        %1914 = vmatpush1.xpose.msra.mxu0 0.0
        %1915 = vmatprep.subr.mxu0 0.0
        %1916 = vmatpush1.xpose.msra.mxu0 0.0
        %1917 = vmatprep.subr.mxu0 0.0
        %1918 = vmatpush1.xpose.msra.mxu0 0.0
        %1919 = vmatprep.subr.mxu0 0.0
        %1920 = vmatpush1.xpose.msra.mxu0 0.0
        %1921 = vmatprep.subr.mxu0 0.0
        %1922 = vmatpush1.xpose.msra.mxu0 0.0
        %1923 = vmatprep.subr.mxu0 0.0
        %1924 = vmatpush1.xpose.msra.mxu0 0.0
        %1925 = vmatprep.subr.mxu0 0.0
        %1926 = vmatpush1.xpose.msra.mxu0 0.0
        %1927 = vmatprep.subr.mxu0 0.0
        %1928 = vmatpush1.xpose.msra.mxu0 0.0
        %1929 = vmatprep.subr.mxu0 0.0
        %1930 = vmatpush1.xpose.msra.mxu0 0.0
        %1931 = vmatprep.subr.mxu0 0.0
        %1932 = vmatpush1.xpose.msra.mxu0 0.0
        %1933 = vmatprep.subr.mxu0 0.0
        %1934 = vmatpush1.xpose.msra.mxu0 0.0
        %1935 = vmatprep.subr.mxu0 0.0
        %1936 = vmatpush1.xpose.msra.mxu0 0.0
        %1937 = vmatprep.subr.mxu0 0.0
        %1938 = vmatpush1.xpose.msra.mxu0 0.0
        %1939 = vmatprep.subr.mxu0 0.0
        %1940 = vmatpush1.xpose.msra.mxu0 0.0
        %1941 = vmatprep.subr.mxu0 0.0
        %1942 = vmatpush1.xpose.msra.mxu0 0.0
        %1943 = vmatprep.subr.mxu0 0.0
        %1944 = vmatpush1.xpose.msra.mxu0 0.0
        %1945 = vmatprep.subr.mxu0 0.0
        %1946 = vmatpush1.xpose.msra.mxu0 0.0
        %1947 = vmatprep.subr.mxu0 0.0
        %1948 = vmatpush1.xpose.msra.mxu0 0.0
        %1949 = vmatprep.subr.mxu0 0.0
        %1950 = vmatpush1.xpose.msra.mxu0 0.0
        %1951 = vmatprep.subr.mxu0 0.0
        %1952 = vmatpush1.xpose.msra.mxu0 0.0
        %1953 = vmatprep.subr.mxu0 0.0
        %1954 = vmatpush1.xpose.msra.mxu0 0.0
        %1955 = vmatprep.subr.mxu0 0.0
        %1956 = vmatpush1.xpose.msra.mxu0 0.0
        %1957 = vmatprep.subr.mxu0 0.0
        %1958 = vmatpush1.xpose.msra.mxu0 0.0
        %1959 = vmatprep.subr.mxu0 0.0
        %1960 = vmatpush1.xpose.msra.mxu0 0.0
        %1961 = vmatprep.subr.mxu0 0.0
        %1962 = vmatpush1.xpose.msra.mxu0 0.0
        %1963 = vmatprep.subr.mxu0 0.0
        %1964 = vmatpush1.xpose.msra.mxu0 0.0
        %1965 = vmatprep.subr.mxu0 0.0
        %1966 = vmatpush1.xpose.msra.mxu0 0.0
        %1967 = vmatprep.subr.mxu0 0.0
        %1968 = vmatpush1.xpose.msra.mxu0 0.0
        %1969 = vmatprep.mubr.f32.mxu0 0.0
        %1970 = vmatmul.mubr.f32.gmra.mrb[0].mxu0 %v1901
        %v1971 = vpop.f32.mrb[0].mxu0
        %v1972 = vadd.f32 0.0, %v1971
        %v1973 = vpop.f32.mrb[0].mxu0
        %1974 = vdwg.mxu0
        %v1975 = vsel %vm1139, -1e+09, %v1894
        %v1976 = vsel %vm1140, -1e+09, %v1972
        %v1977 = vsel %vm974, %v1975, -inf
        %1978 = vmax.xlane.f32.xlu0 %v1977
        %v1979 = vpop.xlane.xlu0 %1978
        %v1980 = vsel %vm974, %v1976, -inf
        %1981 = vmax.xlane.f32.xlu0 %v1980
        %v1982 = vpop.xlane.xlu0 %1981
        %v1983 = vsub.f32 %v1975, %v1979
        %v1984 = vsub.f32 %v1976, %v1982
        %v1985 = vmul.f32 %v1983, 1.442695
        %v1986 = vpow.pop %v1985
        %v1987 = vmul.f32 %v1984, 1.442695
        %v1988 = vpow.pop %v1987
        %v1989 = vsel %vm974, %v1986, 0.0
        %1990 = vadd.xlane.f32.xlu0 %v1989
        %v1991 = vpop.xlane.xlu0 %1990
        %v1992 = vsel %vm974, %v1988, 0.0
        %1993 = vadd.xlane.f32.xlu0 %v1992
        %v1994 = vpop.xlane.xlu0 %1993
        %v1995 = vrcp.pop %v1991
        %v1996 = vrcp.pop %v1994
        %v1997 = vmul.f32 %v1986, %v1995
        %v1998 = vmul.f32 %v1988, %v1996
        %s1999 = scalar_lea.vmem %s657, 32 [#allocation11]
        %2000 = vst.msk [vmem:[%s1999] sm:$0xff] %vm974, %v1997
        %2001 = vst.msk [vmem:[%s1999 + $0x8] sm:$0xff] %vm974, %v1998
        %2002 = vrot.lane.b32.xlu0 %v940, 112
        %v2003 = vpop.permute.xlu0 %2002
        %v2006 = vsel %vm974, %v1997, 0
        %2008 = vmatprep.subr.mxu0 0.0
        %2009 = vmatpush1.msra.mxu0 %v2003
        %2010 = vmatprep.subr.mxu0 0.0
        %2011 = vmatpush1.msra.mxu0 0.0
        %2012 = vmatprep.subr.mxu0 0.0
        %2013 = vmatpush1.msra.mxu0 0.0
        %2014 = vmatprep.subr.mxu0 0.0
        %2015 = vmatpush1.msra.mxu0 0.0
        %2016 = vmatprep.subr.mxu0 0.0
        %2017 = vmatpush1.msra.mxu0 0.0
        %2018 = vmatprep.subr.mxu0 0.0
        %2019 = vmatpush1.msra.mxu0 0.0
        %2020 = vmatprep.subr.mxu0 0.0
        %2021 = vmatpush1.msra.mxu0 0.0
        %2022 = vmatprep.subr.mxu0 0.0
        %2023 = vmatpush1.msra.mxu0 0.0
        %2024 = vmatprep.subr.mxu0 0.0
        %2025 = vmatpush1.msra.mxu0 0.0
        %2026 = vmatprep.subr.mxu0 0.0
        %2027 = vmatpush1.msra.mxu0 0.0
        %2028 = vmatprep.subr.mxu0 0.0
        %2029 = vmatpush1.msra.mxu0 0.0
        %2030 = vmatprep.subr.mxu0 0.0
        %2031 = vmatpush1.msra.mxu0 0.0
        %2032 = vmatprep.subr.mxu0 0.0
        %2033 = vmatpush1.msra.mxu0 0.0
        %2034 = vmatprep.subr.mxu0 0.0
        %2035 = vmatpush1.msra.mxu0 0.0
        %2036 = vmatprep.subr.mxu0 0.0
        %2037 = vmatpush1.msra.mxu0 0.0
        %2038 = vmatprep.subr.mxu0 0.0
        %2039 = vmatpush1.msra.mxu0 0.0
        %2040 = vmatprep.subr.mxu0 0.0
        %2041 = vmatpush1.msra.mxu0 0.0
        %2042 = vmatprep.subr.mxu0 0.0
        %2043 = vmatpush1.msra.mxu0 0.0
        %2044 = vmatprep.subr.mxu0 0.0
        %2045 = vmatpush1.msra.mxu0 0.0
        %2046 = vmatprep.subr.mxu0 0.0
        %2047 = vmatpush1.msra.mxu0 0.0
        %2048 = vmatprep.subr.mxu0 0.0
        %2049 = vmatpush1.msra.mxu0 0.0
        %2050 = vmatprep.subr.mxu0 0.0
        %2051 = vmatpush1.msra.mxu0 0.0
        %2052 = vmatprep.subr.mxu0 0.0
        %2053 = vmatpush1.msra.mxu0 0.0
        %2054 = vmatprep.subr.mxu0 0.0
        %2055 = vmatpush1.msra.mxu0 0.0
        %2056 = vmatprep.subr.mxu0 0.0
        %2057 = vmatpush1.msra.mxu0 0.0
        %2058 = vmatprep.subr.mxu0 0.0
        %2059 = vmatpush1.msra.mxu0 0.0
        %2060 = vmatprep.subr.mxu0 0.0
        %2061 = vmatpush1.msra.mxu0 0.0
        %2062 = vmatprep.subr.mxu0 0.0
        %2063 = vmatpush1.msra.mxu0 0.0
        %2064 = vmatprep.subr.mxu0 0.0
        %2065 = vmatpush1.msra.mxu0 0.0
        %2066 = vmatprep.subr.mxu0 0.0
        %2067 = vmatpush1.msra.mxu0 0.0
        %2068 = vmatprep.subr.mxu0 0.0
        %2069 = vmatpush1.msra.mxu0 0.0
        %2070 = vmatprep.subr.mxu0 0.0
        %2071 = vmatpush1.msra.mxu0 0.0
        %2072 = vmatprep.mubr.f32.mxu0 0.0
        %2073 = vmatmul.mubr.f32.gmra.mrb[0].mxu0 %v2006
        %v2074 = vpop.f32.mrb[0].mxu0
        %v2075 = vadd.f32 0.0, %v2074
        %v2076 = vpop.f32.mrb[0].mxu0
        %2077 = vdwg.mxu0
        %2078 = vrot.lane.b32.xlu0 %v945, 112
        %v2079 = vpop.permute.xlu0 %2078
        %v2082 = vsel %vm974, %v1998, 0
        %2084 = vmatprep.subr.mxu0 0.0
        %2085 = vmatpush1.msra.mxu0 %v2079
        %2086 = vmatprep.subr.mxu0 0.0
        %2087 = vmatpush1.msra.mxu0 0.0
        %2088 = vmatprep.subr.mxu0 0.0
        %2089 = vmatpush1.msra.mxu0 0.0
        %2090 = vmatprep.subr.mxu0 0.0
        %2091 = vmatpush1.msra.mxu0 0.0
        %2092 = vmatprep.subr.mxu0 0.0
        %2093 = vmatpush1.msra.mxu0 0.0
        %2094 = vmatprep.subr.mxu0 0.0
        %2095 = vmatpush1.msra.mxu0 0.0
        %2096 = vmatprep.subr.mxu0 0.0
        %2097 = vmatpush1.msra.mxu0 0.0
        %2098 = vmatprep.subr.mxu0 0.0
        %2099 = vmatpush1.msra.mxu0 0.0
        %2100 = vmatprep.subr.mxu0 0.0
        %2101 = vmatpush1.msra.mxu0 0.0
        %2102 = vmatprep.subr.mxu0 0.0
        %2103 = vmatpush1.msra.mxu0 0.0
        %2104 = vmatprep.subr.mxu0 0.0
        %2105 = vmatpush1.msra.mxu0 0.0
        %2106 = vmatprep.subr.mxu0 0.0
        %2107 = vmatpush1.msra.mxu0 0.0
        %2108 = vmatprep.subr.mxu0 0.0
        %2109 = vmatpush1.msra.mxu0 0.0
        %2110 = vmatprep.subr.mxu0 0.0
        %2111 = vmatpush1.msra.mxu0 0.0
        %2112 = vmatprep.subr.mxu0 0.0
        %2113 = vmatpush1.msra.mxu0 0.0
        %2114 = vmatprep.subr.mxu0 0.0
        %2115 = vmatpush1.msra.mxu0 0.0
        %2116 = vmatprep.subr.mxu0 0.0
        %2117 = vmatpush1.msra.mxu0 0.0
        %2118 = vmatprep.subr.mxu0 0.0
        %2119 = vmatpush1.msra.mxu0 0.0
        %2120 = vmatprep.subr.mxu0 0.0
        %2121 = vmatpush1.msra.mxu0 0.0
        %2122 = vmatprep.subr.mxu0 0.0
        %2123 = vmatpush1.msra.mxu0 0.0
        %2124 = vmatprep.subr.mxu0 0.0
        %2125 = vmatpush1.msra.mxu0 0.0
        %2126 = vmatprep.subr.mxu0 0.0
        %2127 = vmatpush1.msra.mxu0 0.0
        %2128 = vmatprep.subr.mxu0 0.0
        %2129 = vmatpush1.msra.mxu0 0.0
        %2130 = vmatprep.subr.mxu0 0.0
        %2131 = vmatpush1.msra.mxu0 0.0
        %2132 = vmatprep.subr.mxu0 0.0
        %2133 = vmatpush1.msra.mxu0 0.0
        %2134 = vmatprep.subr.mxu0 0.0
        %2135 = vmatpush1.msra.mxu0 0.0
        %2136 = vmatprep.subr.mxu0 0.0
        %2137 = vmatpush1.msra.mxu0 0.0
        %2138 = vmatprep.subr.mxu0 0.0
        %2139 = vmatpush1.msra.mxu0 0.0
        %2140 = vmatprep.subr.mxu0 0.0
        %2141 = vmatpush1.msra.mxu0 0.0
        %2142 = vmatprep.subr.mxu0 0.0
        %2143 = vmatpush1.msra.mxu0 0.0
        %2144 = vmatprep.subr.mxu0 0.0
        %2145 = vmatpush1.msra.mxu0 0.0
        %2146 = vmatprep.subr.mxu0 0.0
        %2147 = vmatpush1.msra.mxu0 0.0
        %2148 = vmatprep.mubr.f32.mxu0 0.0
        %2149 = vmatmul.mubr.f32.gmra.mrb[0].mxu0 %v2082
        %v2150 = vpop.f32.mrb[0].mxu0
        %v2151 = vadd.f32 0.0, %v2150
        %v2152 = vpop.f32.mrb[0].mxu0
        %2153 = vdwg.mxu0
        %s2154 = scalar_lea.vmem %s569, 16 [#allocation8]
        %v2155 = vld [vmem:[%s2154] sm:$0xff]
        %v2157 = vsel %vm974, %v2075, 0
        %v2160 = vsel %vm974, %v2151, 0
        %2162 = vmatprep.subr.mxu0 0.0
        %2163 = vmatpush1.msra.mxu0 %v2155
        %2164 = vmatprep.subr.mxu0 0.0
        %2165 = vmatpush1.msra.mxu0 0.0
        %2166 = vmatprep.subr.mxu0 0.0
        %2167 = vmatpush1.msra.mxu0 0.0
        %2168 = vmatprep.subr.mxu0 0.0
        %2169 = vmatpush1.msra.mxu0 0.0
        %2170 = vmatprep.subr.mxu0 0.0
        %2171 = vmatpush1.msra.mxu0 0.0
        %2172 = vmatprep.subr.mxu0 0.0
        %2173 = vmatpush1.msra.mxu0 0.0
        %2174 = vmatprep.subr.mxu0 0.0
        %2175 = vmatpush1.msra.mxu0 0.0
        %2176 = vmatprep.subr.mxu0 0.0
        %2177 = vmatpush1.msra.mxu0 0.0
        %2178 = vmatprep.subr.mxu0 0.0
        %2179 = vmatpush1.msra.mxu0 0.0
        %2180 = vmatprep.subr.mxu0 0.0
        %2181 = vmatpush1.msra.mxu0 0.0
        %2182 = vmatprep.subr.mxu0 0.0
        %2183 = vmatpush1.msra.mxu0 0.0
        %2184 = vmatprep.subr.mxu0 0.0
        %2185 = vmatpush1.msra.mxu0 0.0
        %2186 = vmatprep.subr.mxu0 0.0
        %2187 = vmatpush1.msra.mxu0 0.0
        %2188 = vmatprep.subr.mxu0 0.0
        %2189 = vmatpush1.msra.mxu0 0.0
        %2190 = vmatprep.subr.mxu0 0.0
        %2191 = vmatpush1.msra.mxu0 0.0
        %2192 = vmatprep.subr.mxu0 0.0
        %2193 = vmatpush1.msra.mxu0 0.0
        %2194 = vmatprep.subr.mxu0 0.0
        %2195 = vmatpush1.msra.mxu0 0.0
        %2196 = vmatprep.subr.mxu0 0.0
        %2197 = vmatpush1.msra.mxu0 0.0
        %2198 = vmatprep.subr.mxu0 0.0
        %2199 = vmatpush1.msra.mxu0 0.0
        %2200 = vmatprep.subr.mxu0 0.0
        %2201 = vmatpush1.msra.mxu0 0.0
        %2202 = vmatprep.subr.mxu0 0.0
        %2203 = vmatpush1.msra.mxu0 0.0
        %2204 = vmatprep.subr.mxu0 0.0
        %2205 = vmatpush1.msra.mxu0 0.0
        %2206 = vmatprep.subr.mxu0 0.0
        %2207 = vmatpush1.msra.mxu0 0.0
        %2208 = vmatprep.subr.mxu0 0.0
        %2209 = vmatpush1.msra.mxu0 0.0
        %2210 = vmatprep.subr.mxu0 0.0
        %2211 = vmatpush1.msra.mxu0 0.0
        %2212 = vmatprep.subr.mxu0 0.0
        %2213 = vmatpush1.msra.mxu0 0.0
        %2214 = vmatprep.subr.mxu0 0.0
        %2215 = vmatpush1.msra.mxu0 0.0
        %2216 = vmatprep.subr.mxu0 0.0
        %2217 = vmatpush1.msra.mxu0 0.0
        %2218 = vmatprep.subr.mxu0 0.0
        %2219 = vmatpush1.msra.mxu0 0.0
        %2220 = vmatprep.subr.mxu0 0.0
        %2221 = vmatpush1.msra.mxu0 0.0
        %2222 = vmatprep.subr.mxu0 0.0
        %2223 = vmatpush1.msra.mxu0 0.0
        %2224 = vmatprep.subr.mxu0 0.0
        %2225 = vmatpush1.msra.mxu0 0.0
        %2226 = vmatprep.mubr.f32.mxu0 0.0
        %2227 = vmatmul.mubr.f32.gmra.mrb[0].mxu0 %v2157
        %v2228 = vpop.f32.mrb[0].mxu0
        %v2229 = vadd.f32 0.0, %v2228
        %v2230 = vpop.f32.mrb[0].mxu0
        %2231 = vmatprep.mubr.f32.mxu0 0.0
        %2232 = vmatmul.mubr.f32.gmra.mrb[0].mxu0 %v2160
        %v2233 = vpop.f32.mrb[0].mxu0
        %v2234 = vadd.f32 0.0, %v2233
        %v2235 = vpop.f32.mrb[0].mxu0
        %2236 = vdwg.mxu0
        %v2237 = vadd.f32 %v1817, %v2229
        %v2238 = vadd.f32 %v1818, %v2234
        %2239 = vrot.lane.b32.xlu0 %v782, 104
        %v2240 = vpop.permute.xlu0 %2239
        %2241 = vrot.lane.b32.xlu0 %v861, 104
        %v2242 = vpop.permute.xlu0 %2241
        %v2243 = vsel %vm974, %v2240, 0
        %v2245 = vsel %vm974, %v2242, 0
        %2247 = vmatprep.subr.mxu0 0.0
        %2248 = vmatpush1.xpose.msra.mxu0 %v2245
        %2249 = vmatprep.subr.mxu0 0.0
        %2250 = vmatpush1.xpose.msra.mxu0 0.0
        %2251 = vmatprep.subr.mxu0 0.0
        %2252 = vmatpush1.xpose.msra.mxu0 0.0
        %2253 = vmatprep.subr.mxu0 0.0
        %2254 = vmatpush1.xpose.msra.mxu0 0.0
        %2255 = vmatprep.subr.mxu0 0.0
        %2256 = vmatpush1.xpose.msra.mxu0 0.0
        %2257 = vmatprep.subr.mxu0 0.0
        %2258 = vmatpush1.xpose.msra.mxu0 0.0
        %2259 = vmatprep.subr.mxu0 0.0
        %2260 = vmatpush1.xpose.msra.mxu0 0.0
        %2261 = vmatprep.subr.mxu0 0.0
        %2262 = vmatpush1.xpose.msra.mxu0 0.0
        %2263 = vmatprep.subr.mxu0 0.0
        %2264 = vmatpush1.xpose.msra.mxu0 0.0
        %2265 = vmatprep.subr.mxu0 0.0
        %2266 = vmatpush1.xpose.msra.mxu0 0.0
        %2267 = vmatprep.subr.mxu0 0.0
        %2268 = vmatpush1.xpose.msra.mxu0 0.0
        %2269 = vmatprep.subr.mxu0 0.0
        %2270 = vmatpush1.xpose.msra.mxu0 0.0
        %2271 = vmatprep.subr.mxu0 0.0
        %2272 = vmatpush1.xpose.msra.mxu0 0.0
        %2273 = vmatprep.subr.mxu0 0.0
        %2274 = vmatpush1.xpose.msra.mxu0 0.0
        %2275 = vmatprep.subr.mxu0 0.0
        %2276 = vmatpush1.xpose.msra.mxu0 0.0
        %2277 = vmatprep.subr.mxu0 0.0
        %2278 = vmatpush1.xpose.msra.mxu0 0.0
        %2279 = vmatprep.subr.mxu0 0.0
        %2280 = vmatpush1.xpose.msra.mxu0 0.0
        %2281 = vmatprep.subr.mxu0 0.0
        %2282 = vmatpush1.xpose.msra.mxu0 0.0
        %2283 = vmatprep.subr.mxu0 0.0
        %2284 = vmatpush1.xpose.msra.mxu0 0.0
        %2285 = vmatprep.subr.mxu0 0.0
        %2286 = vmatpush1.xpose.msra.mxu0 0.0
        %2287 = vmatprep.subr.mxu0 0.0
        %2288 = vmatpush1.xpose.msra.mxu0 0.0
        %2289 = vmatprep.subr.mxu0 0.0
        %2290 = vmatpush1.xpose.msra.mxu0 0.0
        %2291 = vmatprep.subr.mxu0 0.0
        %2292 = vmatpush1.xpose.msra.mxu0 0.0
        %2293 = vmatprep.subr.mxu0 0.0
        %2294 = vmatpush1.xpose.msra.mxu0 0.0
        %2295 = vmatprep.subr.mxu0 0.0
        %2296 = vmatpush1.xpose.msra.mxu0 0.0
        %2297 = vmatprep.subr.mxu0 0.0
        %2298 = vmatpush1.xpose.msra.mxu0 0.0
        %2299 = vmatprep.subr.mxu0 0.0
        %2300 = vmatpush1.xpose.msra.mxu0 0.0
        %2301 = vmatprep.subr.mxu0 0.0
        %2302 = vmatpush1.xpose.msra.mxu0 0.0
        %2303 = vmatprep.subr.mxu0 0.0
        %2304 = vmatpush1.xpose.msra.mxu0 0.0
        %2305 = vmatprep.subr.mxu0 0.0
        %2306 = vmatpush1.xpose.msra.mxu0 0.0
        %2307 = vmatprep.subr.mxu0 0.0
        %2308 = vmatpush1.xpose.msra.mxu0 0.0
        %2309 = vmatprep.subr.mxu0 0.0
        %2310 = vmatpush1.xpose.msra.mxu0 0.0
        %2311 = vmatprep.mubr.f32.mxu0 0.0
        %2312 = vmatmul.mubr.f32.gmra.mrb[0].mxu0 %v2243
        %v2313 = vpop.f32.mrb[0].mxu0
        %v2314 = vadd.f32 0.0, %v2313
        %v2315 = vpop.f32.mrb[0].mxu0
        %2316 = vdwg.mxu0
        %2317 = vrot.lane.b32.xlu0 %v787, 104
        %v2318 = vpop.permute.xlu0 %2317
        %2319 = vrot.lane.b32.xlu0 %v866, 104
        %v2320 = vpop.permute.xlu0 %2319
        %v2321 = vsel %vm974, %v2318, 0
        %v2323 = vsel %vm974, %v2320, 0
        %2325 = vmatprep.subr.mxu0 0.0
        %2326 = vmatpush1.xpose.msra.mxu0 %v2323
        %2327 = vmatprep.subr.mxu0 0.0
        %2328 = vmatpush1.xpose.msra.mxu0 0.0
        %2329 = vmatprep.subr.mxu0 0.0
        %2330 = vmatpush1.xpose.msra.mxu0 0.0
        %2331 = vmatprep.subr.mxu0 0.0
        %2332 = vmatpush1.xpose.msra.mxu0 0.0
        %2333 = vmatprep.subr.mxu0 0.0
        %2334 = vmatpush1.xpose.msra.mxu0 0.0
        %2335 = vmatprep.subr.mxu0 0.0
        %2336 = vmatpush1.xpose.msra.mxu0 0.0
        %2337 = vmatprep.subr.mxu0 0.0
        %2338 = vmatpush1.xpose.msra.mxu0 0.0
        %2339 = vmatprep.subr.mxu0 0.0
        %2340 = vmatpush1.xpose.msra.mxu0 0.0
        %2341 = vmatprep.subr.mxu0 0.0
        %2342 = vmatpush1.xpose.msra.mxu0 0.0
        %2343 = vmatprep.subr.mxu0 0.0
        %2344 = vmatpush1.xpose.msra.mxu0 0.0
        %2345 = vmatprep.subr.mxu0 0.0
        %2346 = vmatpush1.xpose.msra.mxu0 0.0
        %2347 = vmatprep.subr.mxu0 0.0
        %2348 = vmatpush1.xpose.msra.mxu0 0.0
        %2349 = vmatprep.subr.mxu0 0.0
        %2350 = vmatpush1.xpose.msra.mxu0 0.0
        %2351 = vmatprep.subr.mxu0 0.0
        %2352 = vmatpush1.xpose.msra.mxu0 0.0
        %2353 = vmatprep.subr.mxu0 0.0
        %2354 = vmatpush1.xpose.msra.mxu0 0.0
        %2355 = vmatprep.subr.mxu0 0.0
        %2356 = vmatpush1.xpose.msra.mxu0 0.0
        %2357 = vmatprep.subr.mxu0 0.0
        %2358 = vmatpush1.xpose.msra.mxu0 0.0
        %2359 = vmatprep.subr.mxu0 0.0
        %2360 = vmatpush1.xpose.msra.mxu0 0.0
        %2361 = vmatprep.subr.mxu0 0.0
        %2362 = vmatpush1.xpose.msra.mxu0 0.0
        %2363 = vmatprep.subr.mxu0 0.0
        %2364 = vmatpush1.xpose.msra.mxu0 0.0
        %2365 = vmatprep.subr.mxu0 0.0
        %2366 = vmatpush1.xpose.msra.mxu0 0.0
        %2367 = vmatprep.subr.mxu0 0.0
        %2368 = vmatpush1.xpose.msra.mxu0 0.0
        %2369 = vmatprep.subr.mxu0 0.0
        %2370 = vmatpush1.xpose.msra.mxu0 0.0
        %2371 = vmatprep.subr.mxu0 0.0
        %2372 = vmatpush1.xpose.msra.mxu0 0.0
        %2373 = vmatprep.subr.mxu0 0.0
        %2374 = vmatpush1.xpose.msra.mxu0 0.0
        %2375 = vmatprep.subr.mxu0 0.0
        %2376 = vmatpush1.xpose.msra.mxu0 0.0
        %2377 = vmatprep.subr.mxu0 0.0
        %2378 = vmatpush1.xpose.msra.mxu0 0.0
        %2379 = vmatprep.subr.mxu0 0.0
        %2380 = vmatpush1.xpose.msra.mxu0 0.0
        %2381 = vmatprep.subr.mxu0 0.0
        %2382 = vmatpush1.xpose.msra.mxu0 0.0
        %2383 = vmatprep.subr.mxu0 0.0
        %2384 = vmatpush1.xpose.msra.mxu0 0.0
        %2385 = vmatprep.subr.mxu0 0.0
        %2386 = vmatpush1.xpose.msra.mxu0 0.0
        %2387 = vmatprep.subr.mxu0 0.0
        %2388 = vmatpush1.xpose.msra.mxu0 0.0
        %2389 = vmatprep.mubr.f32.mxu0 0.0
        %2390 = vmatmul.mubr.f32.gmra.mrb[0].mxu0 %v2321
        %v2391 = vpop.f32.mrb[0].mxu0
        %v2392 = vadd.f32 0.0, %v2391
        %v2393 = vpop.f32.mrb[0].mxu0
        %2394 = vdwg.mxu0
        %v2395 = vsel %vm1139, -1e+09, %v2314
        %v2396 = vsel %vm1140, -1e+09, %v2392
        %v2397 = vsel %vm974, %v2395, -inf
        %2398 = vmax.xlane.f32.xlu0 %v2397
        %v2399 = vpop.xlane.xlu0 %2398
        %v2400 = vsel %vm974, %v2396, -inf
        %2401 = vmax.xlane.f32.xlu0 %v2400
        %v2402 = vpop.xlane.xlu0 %2401
        %v2403 = vsub.f32 %v2395, %v2399
        %v2404 = vsub.f32 %v2396, %v2402
        %v2405 = vmul.f32 %v2403, 1.442695
        %v2406 = vpow.pop %v2405
        %v2407 = vmul.f32 %v2404, 1.442695
        %v2408 = vpow.pop %v2407
        %v2409 = vsel %vm974, %v2406, 0.0
        %2410 = vadd.xlane.f32.xlu0 %v2409
        %v2411 = vpop.xlane.xlu0 %2410
        %v2412 = vsel %vm974, %v2408, 0.0
        %2413 = vadd.xlane.f32.xlu0 %v2412
        %v2414 = vpop.xlane.xlu0 %2413
        %v2415 = vrcp.pop %v2411
        %v2416 = vrcp.pop %v2414
        %v2417 = vmul.f32 %v2406, %v2415
        %v2418 = vmul.f32 %v2408, %v2416
        %s2419 = scalar_lea.vmem %s657, 48 [#allocation11]
        %2420 = vst.msk [vmem:[%s2419] sm:$0xff] %vm974, %v2417
        %2421 = vst.msk [vmem:[%s2419 + $0x8] sm:$0xff] %vm974, %v2418
        %2422 = vrot.lane.b32.xlu0 %v940, 104
        %v2423 = vpop.permute.xlu0 %2422
        %v2426 = vsel %vm974, %v2417, 0
        %2428 = vmatprep.subr.mxu0 0.0
        %2429 = vmatpush1.msra.mxu0 %v2423
        %2430 = vmatprep.subr.mxu0 0.0
        %2431 = vmatpush1.msra.mxu0 0.0
        %2432 = vmatprep.subr.mxu0 0.0
        %2433 = vmatpush1.msra.mxu0 0.0
        %2434 = vmatprep.subr.mxu0 0.0
        %2435 = vmatpush1.msra.mxu0 0.0
        %2436 = vmatprep.subr.mxu0 0.0
        %2437 = vmatpush1.msra.mxu0 0.0
        %2438 = vmatprep.subr.mxu0 0.0
        %2439 = vmatpush1.msra.mxu0 0.0
        %2440 = vmatprep.subr.mxu0 0.0
        %2441 = vmatpush1.msra.mxu0 0.0
        %2442 = vmatprep.subr.mxu0 0.0
        %2443 = vmatpush1.msra.mxu0 0.0
        %2444 = vmatprep.subr.mxu0 0.0
        %2445 = vmatpush1.msra.mxu0 0.0
        %2446 = vmatprep.subr.mxu0 0.0
        %2447 = vmatpush1.msra.mxu0 0.0
        %2448 = vmatprep.subr.mxu0 0.0
        %2449 = vmatpush1.msra.mxu0 0.0
        %2450 = vmatprep.subr.mxu0 0.0
        %2451 = vmatpush1.msra.mxu0 0.0
        %2452 = vmatprep.subr.mxu0 0.0
        %2453 = vmatpush1.msra.mxu0 0.0
        %2454 = vmatprep.subr.mxu0 0.0
        %2455 = vmatpush1.msra.mxu0 0.0
        %2456 = vmatprep.subr.mxu0 0.0
        %2457 = vmatpush1.msra.mxu0 0.0
        %2458 = vmatprep.subr.mxu0 0.0
        %2459 = vmatpush1.msra.mxu0 0.0
        %2460 = vmatprep.subr.mxu0 0.0
        %2461 = vmatpush1.msra.mxu0 0.0
        %2462 = vmatprep.subr.mxu0 0.0
        %2463 = vmatpush1.msra.mxu0 0.0
        %2464 = vmatprep.subr.mxu0 0.0
        %2465 = vmatpush1.msra.mxu0 0.0
        %2466 = vmatprep.subr.mxu0 0.0
        %2467 = vmatpush1.msra.mxu0 0.0
        %2468 = vmatprep.subr.mxu0 0.0
        %2469 = vmatpush1.msra.mxu0 0.0
        %2470 = vmatprep.subr.mxu0 0.0
        %2471 = vmatpush1.msra.mxu0 0.0
        %2472 = vmatprep.subr.mxu0 0.0
        %2473 = vmatpush1.msra.mxu0 0.0
        %2474 = vmatprep.subr.mxu0 0.0
        %2475 = vmatpush1.msra.mxu0 0.0
        %2476 = vmatprep.subr.mxu0 0.0
        %2477 = vmatpush1.msra.mxu0 0.0
        %2478 = vmatprep.subr.mxu0 0.0
        %2479 = vmatpush1.msra.mxu0 0.0
        %2480 = vmatprep.subr.mxu0 0.0
        %2481 = vmatpush1.msra.mxu0 0.0
        %2482 = vmatprep.subr.mxu0 0.0
        %2483 = vmatpush1.msra.mxu0 0.0
        %2484 = vmatprep.subr.mxu0 0.0
        %2485 = vmatpush1.msra.mxu0 0.0
        %2486 = vmatprep.subr.mxu0 0.0
        %2487 = vmatpush1.msra.mxu0 0.0
        %2488 = vmatprep.subr.mxu0 0.0
        %2489 = vmatpush1.msra.mxu0 0.0
        %2490 = vmatprep.subr.mxu0 0.0
        %2491 = vmatpush1.msra.mxu0 0.0
        %2492 = vmatprep.mubr.f32.mxu0 0.0
        %2493 = vmatmul.mubr.f32.gmra.mrb[0].mxu0 %v2426
        %v2494 = vpop.f32.mrb[0].mxu0
        %v2495 = vadd.f32 0.0, %v2494
        %v2496 = vpop.f32.mrb[0].mxu0
        %2497 = vdwg.mxu0
        %2498 = vrot.lane.b32.xlu0 %v945, 104
        %v2499 = vpop.permute.xlu0 %2498
        %v2502 = vsel %vm974, %v2418, 0
        %2504 = vmatprep.subr.mxu0 0.0
        %2505 = vmatpush1.msra.mxu0 %v2499
        %2506 = vmatprep.subr.mxu0 0.0
        %2507 = vmatpush1.msra.mxu0 0.0
        %2508 = vmatprep.subr.mxu0 0.0
        %2509 = vmatpush1.msra.mxu0 0.0
        %2510 = vmatprep.subr.mxu0 0.0
        %2511 = vmatpush1.msra.mxu0 0.0
        %2512 = vmatprep.subr.mxu0 0.0
        %2513 = vmatpush1.msra.mxu0 0.0
        %2514 = vmatprep.subr.mxu0 0.0
        %2515 = vmatpush1.msra.mxu0 0.0
        %2516 = vmatprep.subr.mxu0 0.0
        %2517 = vmatpush1.msra.mxu0 0.0
        %2518 = vmatprep.subr.mxu0 0.0
        %2519 = vmatpush1.msra.mxu0 0.0
        %2520 = vmatprep.subr.mxu0 0.0
        %2521 = vmatpush1.msra.mxu0 0.0
        %2522 = vmatprep.subr.mxu0 0.0
        %2523 = vmatpush1.msra.mxu0 0.0
        %2524 = vmatprep.subr.mxu0 0.0
        %2525 = vmatpush1.msra.mxu0 0.0
        %2526 = vmatprep.subr.mxu0 0.0
        %2527 = vmatpush1.msra.mxu0 0.0
        %2528 = vmatprep.subr.mxu0 0.0
        %2529 = vmatpush1.msra.mxu0 0.0
        %2530 = vmatprep.subr.mxu0 0.0
        %2531 = vmatpush1.msra.mxu0 0.0
        %2532 = vmatprep.subr.mxu0 0.0
        %2533 = vmatpush1.msra.mxu0 0.0
        %2534 = vmatprep.subr.mxu0 0.0
        %2535 = vmatpush1.msra.mxu0 0.0
        %2536 = vmatprep.subr.mxu0 0.0
        %2537 = vmatpush1.msra.mxu0 0.0
        %2538 = vmatprep.subr.mxu0 0.0
        %2539 = vmatpush1.msra.mxu0 0.0
        %2540 = vmatprep.subr.mxu0 0.0
        %2541 = vmatpush1.msra.mxu0 0.0
        %2542 = vmatprep.subr.mxu0 0.0
        %2543 = vmatpush1.msra.mxu0 0.0
        %2544 = vmatprep.subr.mxu0 0.0
        %2545 = vmatpush1.msra.mxu0 0.0
        %2546 = vmatprep.subr.mxu0 0.0
        %2547 = vmatpush1.msra.mxu0 0.0
        %2548 = vmatprep.subr.mxu0 0.0
        %2549 = vmatpush1.msra.mxu0 0.0
        %2550 = vmatprep.subr.mxu0 0.0
        %2551 = vmatpush1.msra.mxu0 0.0
        %2552 = vmatprep.subr.mxu0 0.0
        %2553 = vmatpush1.msra.mxu0 0.0
        %2554 = vmatprep.subr.mxu0 0.0
        %2555 = vmatpush1.msra.mxu0 0.0
        %2556 = vmatprep.subr.mxu0 0.0
        %2557 = vmatpush1.msra.mxu0 0.0
        %2558 = vmatprep.subr.mxu0 0.0
        %2559 = vmatpush1.msra.mxu0 0.0
        %2560 = vmatprep.subr.mxu0 0.0
        %2561 = vmatpush1.msra.mxu0 0.0
        %2562 = vmatprep.subr.mxu0 0.0
        %2563 = vmatpush1.msra.mxu0 0.0
        %2564 = vmatprep.subr.mxu0 0.0
        %2565 = vmatpush1.msra.mxu0 0.0
        %2566 = vmatprep.subr.mxu0 0.0
        %2567 = vmatpush1.msra.mxu0 0.0
        %2568 = vmatprep.mubr.f32.mxu0 0.0
        %2569 = vmatmul.mubr.f32.gmra.mrb[0].mxu0 %v2502
        %v2570 = vpop.f32.mrb[0].mxu0
        %v2571 = vadd.f32 0.0, %v2570
        %v2572 = vpop.f32.mrb[0].mxu0
        %2573 = vdwg.mxu0
        %s2574 = scalar_lea.vmem %s569, 24 [#allocation8]
        %v2575 = vld [vmem:[%s2574] sm:$0xff]
        %v2577 = vsel %vm974, %v2495, 0
        %v2580 = vsel %vm974, %v2571, 0
        %2582 = vmatprep.subr.mxu0 0.0
        %2583 = vmatpush1.msra.mxu0 %v2575
        %2584 = vmatprep.subr.mxu0 0.0
        %2585 = vmatpush1.msra.mxu0 0.0
        %2586 = vmatprep.subr.mxu0 0.0
        %2587 = vmatpush1.msra.mxu0 0.0
        %2588 = vmatprep.subr.mxu0 0.0
        %2589 = vmatpush1.msra.mxu0 0.0
        %2590 = vmatprep.subr.mxu0 0.0
        %2591 = vmatpush1.msra.mxu0 0.0
        %2592 = vmatprep.subr.mxu0 0.0
        %2593 = vmatpush1.msra.mxu0 0.0
        %2594 = vmatprep.subr.mxu0 0.0
        %2595 = vmatpush1.msra.mxu0 0.0
        %2596 = vmatprep.subr.mxu0 0.0
        %2597 = vmatpush1.msra.mxu0 0.0
        %2598 = vmatprep.subr.mxu0 0.0
        %2599 = vmatpush1.msra.mxu0 0.0
        %2600 = vmatprep.subr.mxu0 0.0
        %2601 = vmatpush1.msra.mxu0 0.0
        %2602 = vmatprep.subr.mxu0 0.0
        %2603 = vmatpush1.msra.mxu0 0.0
        %2604 = vmatprep.subr.mxu0 0.0
        %2605 = vmatpush1.msra.mxu0 0.0
        %2606 = vmatprep.subr.mxu0 0.0
        %2607 = vmatpush1.msra.mxu0 0.0
        %2608 = vmatprep.subr.mxu0 0.0
        %2609 = vmatpush1.msra.mxu0 0.0
        %2610 = vmatprep.subr.mxu0 0.0
        %2611 = vmatpush1.msra.mxu0 0.0
        %2612 = vmatprep.subr.mxu0 0.0
        %2613 = vmatpush1.msra.mxu0 0.0
        %2614 = vmatprep.subr.mxu0 0.0
        %2615 = vmatpush1.msra.mxu0 0.0
        %2616 = vmatprep.subr.mxu0 0.0
        %2617 = vmatpush1.msra.mxu0 0.0
        %2618 = vmatprep.subr.mxu0 0.0
        %2619 = vmatpush1.msra.mxu0 0.0
        %2620 = vmatprep.subr.mxu0 0.0
        %2621 = vmatpush1.msra.mxu0 0.0
        %2622 = vmatprep.subr.mxu0 0.0
        %2623 = vmatpush1.msra.mxu0 0.0
        %2624 = vmatprep.subr.mxu0 0.0
        %2625 = vmatpush1.msra.mxu0 0.0
        %2626 = vmatprep.subr.mxu0 0.0
        %2627 = vmatpush1.msra.mxu0 0.0
        %2628 = vmatprep.subr.mxu0 0.0
        %2629 = vmatpush1.msra.mxu0 0.0
        %2630 = vmatprep.subr.mxu0 0.0
        %2631 = vmatpush1.msra.mxu0 0.0
        %2632 = vmatprep.subr.mxu0 0.0
        %2633 = vmatpush1.msra.mxu0 0.0
        %2634 = vmatprep.subr.mxu0 0.0
        %2635 = vmatpush1.msra.mxu0 0.0
        %2636 = vmatprep.subr.mxu0 0.0
        %2637 = vmatpush1.msra.mxu0 0.0
        %2638 = vmatprep.subr.mxu0 0.0
        %2639 = vmatpush1.msra.mxu0 0.0
        %2640 = vmatprep.subr.mxu0 0.0
        %2641 = vmatpush1.msra.mxu0 0.0
        %2642 = vmatprep.subr.mxu0 0.0
        %2643 = vmatpush1.msra.mxu0 0.0
        %2644 = vmatprep.subr.mxu0 0.0
        %2645 = vmatpush1.msra.mxu0 0.0
        %2646 = vmatprep.mubr.f32.mxu0 0.0
        %2647 = vmatmul.mubr.f32.gmra.mrb[0].mxu0 %v2577
        %v2648 = vpop.f32.mrb[0].mxu0
        %v2649 = vadd.f32 0.0, %v2648
        %v2650 = vpop.f32.mrb[0].mxu0
        %2651 = vmatprep.mubr.f32.mxu0 0.0
        %2652 = vmatmul.mubr.f32.gmra.mrb[0].mxu0 %v2580
        %v2653 = vpop.f32.mrb[0].mxu0
        %v2654 = vadd.f32 0.0, %v2653
        %v2655 = vpop.f32.mrb[0].mxu0
        %2656 = vdwg.mxu0
        %v2657 = vadd.f32 %v2237, %v2649
        %v2658 = vadd.f32 %v2238, %v2654
        %v2659 = vsel %vm708, %v2657, 0.0
        %2660 = vadd.xlane.f32.xlu0 %v2659
        %v2661 = vpop.xlane.xlu0 %2660
        %v2662 = vsel %vm708, %v2658, 0.0
        %2663 = vadd.xlane.f32.xlu0 %v2662
        %v2664 = vpop.xlane.xlu0 %2663
        %v2665 = vrcp.pop 32.0
        %v2666 = vmul.f32 %v2661, %v2665
        %v2667 = vmul.f32 %v2664, %v2665
        %v2668 = vsub.f32 %v2657, %v2666
        %v2669 = vsub.f32 %v2658, %v2667
        %v2670 = vmul.f32 %v2668, %v2668
        %v2671 = vmul.f32 %v2669, %v2669
        %v2672 = vsel %vm708, %v2670, 0.0
        %2673 = vadd.xlane.f32.xlu0 %v2672
        %v2674 = vpop.xlane.xlu0 %2673
        %v2675 = vsel %vm708, %v2671, 0.0
        %2676 = vadd.xlane.f32.xlu0 %v2675
        %v2677 = vpop.xlane.xlu0 %2676
        %v2678 = vmul.f32 %v2674, %v2665
        %v2679 = vmul.f32 %v2677, %v2665
        %v2680 = vadd.f32 %v2678, 1e-05
        %v2681 = vadd.f32 %v2679, 1e-05
        %v2682 = vrsqrt.pop %v2680
        %v2683 = vrsqrt.pop %v2681
        %v2684 = vmul.f32 %v2668, %v2682
        %v2685 = vmul.f32 %v2669, %v2683
        %v2686 = vld [vmem:[%s676] sm:$0x1]
        %v2688 = vlaneseq
        %v2689 = vshrl.u32 %v2688, 7
        %v2690 = vsub.s32 0, %v2689
        %v2691 = vrot.slane %v2686, %v2690
        %v2693 = vmul.f32 %v2684, %v2691
        %v2694 = vmul.f32 %v2685, %v2691
        %v2695 = vld [vmem:[%s679] sm:$0x1]
        %v2697 = vlaneseq
        %v2698 = vshrl.u32 %v2697, 7
        %v2699 = vsub.s32 0, %v2698
        %v2700 = vrot.slane %v2695, %v2699
        %v2702 = vadd.f32 %v2693, %v2700
        %v2703 = vadd.f32 %v2694, %v2700
        %v2704 = vld [vmem:[%s578] sm:$0xff]
        %v2705 = vld [vmem:[%s578 + $0x8] sm:$0xff]
        %v2706 = vld [vmem:[%s578 + $0x10] sm:$0xff]
        %v2707 = vld [vmem:[%s578 + $0x18] sm:$0xff]
        %v2709 = vsel %vm708, %v2702, 0
        %v2712 = vsel %vm708, %v2703, 0
        %2714 = vmatprep.subr.mxu0 0.0
        %2715 = vmatpush1.msra.mxu0 %v2704
        %2716 = vmatprep.subr.mxu0 0.0
        %2717 = vmatpush1.msra.mxu0 %v2705
        %2718 = vmatprep.subr.mxu0 0.0
        %2719 = vmatpush1.msra.mxu0 %v2706
        %2720 = vmatprep.subr.mxu0 0.0
        %2721 = vmatpush1.msra.mxu0 %v2707
        %2722 = vmatprep.subr.mxu0 0.0
        %2723 = vmatpush1.msra.mxu0 0.0
        %2724 = vmatprep.subr.mxu0 0.0
        %2725 = vmatpush1.msra.mxu0 0.0
        %2726 = vmatprep.subr.mxu0 0.0
        %2727 = vmatpush1.msra.mxu0 0.0
        %2728 = vmatprep.subr.mxu0 0.0
        %2729 = vmatpush1.msra.mxu0 0.0
        %2730 = vmatprep.subr.mxu0 0.0
        %2731 = vmatpush1.msra.mxu0 0.0
        %2732 = vmatprep.subr.mxu0 0.0
        %2733 = vmatpush1.msra.mxu0 0.0
        %2734 = vmatprep.subr.mxu0 0.0
        %2735 = vmatpush1.msra.mxu0 0.0
        %2736 = vmatprep.subr.mxu0 0.0
        %2737 = vmatpush1.msra.mxu0 0.0
        %2738 = vmatprep.subr.mxu0 0.0
        %2739 = vmatpush1.msra.mxu0 0.0
        %2740 = vmatprep.subr.mxu0 0.0
        %2741 = vmatpush1.msra.mxu0 0.0
        %2742 = vmatprep.subr.mxu0 0.0
        %2743 = vmatpush1.msra.mxu0 0.0
        %2744 = vmatprep.subr.mxu0 0.0
        %2745 = vmatpush1.msra.mxu0 0.0
        %2746 = vmatprep.subr.mxu0 0.0
        %2747 = vmatpush1.msra.mxu0 0.0
        %2748 = vmatprep.subr.mxu0 0.0
        %2749 = vmatpush1.msra.mxu0 0.0
        %2750 = vmatprep.subr.mxu0 0.0
        %2751 = vmatpush1.msra.mxu0 0.0
        %2752 = vmatprep.subr.mxu0 0.0
        %2753 = vmatpush1.msra.mxu0 0.0
        %2754 = vmatprep.subr.mxu0 0.0
        %2755 = vmatpush1.msra.mxu0 0.0
        %2756 = vmatprep.subr.mxu0 0.0
        %2757 = vmatpush1.msra.mxu0 0.0
        %2758 = vmatprep.subr.mxu0 0.0
        %2759 = vmatpush1.msra.mxu0 0.0
        %2760 = vmatprep.subr.mxu0 0.0
        %2761 = vmatpush1.msra.mxu0 0.0
        %2762 = vmatprep.subr.mxu0 0.0
        %2763 = vmatpush1.msra.mxu0 0.0
        %2764 = vmatprep.subr.mxu0 0.0
        %2765 = vmatpush1.msra.mxu0 0.0
        %2766 = vmatprep.subr.mxu0 0.0
        %2767 = vmatpush1.msra.mxu0 0.0
        %2768 = vmatprep.subr.mxu0 0.0
        %2769 = vmatpush1.msra.mxu0 0.0
        %2770 = vmatprep.subr.mxu0 0.0
        %2771 = vmatpush1.msra.mxu0 0.0
        %2772 = vmatprep.subr.mxu0 0.0
        %2773 = vmatpush1.msra.mxu0 0.0
        %2774 = vmatprep.subr.mxu0 0.0
        %2775 = vmatpush1.msra.mxu0 0.0
        %2776 = vmatprep.subr.mxu0 0.0
        %2777 = vmatpush1.msra.mxu0 0.0
        %2778 = vmatprep.mubr.f32.mxu0 0.0
        %2779 = vmatmul.mubr.f32.gmra.mrb[0].mxu0 %v2709
        %v2780 = vpop.f32.mrb[0].mxu0
        %v2781 = vadd.f32 0.0, %v2780
        %v2782 = vpop.f32.mrb[0].mxu0
        %2783 = vmatprep.mubr.f32.mxu0 0.0
        %2784 = vmatmul.mubr.f32.gmra.mrb[0].mxu0 %v2712
        %v2785 = vpop.f32.mrb[0].mxu0
        %v2786 = vadd.f32 0.0, %v2785
        %v2787 = vpop.f32.mrb[0].mxu0
        %2788 = vdwg.mxu0
        %v2789 = vmax.f32 %v2781, 0.0
        %v2790 = vmax.f32 %v2786, 0.0
        %v2791 = vld [vmem:[%s684] sm:$0xff]
        %v2792 = vld [vmem:[%s684 + $0x8] sm:$0xff]
        %v2793 = vld [vmem:[%s684 + $0x10] sm:$0xff]
        %v2794 = vld [vmem:[%s684 + $0x18] sm:$0xff]
        %v2795 = vld [vmem:[%s684 + $0x20] sm:$0xff]
        %v2796 = vld [vmem:[%s684 + $0x28] sm:$0xff]
        %v2797 = vld [vmem:[%s684 + $0x30] sm:$0xff]
        %v2798 = vld [vmem:[%s684 + $0x38] sm:$0xff]
        %vm2799 = vcmask 523264
        %v2801 = vsel %vm2799, %v2789, 0
        %v2804 = vsel %vm2799, %v2790, 0
        %2806 = vmatprep.subr.mxu0 0.0
        %2807 = vmatpush1.msra.mxu0 %v2791
        %2808 = vmatprep.subr.mxu0 0.0
        %2809 = vmatpush1.msra.mxu0 %v2792
        %2810 = vmatprep.subr.mxu0 0.0
        %2811 = vmatpush1.msra.mxu0 %v2793
        %2812 = vmatprep.subr.mxu0 0.0
        %2813 = vmatpush1.msra.mxu0 %v2794
        %2814 = vmatprep.subr.mxu0 0.0
        %2815 = vmatpush1.msra.mxu0 %v2795
        %2816 = vmatprep.subr.mxu0 0.0
        %2817 = vmatpush1.msra.mxu0 %v2796
        %2818 = vmatprep.subr.mxu0 0.0
        %2819 = vmatpush1.msra.mxu0 %v2797
        %2820 = vmatprep.subr.mxu0 0.0
        %2821 = vmatpush1.msra.mxu0 %v2798
        %2822 = vmatprep.subr.mxu0 0.0
        %2823 = vmatpush1.msra.mxu0 0.0
        %2824 = vmatprep.subr.mxu0 0.0
        %2825 = vmatpush1.msra.mxu0 0.0
        %2826 = vmatprep.subr.mxu0 0.0
        %2827 = vmatpush1.msra.mxu0 0.0
        %2828 = vmatprep.subr.mxu0 0.0
        %2829 = vmatpush1.msra.mxu0 0.0
        %2830 = vmatprep.subr.mxu0 0.0
        %2831 = vmatpush1.msra.mxu0 0.0
        %2832 = vmatprep.subr.mxu0 0.0
        %2833 = vmatpush1.msra.mxu0 0.0
        %2834 = vmatprep.subr.mxu0 0.0
        %2835 = vmatpush1.msra.mxu0 0.0
        %2836 = vmatprep.subr.mxu0 0.0
        %2837 = vmatpush1.msra.mxu0 0.0
        %2838 = vmatprep.subr.mxu0 0.0
        %2839 = vmatpush1.msra.mxu0 0.0
        %2840 = vmatprep.subr.mxu0 0.0
        %2841 = vmatpush1.msra.mxu0 0.0
        %2842 = vmatprep.subr.mxu0 0.0
        %2843 = vmatpush1.msra.mxu0 0.0
        %2844 = vmatprep.subr.mxu0 0.0
        %2845 = vmatpush1.msra.mxu0 0.0
        %2846 = vmatprep.subr.mxu0 0.0
        %2847 = vmatpush1.msra.mxu0 0.0
        %2848 = vmatprep.subr.mxu0 0.0
        %2849 = vmatpush1.msra.mxu0 0.0
        %2850 = vmatprep.subr.mxu0 0.0
        %2851 = vmatpush1.msra.mxu0 0.0
        %2852 = vmatprep.subr.mxu0 0.0
        %2853 = vmatpush1.msra.mxu0 0.0
        %2854 = vmatprep.subr.mxu0 0.0
        %2855 = vmatpush1.msra.mxu0 0.0
        %2856 = vmatprep.subr.mxu0 0.0
        %2857 = vmatpush1.msra.mxu0 0.0
        %2858 = vmatprep.subr.mxu0 0.0
        %2859 = vmatpush1.msra.mxu0 0.0
        %2860 = vmatprep.subr.mxu0 0.0
        %2861 = vmatpush1.msra.mxu0 0.0
        %2862 = vmatprep.subr.mxu0 0.0
        %2863 = vmatpush1.msra.mxu0 0.0
        %2864 = vmatprep.subr.mxu0 0.0
        %2865 = vmatpush1.msra.mxu0 0.0
        %2866 = vmatprep.subr.mxu0 0.0
        %2867 = vmatpush1.msra.mxu0 0.0
        %2868 = vmatprep.subr.mxu0 0.0
        %2869 = vmatpush1.msra.mxu0 0.0
        %2870 = vmatprep.mubr.f32.mxu0 0.0
        %2871 = vmatmul.mubr.f32.gmra.mrb[0].mxu0 %v2801
        %v2872 = vpop.f32.mrb[0].mxu0
        %v2873 = vadd.f32 %v2702, %v2872
        %v2874 = vpop.f32.mrb[0].mxu0
        %2875 = vmatprep.mubr.f32.mxu0 0.0
        %2876 = vmatmul.mubr.f32.gmra.mrb[0].mxu0 %v2804
        %v2877 = vpop.f32.mrb[0].mxu0
        %v2878 = vadd.f32 %v2703, %v2877
        %v2879 = vpop.f32.mrb[0].mxu0
        %2880 = vdwg.mxu0
        %v2881 = vsel %vm708, %v2873, 0.0
        %2882 = vadd.xlane.f32.xlu0 %v2881
        %v2883 = vpop.xlane.xlu0 %2882
        %v2884 = vsel %vm708, %v2878, 0.0
        %2885 = vadd.xlane.f32.xlu0 %v2884
        %v2886 = vpop.xlane.xlu0 %2885
        %v2887 = vmul.f32 %v2883, %v2665
        %v2888 = vmul.f32 %v2886, %v2665
        %v2889 = vsub.f32 %v2873, %v2887
        %v2890 = vsub.f32 %v2878, %v2888
        %v2891 = vmul.f32 %v2889, %v2889
        %v2892 = vmul.f32 %v2890, %v2890
        %v2893 = vsel %vm708, %v2891, 0.0
        %2894 = vadd.xlane.f32.xlu0 %v2893
        %v2895 = vpop.xlane.xlu0 %2894
        %v2896 = vsel %vm708, %v2892, 0.0
        %2897 = vadd.xlane.f32.xlu0 %v2896
        %v2898 = vpop.xlane.xlu0 %2897
        %v2899 = vmul.f32 %v2895, %v2665
        %v2900 = vmul.f32 %v2898, %v2665
        %v2901 = vadd.f32 %v2899, 1e-05
        %v2902 = vadd.f32 %v2900, 1e-05
        %v2903 = vrsqrt.pop %v2901
        %v2904 = vrsqrt.pop %v2902
        %v2905 = vmul.f32 %v2889, %v2903
        %v2906 = vmul.f32 %v2890, %v2904
        %v2907 = vld [vmem:[%s687] sm:$0x1]
        %v2909 = vlaneseq
        %v2910 = vshrl.u32 %v2909, 7
        %v2911 = vsub.s32 0, %v2910
        %v2912 = vrot.slane %v2907, %v2911
        %v2914 = vmul.f32 %v2905, %v2912
        %v2915 = vmul.f32 %v2906, %v2912
        %v2916 = vld [vmem:[%s690] sm:$0x1]
        %v2918 = vlaneseq
        %v2919 = vshrl.u32 %v2918, 7
        %v2920 = vsub.s32 0, %v2919
        %v2921 = vrot.slane %v2916, %v2920
        %v2923 = vadd.f32 %v2914, %v2921
        %v2924 = vadd.f32 %v2915, %v2921
        %2925 = vst.msk [vmem:[#allocation2] sm:$0xff] %vm708, %v2923
        %2926 = vst.msk [vmem:[#allocation2 + $0x8] sm:$0xff] %vm708, %v2924
        %p2927 = scmp.eq.s32.totalorder %s36, 1
        // Predicated region
        $region89: #{tpu_custom_call.1} parent=67 // pred_check
          %p2928 = pneg %p2927
        $region90: #{tpu_custom_call.1} parent=67 // pred_check_branch
          %2930 = sbr.rel (%p2928) target = $region92
        $region91: #{tpu_custom_call.1} parent=67 // pred_region
          %2931 = vst.msk [vmem:[#allocation10] sm:$0xff] %vm708, %v2923
          %2932 = vst.msk [vmem:[#allocation10 + $0x8] sm:$0xff] %vm708, %v2924
        $region92: #{tpu_custom_call.1} parent=67 // pred_fallthru
          _
        %s2933 = sand.u32 %s391, 1
        %s2934 = scalar_lea.sflag [#allocation12], %s2933
        %s2935 = sand.u32 %s391, 1
        %s2936 = smul.addr %s2935, 64
        %s2937 = scalar_lea.vmem [#allocation11], %s2936
        // Predicated region
        $region93: #{tpu_custom_call.1} parent=67 // pred_check
          %p2938 = pneg %p373
        $region94: #{tpu_custom_call.1} parent=67 // pred_check_branch
          %2940 = sbr.rel (%p2938) target = $region96
        $region95: #{tpu_custom_call.1} parent=67 // pred_region
          %s2941 = smul.u32 2, %s35
          %s2943 = ssub.s32 256, 256
          %2944 = vsyncadd [#allocation5], %s2943
          %s2945 = smul.addr %s2941, 128
          %s2946 = scalar_lea.hbm %s12, %s2945
          %s2947 = sshll.u32 [#allocation10], 4
          %s2948 = int_to_ptr.vmem [resolvable:$true] %s2947
          %2953 = dma.vmem_to_hbm [thread:$0]  %s2948, 256, %s2946, [#allocation5], 128, 128, 8
        $region96: #{tpu_custom_call.1} parent=67 // pred_fallthru
          _
        // Predicated region
        $region97: #{tpu_custom_call.1} parent=67 // pred_check
          %p2954 = pneg %p401
        $region98: #{tpu_custom_call.1} parent=67 // pred_check_branch
          %2956 = sbr.rel (%p2954) target = $region100
        $region99: #{tpu_custom_call.1} parent=67 // pred_region
          %s2957 = smul.u32 2, %s35
          %s2959 = ssub.s32 1024, 1024
          %2960 = vsyncadd %s2934, %s2959
          %s2961 = smul.addr %s36, 8
          %s2962 = sadd.s32 %s2957, %s2961
          %s2963 = smul.addr %s2962, 128
          %s2964 = scalar_lea.hbm %s13, %s2963
          %s2965 = sshll.u32 %s2937, 4
          %s2966 = int_to_ptr.vmem [resolvable:$true] %s2965
          %2971 = dma.vmem_to_hbm [thread:$0]  %s2966, 1024, %s2964, %s2934, 128, 128, 8
        $region100: #{tpu_custom_call.1} parent=67 // pred_fallthru
          _
        // Predicated region
        $region101: #{tpu_custom_call.1} parent=67 // pred_check
          %p2972 = pneg %p373
        $region102: #{tpu_custom_call.1} parent=67 // pred_check_branch
          %2974 = sbr.rel (%p2972) target = $region104
        $region103: #{tpu_custom_call.1} parent=67 // pred_region
          %2975 = dma.done [#allocation5], 256
        $region104: #{tpu_custom_call.1} parent=67 // pred_fallthru
          _
      $region68: #{tpu_custom_call.1} parent=5 // pred_fallthru
        _
      %p2976 = scmp.le.s32.totalorder 2, %s26
      // Predicated region
      $region105: #{tpu_custom_call.1} parent=5 // pred_check
        %p2977 = pneg %p2976
      $region106: #{tpu_custom_call.1} parent=5 // pred_check_branch
        %2979 = sbr.rel (%p2977) target = $region108
      $region107: #{tpu_custom_call.1} parent=5 // pred_region
        %s2980 = ssub.s32 %s26, 2
        // Predicated region
        $region109: #{tpu_custom_call.1} parent=107 // pred_check
          %p2981 = pneg %p407
        $region110: #{tpu_custom_call.1} parent=107 // pred_check_branch
          %2983 = sbr.rel (%p2981) target = $region112
        $region111: #{tpu_custom_call.1} parent=107 // pred_region
          %s2984 = sand.u32 %s392, 1
          %s2985 = scalar_lea.sflag [#allocation12], %s2984
          %s2986 = sand.u32 %s392, 1
          %s2987 = smul.addr %s2986, 64
          %s2988 = scalar_lea.vmem [#allocation11], %s2987
          %2989 = dma.done %s2985, 1024
        $region112: #{tpu_custom_call.1} parent=107 // pred_fallthru
          _
      $region108: #{tpu_custom_call.1} parent=5 // pred_fallthru
        _
    $region6: #{tpu_custom_call.1} parent=1 // loop_footer
      %s30 = sadd.s32 1, %s26
    $region7: #{tpu_custom_call.1} parent=1 // loop_footer_branch
      %25 = sbr.rel target = $region3
    $region8: #{tpu_custom_call.1} parent=1 // loop_exit
      _
    %2990 = vsyncpa [#allocation4], 1
    %s2991 = scalar_lea.sflag [#allocation4], 1
    %2992 = vsyncpa %s2991, 1
    %2993 = vsyncpa [#allocation7], 1
    %2994 = vsyncpa [#allocation5], 1
    %s2995 = scalar_lea.sflag [#allocation5], 1
    %2996 = vsyncpa %s2995, 1
    %2997 = vsyncpa [#allocation12], 1
    %s2998 = scalar_lea.sflag [#allocation12], 1
    %2999 = vsyncpa %s2998, 1

</llo_original>
